<compile_context>
chip_gen: v7x
topology: tpu7x:2x2x1
jax: 0.10.0
libtpu: 0.0.40
codegen_flags: <defaults>
</compile_context>

<pallas_src>
import numpy as np
import jax
import jax.numpy as jnp
from jax import lax
from jax.experimental import pallas as pl
from jax.experimental.pallas import tpu as pltpu


def _sigmoid(x):
    return 1.0 / (1.0 + jnp.exp(-x))


# ----------------------------------------------------------------------------
# Fused kernel: both LSTM layers over the full sequence in one invocation.
#   img_ref   : (T, Bp, 784)     time-major image features (batch padded)
#   lab_ref   : (T, Bp, N)       time-major one-hot labels (query step zeroed)
#   wimg1_ref : (784, 4*H1)      layer-1 image-column part of W_ih (i,f,g,o)
#   wlab1_ref : (N, 4*H1)        layer-1 label-column part of W_ih
#   whh1_ref  : (H1, 4*H1)       layer-1 hidden->gate weights
#   b1_ref    : (1, 4*H1)        layer-1 combined bias (b_ih + b_hh)
#   wih2_ref  : (H1, 4*H2)       layer-2 input->gate weights
#   whh2_ref  : (H2, 4*H2)       layer-2 hidden->gate weights
#   b2_ref    : (1, 4*H2)        layer-2 combined bias
#   out_ref   : (T, Bp, H2)      layer-2 hidden states (the MANN logits)
#   scratch   : gx1 (T,Bp,4H1), h1 (T,Bp,H1), gx2 (T,Bp,4H2)   (VMEM)
# ----------------------------------------------------------------------------
def mann_fused_kernel(img_ref, lab_ref, wimg1_ref, wlab1_ref, whh1_ref, b1_ref,
                      wih2_ref, whh2_ref, b2_ref,
                      out_ref, gx1_scr, h1_scr, gx2_scr):
    T, Bp, Dimg = img_ref.shape
    Dlab = lab_ref.shape[2]
    H1 = whh1_ref.shape[0]
    H2 = whh2_ref.shape[0]

    def lstm_cell(gates, c_prev, H):
        # gates: (Bp, 4H) laid out [i | f | g | o] along lanes.
        i_g = _sigmoid(gates[:, 0 * H:1 * H])
        f_g = _sigmoid(gates[:, 1 * H:2 * H])
        g_g = jnp.tanh(gates[:, 2 * H:3 * H])
        o_g = _sigmoid(gates[:, 3 * H:4 * H])
        c_new = f_g * c_prev + i_g * g_g
        h_new = o_g * jnp.tanh(c_new)
        return h_new, c_new

    # ---- Layer 1 prologue: input projection hoisted out of the recurrence.
    #      Two (T*Bp, .) matmuls (image part + label part) replace the concat;
    #      bias folded in once.
    img_all = img_ref[...].reshape(T * Bp, Dimg)
    lab_all = lab_ref[...].reshape(T * Bp, Dlab)
    gx1 = jnp.dot(img_all, wimg1_ref[...], preferred_element_type=jnp.float32)
    gx1 = gx1 + jnp.dot(lab_all, wlab1_ref[...],
                        preferred_element_type=jnp.float32)
    gx1 = gx1 + b1_ref[...]
    gx1_scr[...] = gx1.reshape(T, Bp, 4 * H1)

    whh1 = whh1_ref[...]  # resident in vregs across the loop

    def step1(t, carry):
        h_prev, c_prev = carry
        gates = gx1_scr[t] + jnp.dot(h_prev, whh1,
                                     preferred_element_type=jnp.float32)
        h_new, c_new = lstm_cell(gates, c_prev, H1)
        h1_scr[t] = h_new
        return h_new, c_new

    z1 = jnp.zeros((Bp, H1), jnp.float32)
    _ = lax.fori_loop(0, T, step1, (z1, z1), unroll=True)

    # ---- Layer 2 prologue: input projection hoisted (one (T*Bp, H1) matmul).
    h1_all = h1_scr[...].reshape(T * Bp, H1)
    gx2 = jnp.dot(h1_all, wih2_ref[...], preferred_element_type=jnp.float32)
    gx2 = gx2 + b2_ref[...]
    gx2_scr[...] = gx2.reshape(T, Bp, 4 * H2)

    whh2 = whh2_ref[...]

    def step2(t, carry):
        h_prev, c_prev = carry
        gates = gx2_scr[t] + jnp.dot(h_prev, whh2,
                                     preferred_element_type=jnp.float32)
        h_new, c_new = lstm_cell(gates, c_prev, H2)
        out_ref[t] = h_new
        return h_new, c_new

    z2 = jnp.zeros((Bp, H2), jnp.float32)
    _ = lax.fori_loop(0, T, step2, (z2, z2), unroll=True)


# ----------------------------------------------------------------------------
# MANN module
# ----------------------------------------------------------------------------
def init_mann_params(key, num_classes, hidden_dim):
    d_in1 = num_classes + 784
    h1 = hidden_dim
    h2 = num_classes
    ks = jax.random.split(key, 8)

    def unif(k, shape, hidden):
        bound = 1.0 / np.sqrt(hidden)
        return jax.random.uniform(k, shape, jnp.float32, -bound, bound)

    return {
        # layer1: LSTM(num_classes + 784 -> hidden_dim)
        "w_ih1": unif(ks[0], (4 * h1, d_in1), h1),
        "w_hh1": unif(ks[1], (4 * h1, h1), h1),
        "b_ih1": unif(ks[2], (4 * h1,), h1),
        "b_hh1": unif(ks[3], (4 * h1,), h1),
        # layer2: LSTM(hidden_dim -> num_classes)
        "w_ih2": unif(ks[4], (4 * h2, h1), h2),
        "w_hh2": unif(ks[5], (4 * h2, h2), h2),
        "b_ih2": unif(ks[6], (4 * h2,), h2),
        "b_hh2": unif(ks[7], (4 * h2,), h2),
    }


@jax.jit
def mann_forward(params, input_images, input_labels):
    """input_images: [B, K+1, N, 784], input_labels: [B, K+1, N, N]."""
    B, Kp1, N, _ = input_images.shape
    T = Kp1 * N

    imgs = input_images.reshape(B, T, 784)
    labels = input_labels.at[:, -1, :, :].set(0.0)            # zero query labels
    labels = labels.reshape(B, T, N)

    # time-major layout for the recurrence
    imgs_t = jnp.transpose(imgs, (1, 0, 2)).astype(jnp.float32)    # (T, B, 784)
    labs_t = jnp.transpose(labels, (1, 0, 2)).astype(jnp.float32)  # (T, B, N)

    # Pad batch to a multiple of 8 (f32 sublane count) for vreg occupancy.
    Bp = -(-B // 8) * 8
    imgs_p = jnp.pad(imgs_t, ((0, 0), (0, Bp - B), (0, 0)))
    labs_p = jnp.pad(labs_t, ((0, 0), (0, Bp - B), (0, 0)))

    # PyTorch layouts (4H, D)/(4H, H)/(4H,) -> lane-major fused layouts.
    # Concat order in the reference is [images | labels], so split W_ih1 rows
    # (after transpose) at 784.
    wih1 = jnp.transpose(params["w_ih1"])            # (784+N, 4H1)
    wimg1 = wih1[:784]                               # (784, 4H1)
    wlab1 = wih1[784:]                               # (N,   4H1)
    whh1 = jnp.transpose(params["w_hh1"])            # (H1, 4H1)
    b1 = (params["b_ih1"] + params["b_hh1"]).reshape(1, -1)

    wih2 = jnp.transpose(params["w_ih2"])            # (H1, 4H2)
    whh2 = jnp.transpose(params["w_hh2"])            # (H2, 4H2)
    b2 = (params["b_ih2"] + params["b_hh2"]).reshape(1, -1)

    H1 = whh1.shape[0]
    H2 = whh2.shape[0]

    out = pl.pallas_call(
        mann_fused_kernel,
        out_shape=jax.ShapeDtypeStruct((T, Bp, H2), jnp.float32),
        in_specs=[pl.BlockSpec(memory_space=pltpu.MemorySpace.VMEM)] * 9,
        out_specs=pl.BlockSpec(memory_space=pltpu.MemorySpace.VMEM),
        scratch_shapes=[
            pltpu.VMEM((T, Bp, 4 * H1), jnp.float32),   # layer-1 x@Wih + b
            pltpu.VMEM((T, Bp, H1), jnp.float32),       # layer-1 hidden seq
            pltpu.VMEM((T, Bp, 4 * H2), jnp.float32),   # layer-2 h1@Wih + b
        ],
    )(imgs_p, labs_p, wimg1, wlab1, whh1, b1, wih2, whh2, b2)

    out = out[:, :B, :]                                  # strip batch padding
    out = jnp.transpose(out, (1, 0, 2)).reshape(B, Kp1, N, N)
    return out


# ----------------------------------------------------------------------------
# Pure-JAX reference (lax.scan) for correctness check.
# ----------------------------------------------------------------------------
def lstm_ref(x_tbd, w_ih, w_hh, b_ih, b_hh):
    H = w_ih.shape[0] // 4
    B = x_tbd.shape[1]

    def step(carry, x_t):
        h, c = carry
        gates = x_t @ w_ih.T + h @ w_hh.T + b_ih + b_hh
        i, f, g, o = jnp.split(gates, 4, axis=-1)
        i, f, g, o = _sigmoid(i), _sigmoid(f), jnp.tanh(g), _sigmoid(o)
        c = f * c + i * g
        h = o * jnp.tanh(c)
        return (h, c), h

    init = (jnp.zeros((B, H), jnp.float32), jnp.zeros((B, H), jnp.float32))
    _, hs = lax.scan(step, init, x_tbd)
    return hs


def mann_forward_ref(params, input_images, input_labels):
    B, Kp1, N, _ = input_images.shape
    imgs = input_images.reshape(B, Kp1 * N, -1)
    labels = input_labels.at[:, -1, :, :].set(0.0).reshape(B, Kp1 * N, N)
    x = jnp.transpose(jnp.concatenate([imgs, labels], -1), (1, 0, 2))
    h = lstm_ref(x, params["w_ih1"], params["w_hh1"],
                 params["b_ih1"], params["b_hh1"])
    out = lstm_ref(h, params["w_ih2"], params["w_hh2"],
                   params["b_ih2"], params["b_hh2"])
    return jnp.transpose(out, (1, 0, 2)).reshape(B, Kp1, N, N)


if __name__ == "__main__":
    num_classes = 4        # N
    samples_per_class = 2  # K  -> K+1 = 3
    hidden_dim = 32
    B, Kp1, N = 2, samples_per_class + 1, num_classes

    key = jax.random.PRNGKey(0)
    k_par, k_img, k_lab = jax.random.split(key, 3)

    params = init_mann_params(k_par, num_classes, hidden_dim)

    input_images = jax.random.normal(k_img, (B, Kp1, N, 784), jnp.float32)
    label_ids = jax.random.randint(k_lab, (B, Kp1, N), 0, N)
    input_labels = jax.nn.one_hot(label_ids, N, dtype=jnp.float32)  # [B,K+1,N,N]

    out = mann_forward(params, input_images, input_labels)
    out = jax.block_until_ready(out)
    assert out.shape == (B, Kp1, N, N)

    ref = mann_forward_ref(params, input_images, input_labels)
    np.testing.assert_allclose(np.asarray(out), np.asarray(ref),
                               rtol=1e-4, atol=1e-4)

    print("KERNEL_OK")
</pallas_src>

<mosaic_0001>
module attributes {stable_mosaic.version = 11 : i64} {
  func.func @mann_fused_kernel(%arg0: memref<12x8x784xf32, #tpu.memory_space<vmem>>, %arg1: memref<12x8x4xf32, #tpu.memory_space<vmem>>, %arg2: memref<784x128xf32, #tpu.memory_space<vmem>>, %arg3: memref<4x128xf32, #tpu.memory_space<vmem>>, %arg4: memref<32x128xf32, #tpu.memory_space<vmem>>, %arg5: memref<1x128xf32, #tpu.memory_space<vmem>>, %arg6: memref<32x16xf32, #tpu.memory_space<vmem>>, %arg7: memref<4x16xf32, #tpu.memory_space<vmem>>, %arg8: memref<1x16xf32, #tpu.memory_space<vmem>>, %arg9: memref<12x8x4xf32, #tpu.memory_space<vmem>>, %arg10: memref<12x8x128xf32, #tpu.memory_space<vmem>>, %arg11: memref<12x8x32xf32, #tpu.memory_space<vmem>>, %arg12: memref<12x8x16xf32, #tpu.memory_space<vmem>>) attributes {dimension_semantics = [], scalar_prefetch = 0 : i64, scratch_operands = 3 : i64, tpu.core_type = #tpu.core_type<tc>} {
    %c0 = arith.constant 0 : index
    %c0_0 = arith.constant 0 : index
    %c0_1 = arith.constant 0 : index
    %0 = vector.load %arg0[%c0, %c0_0, %c0_1] : memref<12x8x784xf32, #tpu.memory_space<vmem>>, vector<12x8x784xf32>
    %1 = vector.shape_cast %0 : vector<12x8x784xf32> to vector<96x784xf32>
    %c0_2 = arith.constant 0 : index
    %c0_3 = arith.constant 0 : index
    %c0_4 = arith.constant 0 : index
    %2 = vector.load %arg1[%c0_2, %c0_3, %c0_4] : memref<12x8x4xf32, #tpu.memory_space<vmem>>, vector<12x8x4xf32>
    %3 = vector.shape_cast %2 : vector<12x8x4xf32> to vector<96x4xf32>
    %c0_5 = arith.constant 0 : index
    %c0_6 = arith.constant 0 : index
    %4 = vector.load %arg2[%c0_5, %c0_6] : memref<784x128xf32, #tpu.memory_space<vmem>>, vector<784x128xf32>
    %cst = arith.constant dense<0.000000e+00> : vector<96x128xf32>
    %5 = tpu.matmul %1, %4, %cst {dimension_numbers = #tpu.dot_dimension_numbers<[1], [0], [0], [1], [0, 0, 1, 1], [], []>} : vector<96x784xf32>, vector<784x128xf32>, vector<96x128xf32> -> vector<96x128xf32>
    %c0_7 = arith.constant 0 : index
    %c0_8 = arith.constant 0 : index
    %6 = vector.load %arg3[%c0_7, %c0_8] : memref<4x128xf32, #tpu.memory_space<vmem>>, vector<4x128xf32>
    %cst_9 = arith.constant dense<0.000000e+00> : vector<96x128xf32>
    %7 = tpu.matmul %3, %6, %cst_9 {dimension_numbers = #tpu.dot_dimension_numbers<[1], [0], [0], [1], [0, 0, 1, 1], [], []>} : vector<96x4xf32>, vector<4x128xf32>, vector<96x128xf32> -> vector<96x128xf32>
    %8 = arith.addf %5, %7 : vector<96x128xf32>
    %c0_10 = arith.constant 0 : index
    %c0_11 = arith.constant 0 : index
    %9 = vector.load %arg5[%c0_10, %c0_11] : memref<1x128xf32, #tpu.memory_space<vmem>>, vector<1x128xf32>
    %10 = vector.broadcast %9 : vector<1x128xf32> to vector<96x128xf32>
    %11 = arith.addf %8, %10 : vector<96x128xf32>
    %12 = vector.shape_cast %11 : vector<96x128xf32> to vector<12x8x128xf32>
    %c0_12 = arith.constant 0 : index
    %c0_13 = arith.constant 0 : index
    %c0_14 = arith.constant 0 : index
    %13 = vector.load %arg10[%c0_12, %c0_13, %c0_14] : memref<12x8x128xf32, #tpu.memory_space<vmem>>, vector<12x8x128xf32>
    tpu.vector_store %arg10[%c0_12, %c0_13, %c0_14], %12 {strides = array<i32>} : memref<12x8x128xf32, #tpu.memory_space<vmem>>, vector<12x8x128xf32>,
    %c0_15 = arith.constant 0 : index
    %c0_16 = arith.constant 0 : index
    %14 = vector.load %arg4[%c0_15, %c0_16] : memref<32x128xf32, #tpu.memory_space<vmem>>, vector<32x128xf32>
    %cst_17 = arith.constant 0.000000e+00 : f32
    %15 = vector.broadcast %cst_17 : f32 to vector<8x32xf32>
    %c0_i32 = arith.constant 0 : i32
    %16 = arith.index_cast %c0_i32 : i32 to index
    %c0_18 = arith.constant 0 : index
    %c0_19 = arith.constant 0 : index
    %17 = vector.load %arg10[%16, %c0_18, %c0_19] : memref<12x8x128xf32, #tpu.memory_space<vmem>>, vector<1x8x128xf32>
    %18 = vector.shape_cast %17 : vector<1x8x128xf32> to vector<8x128xf32>
    %cst_20 = arith.constant dense<0.000000e+00> : vector<8x128xf32>
    %19 = tpu.matmul %15, %14, %cst_20 {dimension_numbers = #tpu.dot_dimension_numbers<[1], [0], [0], [1], [0, 0, 1, 1], [], []>} : vector<8x32xf32>, vector<32x128xf32>, vector<8x128xf32> -> vector<8x128xf32>
    %20 = arith.addf %18, %19 : vector<8x128xf32>
    %21 = vector.extract_strided_slice %20 {offsets = [0, 0], sizes = [8, 32], strides = [1, 1]} : vector<8x128xf32> to vector<8x32xf32>
    %cst_21 = arith.constant 0.000000e+00 : f32
    %22 = vector.broadcast %cst_21 : f32 to vector<8x32xf32>
    %23 = arith.subf %22, %21 : vector<8x32xf32>
    %24 = math.exp %23 : vector<8x32xf32>
    %cst_22 = arith.constant 1.000000e+00 : f32
    %25 = vector.broadcast %cst_22 : f32 to vector<8x32xf32>
    %26 = arith.addf %25, %24 : vector<8x32xf32>
    %cst_23 = arith.constant 1.000000e+00 : f32
    %27 = vector.broadcast %cst_23 : f32 to vector<8x32xf32>
    %28 = arith.divf %27, %26 : vector<8x32xf32>
    %29 = vector.extract_strided_slice %20 {offsets = [0, 32], sizes = [8, 32], strides = [1, 1]} : vector<8x128xf32> to vector<8x32xf32>
    %cst_24 = arith.constant 0.000000e+00 : f32
    %30 = vector.broadcast %cst_24 : f32 to vector<8x32xf32>
    %31 = arith.subf %30, %29 : vector<8x32xf32>
    %32 = math.exp %31 : vector<8x32xf32>
    %cst_25 = arith.constant 1.000000e+00 : f32
    %33 = vector.broadcast %cst_25 : f32 to vector<8x32xf32>
    %34 = arith.addf %33, %32 : vector<8x32xf32>
    %cst_26 = arith.constant 1.000000e+00 : f32
    %35 = vector.broadcast %cst_26 : f32 to vector<8x32xf32>
    %36 = arith.divf %35, %34 : vector<8x32xf32>
    %37 = vector.extract_strided_slice %20 {offsets = [0, 64], sizes = [8, 32], strides = [1, 1]} : vector<8x128xf32> to vector<8x32xf32>
    %38 = math.tanh %37 : vector<8x32xf32>
    %39 = vector.extract_strided_slice %20 {offsets = [0, 96], sizes = [8, 32], strides = [1, 1]} : vector<8x128xf32> to vector<8x32xf32>
    %cst_27 = arith.constant 0.000000e+00 : f32
    %40 = vector.broadcast %cst_27 : f32 to vector<8x32xf32>
    %41 = arith.subf %40, %39 : vector<8x32xf32>
    %42 = math.exp %41 : vector<8x32xf32>
    %cst_28 = arith.constant 1.000000e+00 : f32
    %43 = vector.broadcast %cst_28 : f32 to vector<8x32xf32>
    %44 = arith.addf %43, %42 : vector<8x32xf32>
    %cst_29 = arith.constant 1.000000e+00 : f32
    %45 = vector.broadcast %cst_29 : f32 to vector<8x32xf32>
    %46 = arith.divf %45, %44 : vector<8x32xf32>
    %47 = arith.mulf %36, %15 : vector<8x32xf32>
    %48 = arith.mulf %28, %38 : vector<8x32xf32>
    %49 = arith.addf %47, %48 : vector<8x32xf32>
    %50 = math.tanh %49 : vector<8x32xf32>
    %51 = arith.mulf %46, %50 : vector<8x32xf32>
    %52 = arith.index_cast %c0_i32 : i32 to index
    %c0_30 = arith.constant 0 : index
    %c0_31 = arith.constant 0 : index
    %53 = vector.load %arg11[%52, %c0_30, %c0_31] : memref<12x8x32xf32, #tpu.memory_space<vmem>>, vector<1x8x32xf32>
    %54 = vector.shape_cast %53 : vector<1x8x32xf32> to vector<8x32xf32>
    %55 = vector.shape_cast %51 : vector<8x32xf32> to vector<1x8x32xf32>
    tpu.vector_store %arg11[%52, %c0_30, %c0_31], %55 {strides = array<i32>} : memref<12x8x32xf32, #tpu.memory_space<vmem>>, vector<1x8x32xf32>,
    %c1_i32 = arith.constant 1 : i32
    %56 = arith.index_cast %c1_i32 : i32 to index
    %c0_32 = arith.constant 0 : index
    %c0_33 = arith.constant 0 : index
    %57 = vector.load %arg10[%56, %c0_32, %c0_33] : memref<12x8x128xf32, #tpu.memory_space<vmem>>, vector<1x8x128xf32>
    %58 = vector.shape_cast %57 : vector<1x8x128xf32> to vector<8x128xf32>
    %cst_34 = arith.constant dense<0.000000e+00> : vector<8x128xf32>
    %59 = tpu.matmul %51, %14, %cst_34 {dimension_numbers = #tpu.dot_dimension_numbers<[1], [0], [0], [1], [0, 0, 1, 1], [], []>} : vector<8x32xf32>, vector<32x128xf32>, vector<8x128xf32> -> vector<8x128xf32>
    %60 = arith.addf %58, %59 : vector<8x128xf32>
    %61 = vector.extract_strided_slice %60 {offsets = [0, 0], sizes = [8, 32], strides = [1, 1]} : vector<8x128xf32> to vector<8x32xf32>
    %cst_35 = arith.constant 0.000000e+00 : f32
    %62 = vector.broadcast %cst_35 : f32 to vector<8x32xf32>
    %63 = arith.subf %62, %61 : vector<8x32xf32>
    %64 = math.exp %63 : vector<8x32xf32>
    %cst_36 = arith.constant 1.000000e+00 : f32
    %65 = vector.broadcast %cst_36 : f32 to vector<8x32xf32>
    %66 = arith.addf %65, %64 : vector<8x32xf32>
    %cst_37 = arith.constant 1.000000e+00 : f32
    %67 = vector.broadcast %cst_37 : f32 to vector<8x32xf32>
    %68 = arith.divf %67, %66 : vector<8x32xf32>
    %69 = vector.extract_strided_slice %60 {offsets = [0, 32], sizes = [8, 32], strides = [1, 1]} : vector<8x128xf32> to vector<8x32xf32>
    %cst_38 = arith.constant 0.000000e+00 : f32
    %70 = vector.broadcast %cst_38 : f32 to vector<8x32xf32>
    %71 = arith.subf %70, %69 : vector<8x32xf32>
    %72 = math.exp %71 : vector<8x32xf32>
    %cst_39 = arith.constant 1.000000e+00 : f32
    %73 = vector.broadcast %cst_39 : f32 to vector<8x32xf32>
    %74 = arith.addf %73, %72 : vector<8x32xf32>
    %cst_40 = arith.constant 1.000000e+00 : f32
    %75 = vector.broadcast %cst_40 : f32 to vector<8x32xf32>
    %76 = arith.divf %75, %74 : vector<8x32xf32>
    %77 = vector.extract_strided_slice %60 {offsets = [0, 64], sizes = [8, 32], strides = [1, 1]} : vector<8x128xf32> to vector<8x32xf32>
    %78 = math.tanh %77 : vector<8x32xf32>
    %79 = vector.extract_strided_slice %60 {offsets = [0, 96], sizes = [8, 32], strides = [1, 1]} : vector<8x128xf32> to vector<8x32xf32>
    %cst_41 = arith.constant 0.000000e+00 : f32
    %80 = vector.broadcast %cst_41 : f32 to vector<8x32xf32>
    %81 = arith.subf %80, %79 : vector<8x32xf32>
    %82 = math.exp %81 : vector<8x32xf32>
    %cst_42 = arith.constant 1.000000e+00 : f32
    %83 = vector.broadcast %cst_42 : f32 to vector<8x32xf32>
    %84 = arith.addf %83, %82 : vector<8x32xf32>
    %cst_43 = arith.constant 1.000000e+00 : f32
    %85 = vector.broadcast %cst_43 : f32 to vector<8x32xf32>
    %86 = arith.divf %85, %84 : vector<8x32xf32>
    %87 = arith.mulf %76, %49 : vector<8x32xf32>
    %88 = arith.mulf %68, %78 : vector<8x32xf32>
    %89 = arith.addf %87, %88 : vector<8x32xf32>
    %90 = math.tanh %89 : vector<8x32xf32>
    %91 = arith.mulf %86, %90 : vector<8x32xf32>
    %92 = arith.index_cast %c1_i32 : i32 to index
    %c0_44 = arith.constant 0 : index
    %c0_45 = arith.constant 0 : index
    %93 = vector.load %arg11[%92, %c0_44, %c0_45] : memref<12x8x32xf32, #tpu.memory_space<vmem>>, vector<1x8x32xf32>
    %94 = vector.shape_cast %93 : vector<1x8x32xf32> to vector<8x32xf32>
    %95 = vector.shape_cast %91 : vector<8x32xf32> to vector<1x8x32xf32>
    tpu.vector_store %arg11[%92, %c0_44, %c0_45], %95 {strides = array<i32>} : memref<12x8x32xf32, #tpu.memory_space<vmem>>, vector<1x8x32xf32>,
    %c2_i32 = arith.constant 2 : i32
    %96 = arith.index_cast %c2_i32 : i32 to index
    %c0_46 = arith.constant 0 : index
    %c0_47 = arith.constant 0 : index
    %97 = vector.load %arg10[%96, %c0_46, %c0_47] : memref<12x8x128xf32, #tpu.memory_space<vmem>>, vector<1x8x128xf32>
    %98 = vector.shape_cast %97 : vector<1x8x128xf32> to vector<8x128xf32>
    %cst_48 = arith.constant dense<0.000000e+00> : vector<8x128xf32>
    %99 = tpu.matmul %91, %14, %cst_48 {dimension_numbers = #tpu.dot_dimension_numbers<[1], [0], [0], [1], [0, 0, 1, 1], [], []>} : vector<8x32xf32>, vector<32x128xf32>, vector<8x128xf32> -> vector<8x128xf32>
    %100 = arith.addf %98, %99 : vector<8x128xf32>
    %101 = vector.extract_strided_slice %100 {offsets = [0, 0], sizes = [8, 32], strides = [1, 1]} : vector<8x128xf32> to vector<8x32xf32>
    %cst_49 = arith.constant 0.000000e+00 : f32
    %102 = vector.broadcast %cst_49 : f32 to vector<8x32xf32>
    %103 = arith.subf %102, %101 : vector<8x32xf32>
    %104 = math.exp %103 : vector<8x32xf32>
    %cst_50 = arith.constant 1.000000e+00 : f32
    %105 = vector.broadcast %cst_50 : f32 to vector<8x32xf32>
    %106 = arith.addf %105, %104 : vector<8x32xf32>
    %cst_51 = arith.constant 1.000000e+00 : f32
    %107 = vector.broadcast %cst_51 : f32 to vector<8x32xf32>
    %108 = arith.divf %107, %106 : vector<8x32xf32>
    %109 = vector.extract_strided_slice %100 {offsets = [0, 32], sizes = [8, 32], strides = [1, 1]} : vector<8x128xf32> to vector<8x32xf32>
    %cst_52 = arith.constant 0.000000e+00 : f32
    %110 = vector.broadcast %cst_52 : f32 to vector<8x32xf32>
    %111 = arith.subf %110, %109 : vector<8x32xf32>
    %112 = math.exp %111 : vector<8x32xf32>
    %cst_53 = arith.constant 1.000000e+00 : f32
    %113 = vector.broadcast %cst_53 : f32 to vector<8x32xf32>
    %114 = arith.addf %113, %112 : vector<8x32xf32>
    %cst_54 = arith.constant 1.000000e+00 : f32
    %115 = vector.broadcast %cst_54 : f32 to vector<8x32xf32>
    %116 = arith.divf %115, %114 : vector<8x32xf32>
    %117 = vector.extract_strided_slice %100 {offsets = [0, 64], sizes = [8, 32], strides = [1, 1]} : vector<8x128xf32> to vector<8x32xf32>
    %118 = math.tanh %117 : vector<8x32xf32>
    %119 = vector.extract_strided_slice %100 {offsets = [0, 96], sizes = [8, 32], strides = [1, 1]} : vector<8x128xf32> to vector<8x32xf32>
    %cst_55 = arith.constant 0.000000e+00 : f32
    %120 = vector.broadcast %cst_55 : f32 to vector<8x32xf32>
    %121 = arith.subf %120, %119 : vector<8x32xf32>
    %122 = math.exp %121 : vector<8x32xf32>
    %cst_56 = arith.constant 1.000000e+00 : f32
    %123 = vector.broadcast %cst_56 : f32 to vector<8x32xf32>
    %124 = arith.addf %123, %122 : vector<8x32xf32>
    %cst_57 = arith.constant 1.000000e+00 : f32
    %125 = vector.broadcast %cst_57 : f32 to vector<8x32xf32>
    %126 = arith.divf %125, %124 : vector<8x32xf32>
    %127 = arith.mulf %116, %89 : vector<8x32xf32>
    %128 = arith.mulf %108, %118 : vector<8x32xf32>
    %129 = arith.addf %127, %128 : vector<8x32xf32>
    %130 = math.tanh %129 : vector<8x32xf32>
    %131 = arith.mulf %126, %130 : vector<8x32xf32>
    %132 = arith.index_cast %c2_i32 : i32 to index
    %c0_58 = arith.constant 0 : index
    %c0_59 = arith.constant 0 : index
    %133 = vector.load %arg11[%132, %c0_58, %c0_59] : memref<12x8x32xf32, #tpu.memory_space<vmem>>, vector<1x8x32xf32>
    %134 = vector.shape_cast %133 : vector<1x8x32xf32> to vector<8x32xf32>
    %135 = vector.shape_cast %131 : vector<8x32xf32> to vector<1x8x32xf32>
    tpu.vector_store %arg11[%132, %c0_58, %c0_59], %135 {strides = array<i32>} : memref<12x8x32xf32, #tpu.memory_space<vmem>>, vector<1x8x32xf32>,
    %c3_i32 = arith.constant 3 : i32
    %136 = arith.index_cast %c3_i32 : i32 to index
    %c0_60 = arith.constant 0 : index
    %c0_61 = arith.constant 0 : index
    %137 = vector.load %arg10[%136, %c0_60, %c0_61] : memref<12x8x128xf32, #tpu.memory_space<vmem>>, vector<1x8x128xf32>
    %138 = vector.shape_cast %137 : vector<1x8x128xf32> to vector<8x128xf32>
    %cst_62 = arith.constant dense<0.000000e+00> : vector<8x128xf32>
    %139 = tpu.matmul %131, %14, %cst_62 {dimension_numbers = #tpu.dot_dimension_numbers<[1], [0], [0], [1], [0, 0, 1, 1], [], []>} : vector<8x32xf32>, vector<32x128xf32>, vector<8x128xf32> -> vector<8x128xf32>
    %140 = arith.addf %138, %139 : vector<8x128xf32>
    %141 = vector.extract_strided_slice %140 {offsets = [0, 0], sizes = [8, 32], strides = [1, 1]} : vector<8x128xf32> to vector<8x32xf32>
    %cst_63 = arith.constant 0.000000e+00 : f32
    %142 = vector.broadcast %cst_63 : f32 to vector<8x32xf32>
    %143 = arith.subf %142, %141 : vector<8x32xf32>
    %144 = math.exp %143 : vector<8x32xf32>
    %cst_64 = arith.constant 1.000000e+00 : f32
    %145 = vector.broadcast %cst_64 : f32 to vector<8x32xf32>
    %146 = arith.addf %145, %144 : vector<8x32xf32>
    %cst_65 = arith.constant 1.000000e+00 : f32
    %147 = vector.broadcast %cst_65 : f32 to vector<8x32xf32>
    %148 = arith.divf %147, %146 : vector<8x32xf32>
    %149 = vector.extract_strided_slice %140 {offsets = [0, 32], sizes = [8, 32], strides = [1, 1]} : vector<8x128xf32> to vector<8x32xf32>
    %cst_66 = arith.constant 0.000000e+00 : f32
    %150 = vector.broadcast %cst_66 : f32 to vector<8x32xf32>
    %151 = arith.subf %150, %149 : vector<8x32xf32>
    %152 = math.exp %151 : vector<8x32xf32>
    %cst_67 = arith.constant 1.000000e+00 : f32
    %153 = vector.broadcast %cst_67 : f32 to vector<8x32xf32>
    %154 = arith.addf %153, %152 : vector<8x32xf32>
    %cst_68 = arith.constant 1.000000e+00 : f32
    %155 = vector.broadcast %cst_68 : f32 to vector<8x32xf32>
    %156 = arith.divf %155, %154 : vector<8x32xf32>
    %157 = vector.extract_strided_slice %140 {offsets = [0, 64], sizes = [8, 32], strides = [1, 1]} : vector<8x128xf32> to vector<8x32xf32>
    %158 = math.tanh %157 : vector<8x32xf32>
    %159 = vector.extract_strided_slice %140 {offsets = [0, 96], sizes = [8, 32], strides = [1, 1]} : vector<8x128xf32> to vector<8x32xf32>
    %cst_69 = arith.constant 0.000000e+00 : f32
    %160 = vector.broadcast %cst_69 : f32 to vector<8x32xf32>
    %161 = arith.subf %160, %159 : vector<8x32xf32>
    %162 = math.exp %161 : vector<8x32xf32>
    %cst_70 = arith.constant 1.000000e+00 : f32
    %163 = vector.broadcast %cst_70 : f32 to vector<8x32xf32>
    %164 = arith.addf %163, %162 : vector<8x32xf32>
    %cst_71 = arith.constant 1.000000e+00 : f32
    %165 = vector.broadcast %cst_71 : f32 to vector<8x32xf32>
    %166 = arith.divf %165, %164 : vector<8x32xf32>
    %167 = arith.mulf %156, %129 : vector<8x32xf32>
    %168 = arith.mulf %148, %158 : vector<8x32xf32>
    %169 = arith.addf %167, %168 : vector<8x32xf32>
    %170 = math.tanh %169 : vector<8x32xf32>
    %171 = arith.mulf %166, %170 : vector<8x32xf32>
    %172 = arith.index_cast %c3_i32 : i32 to index
    %c0_72 = arith.constant 0 : index
    %c0_73 = arith.constant 0 : index
    %173 = vector.load %arg11[%172, %c0_72, %c0_73] : memref<12x8x32xf32, #tpu.memory_space<vmem>>, vector<1x8x32xf32>
    %174 = vector.shape_cast %173 : vector<1x8x32xf32> to vector<8x32xf32>
    %175 = vector.shape_cast %171 : vector<8x32xf32> to vector<1x8x32xf32>
    tpu.vector_store %arg11[%172, %c0_72, %c0_73], %175 {strides = array<i32>} : memref<12x8x32xf32, #tpu.memory_space<vmem>>, vector<1x8x32xf32>,
    %c4_i32 = arith.constant 4 : i32
    %176 = arith.index_cast %c4_i32 : i32 to index
    %c0_74 = arith.constant 0 : index
    %c0_75 = arith.constant 0 : index
    %177 = vector.load %arg10[%176, %c0_74, %c0_75] : memref<12x8x128xf32, #tpu.memory_space<vmem>>, vector<1x8x128xf32>
    %178 = vector.shape_cast %177 : vector<1x8x128xf32> to vector<8x128xf32>
    %cst_76 = arith.constant dense<0.000000e+00> : vector<8x128xf32>
    %179 = tpu.matmul %171, %14, %cst_76 {dimension_numbers = #tpu.dot_dimension_numbers<[1], [0], [0], [1], [0, 0, 1, 1], [], []>} : vector<8x32xf32>, vector<32x128xf32>, vector<8x128xf32> -> vector<8x128xf32>
    %180 = arith.addf %178, %179 : vector<8x128xf32>
    %181 = vector.extract_strided_slice %180 {offsets = [0, 0], sizes = [8, 32], strides = [1, 1]} : vector<8x128xf32> to vector<8x32xf32>
    %cst_77 = arith.constant 0.000000e+00 : f32
    %182 = vector.broadcast %cst_77 : f32 to vector<8x32xf32>
    %183 = arith.subf %182, %181 : vector<8x32xf32>
    %184 = math.exp %183 : vector<8x32xf32>
    %cst_78 = arith.constant 1.000000e+00 : f32
    %185 = vector.broadcast %cst_78 : f32 to vector<8x32xf32>
    %186 = arith.addf %185, %184 : vector<8x32xf32>
    %cst_79 = arith.constant 1.000000e+00 : f32
    %187 = vector.broadcast %cst_79 : f32 to vector<8x32xf32>
    %188 = arith.divf %187, %186 : vector<8x32xf32>
    %189 = vector.extract_strided_slice %180 {offsets = [0, 32], sizes = [8, 32], strides = [1, 1]} : vector<8x128xf32> to vector<8x32xf32>
    %cst_80 = arith.constant 0.000000e+00 : f32
    %190 = vector.broadcast %cst_80 : f32 to vector<8x32xf32>
    %191 = arith.subf %190, %189 : vector<8x32xf32>
    %192 = math.exp %191 : vector<8x32xf32>
    %cst_81 = arith.constant 1.000000e+00 : f32
    %193 = vector.broadcast %cst_81 : f32 to vector<8x32xf32>
    %194 = arith.addf %193, %192 : vector<8x32xf32>
    %cst_82 = arith.constant 1.000000e+00 : f32
    %195 = vector.broadcast %cst_82 : f32 to vector<8x32xf32>
    %196 = arith.divf %195, %194 : vector<8x32xf32>
    %197 = vector.extract_strided_slice %180 {offsets = [0, 64], sizes = [8, 32], strides = [1, 1]} : vector<8x128xf32> to vector<8x32xf32>
    %198 = math.tanh %197 : vector<8x32xf32>
    %199 = vector.extract_strided_slice %180 {offsets = [0, 96], sizes = [8, 32], strides = [1, 1]} : vector<8x128xf32> to vector<8x32xf32>
    %cst_83 = arith.constant 0.000000e+00 : f32
    %200 = vector.broadcast %cst_83 : f32 to vector<8x32xf32>
    %201 = arith.subf %200, %199 : vector<8x32xf32>
    %202 = math.exp %201 : vector<8x32xf32>
    %cst_84 = arith.constant 1.000000e+00 : f32
    %203 = vector.broadcast %cst_84 : f32 to vector<8x32xf32>
    %204 = arith.addf %203, %202 : vector<8x32xf32>
    %cst_85 = arith.constant 1.000000e+00 : f32
    %205 = vector.broadcast %cst_85 : f32 to vector<8x32xf32>
    %206 = arith.divf %205, %204 : vector<8x32xf32>
    %207 = arith.mulf %196, %169 : vector<8x32xf32>
    %208 = arith.mulf %188, %198 : vector<8x32xf32>
    %209 = arith.addf %207, %208 : vector<8x32xf32>
    %210 = math.tanh %209 : vector<8x32xf32>
    %211 = arith.mulf %206, %210 : vector<8x32xf32>
    %212 = arith.index_cast %c4_i32 : i32 to index
    %c0_86 = arith.constant 0 : index
    %c0_87 = arith.constant 0 : index
    %213 = vector.load %arg11[%212, %c0_86, %c0_87] : memref<12x8x32xf32, #tpu.memory_space<vmem>>, vector<1x8x32xf32>
    %214 = vector.shape_cast %213 : vector<1x8x32xf32> to vector<8x32xf32>
    %215 = vector.shape_cast %211 : vector<8x32xf32> to vector<1x8x32xf32>
    tpu.vector_store %arg11[%212, %c0_86, %c0_87], %215 {strides = array<i32>} : memref<12x8x32xf32, #tpu.memory_space<vmem>>, vector<1x8x32xf32>,
    %c5_i32 = arith.constant 5 : i32
    %216 = arith.index_cast %c5_i32 : i32 to index
    %c0_88 = arith.constant 0 : index
    %c0_89 = arith.constant 0 : index
    %217 = vector.load %arg10[%216, %c0_88, %c0_89] : memref<12x8x128xf32, #tpu.memory_space<vmem>>, vector<1x8x128xf32>
    %218 = vector.shape_cast %217 : vector<1x8x128xf32> to vector<8x128xf32>
    %cst_90 = arith.constant dense<0.000000e+00> : vector<8x128xf32>
    %219 = tpu.matmul %211, %14, %cst_90 {dimension_numbers = #tpu.dot_dimension_numbers<[1], [0], [0], [1], [0, 0, 1, 1], [], []>} : vector<8x32xf32>, vector<32x128xf32>, vector<8x128xf32> -> vector<8x128xf32>
    %220 = arith.addf %218, %219 : vector<8x128xf32>
    %221 = vector.extract_strided_slice %220 {offsets = [0, 0], sizes = [8, 32], strides = [1, 1]} : vector<8x128xf32> to vector<8x32xf32>
    %cst_91 = arith.constant 0.000000e+00 : f32
    %222 = vector.broadcast %cst_91 : f32 to vector<8x32xf32>
    %223 = arith.subf %222, %221 : vector<8x32xf32>
    %224 = math.exp %223 : vector<8x32xf32>
    %cst_92 = arith.constant 1.000000e+00 : f32
    %225 = vector.broadcast %cst_92 : f32 to vector<8x32xf32>
    %226 = arith.addf %225, %224 : vector<8x32xf32>
    %cst_93 = arith.constant 1.000000e+00 : f32
    %227 = vector.broadcast %cst_93 : f32 to vector<8x32xf32>
    %228 = arith.divf %227, %226 : vector<8x32xf32>
    %229 = vector.extract_strided_slice %220 {offsets = [0, 32], sizes = [8, 32], strides = [1, 1]} : vector<8x128xf32> to vector<8x32xf32>
    %cst_94 = arith.constant 0.000000e+00 : f32
    %230 = vector.broadcast %cst_94 : f32 to vector<8x32xf32>
    %231 = arith.subf %230, %229 : vector<8x32xf32>
    %232 = math.exp %231 : vector<8x32xf32>
    %cst_95 = arith.constant 1.000000e+00 : f32
    %233 = vector.broadcast %cst_95 : f32 to vector<8x32xf32>
    %234 = arith.addf %233, %232 : vector<8x32xf32>
    %cst_96 = arith.constant 1.000000e+00 : f32
    %235 = vector.broadcast %cst_96 : f32 to vector<8x32xf32>
    %236 = arith.divf %235, %234 : vector<8x32xf32>
    %237 = vector.extract_strided_slice %220 {offsets = [0, 64], sizes = [8, 32], strides = [1, 1]} : vector<8x128xf32> to vector<8x32xf32>
    %238 = math.tanh %237 : vector<8x32xf32>
    %239 = vector.extract_strided_slice %220 {offsets = [0, 96], sizes = [8, 32], strides = [1, 1]} : vector<8x128xf32> to vector<8x32xf32>
    %cst_97 = arith.constant 0.000000e+00 : f32
    %240 = vector.broadcast %cst_97 : f32 to vector<8x32xf32>
    %241 = arith.subf %240, %239 : vector<8x32xf32>
    %242 = math.exp %241 : vector<8x32xf32>
    %cst_98 = arith.constant 1.000000e+00 : f32
    %243 = vector.broadcast %cst_98 : f32 to vector<8x32xf32>
    %244 = arith.addf %243, %242 : vector<8x32xf32>
    %cst_99 = arith.constant 1.000000e+00 : f32
    %245 = vector.broadcast %cst_99 : f32 to vector<8x32xf32>
    %246 = arith.divf %245, %244 : vector<8x32xf32>
    %247 = arith.mulf %236, %209 : vector<8x32xf32>
    %248 = arith.mulf %228, %238 : vector<8x32xf32>
    %249 = arith.addf %247, %248 : vector<8x32xf32>
    %250 = math.tanh %249 : vector<8x32xf32>
    %251 = arith.mulf %246, %250 : vector<8x32xf32>
    %252 = arith.index_cast %c5_i32 : i32 to index
    %c0_100 = arith.constant 0 : index
    %c0_101 = arith.constant 0 : index
    %253 = vector.load %arg11[%252, %c0_100, %c0_101] : memref<12x8x32xf32, #tpu.memory_space<vmem>>, vector<1x8x32xf32>
    %254 = vector.shape_cast %253 : vector<1x8x32xf32> to vector<8x32xf32>
    %255 = vector.shape_cast %251 : vector<8x32xf32> to vector<1x8x32xf32>
    tpu.vector_store %arg11[%252, %c0_100, %c0_101], %255 {strides = array<i32>} : memref<12x8x32xf32, #tpu.memory_space<vmem>>, vector<1x8x32xf32>,
    %c6_i32 = arith.constant 6 : i32
    %256 = arith.index_cast %c6_i32 : i32 to index
    %c0_102 = arith.constant 0 : index
    %c0_103 = arith.constant 0 : index
    %257 = vector.load %arg10[%256, %c0_102, %c0_103] : memref<12x8x128xf32, #tpu.memory_space<vmem>>, vector<1x8x128xf32>
    %258 = vector.shape_cast %257 : vector<1x8x128xf32> to vector<8x128xf32>
    %cst_104 = arith.constant dense<0.000000e+00> : vector<8x128xf32>
    %259 = tpu.matmul %251, %14, %cst_104 {dimension_numbers = #tpu.dot_dimension_numbers<[1], [0], [0], [1], [0, 0, 1, 1], [], []>} : vector<8x32xf32>, vector<32x128xf32>, vector<8x128xf32> -> vector<8x128xf32>
    %260 = arith.addf %258, %259 : vector<8x128xf32>
    %261 = vector.extract_strided_slice %260 {offsets = [0, 0], sizes = [8, 32], strides = [1, 1]} : vector<8x128xf32> to vector<8x32xf32>
    %cst_105 = arith.constant 0.000000e+00 : f32
    %262 = vector.broadcast %cst_105 : f32 to vector<8x32xf32>
    %263 = arith.subf %262, %261 : vector<8x32xf32>
    %264 = math.exp %263 : vector<8x32xf32>
    %cst_106 = arith.constant 1.000000e+00 : f32
    %265 = vector.broadcast %cst_106 : f32 to vector<8x32xf32>
    %266 = arith.addf %265, %264 : vector<8x32xf32>
    %cst_107 = arith.constant 1.000000e+00 : f32
    %267 = vector.broadcast %cst_107 : f32 to vector<8x32xf32>
    %268 = arith.divf %267, %266 : vector<8x32xf32>
    %269 = vector.extract_strided_slice %260 {offsets = [0, 32], sizes = [8, 32], strides = [1, 1]} : vector<8x128xf32> to vector<8x32xf32>
    %cst_108 = arith.constant 0.000000e+00 : f32
    %270 = vector.broadcast %cst_108 : f32 to vector<8x32xf32>
    %271 = arith.subf %270, %269 : vector<8x32xf32>
    %272 = math.exp %271 : vector<8x32xf32>
    %cst_109 = arith.constant 1.000000e+00 : f32
    %273 = vector.broadcast %cst_109 : f32 to vector<8x32xf32>
    %274 = arith.addf %273, %272 : vector<8x32xf32>
    %cst_110 = arith.constant 1.000000e+00 : f32
    %275 = vector.broadcast %cst_110 : f32 to vector<8x32xf32>
    %276 = arith.divf %275, %274 : vector<8x32xf32>
    %277 = vector.extract_strided_slice %260 {offsets = [0, 64], sizes = [8, 32], strides = [1, 1]} : vector<8x128xf32> to vector<8x32xf32>
    %278 = math.tanh %277 : vector<8x32xf32>
    %279 = vector.extract_strided_slice %260 {offsets = [0, 96], sizes = [8, 32], strides = [1, 1]} : vector<8x128xf32> to vector<8x32xf32>
    %cst_111 = arith.constant 0.000000e+00 : f32
    %280 = vector.broadcast %cst_111 : f32 to vector<8x32xf32>
    %281 = arith.subf %280, %279 : vector<8x32xf32>
    %282 = math.exp %281 : vector<8x32xf32>
    %cst_112 = arith.constant 1.000000e+00 : f32
    %283 = vector.broadcast %cst_112 : f32 to vector<8x32xf32>
    %284 = arith.addf %283, %282 : vector<8x32xf32>
    %cst_113 = arith.constant 1.000000e+00 : f32
    %285 = vector.broadcast %cst_113 : f32 to vector<8x32xf32>
    %286 = arith.divf %285, %284 : vector<8x32xf32>
    %287 = arith.mulf %276, %249 : vector<8x32xf32>
    %288 = arith.mulf %268, %278 : vector<8x32xf32>
    %289 = arith.addf %287, %288 : vector<8x32xf32>
    %290 = math.tanh %289 : vector<8x32xf32>
    %291 = arith.mulf %286, %290 : vector<8x32xf32>
    %292 = arith.index_cast %c6_i32 : i32 to index
    %c0_114 = arith.constant 0 : index
    %c0_115 = arith.constant 0 : index
    %293 = vector.load %arg11[%292, %c0_114, %c0_115] : memref<12x8x32xf32, #tpu.memory_space<vmem>>, vector<1x8x32xf32>
    %294 = vector.shape_cast %293 : vector<1x8x32xf32> to vector<8x32xf32>
    %295 = vector.shape_cast %291 : vector<8x32xf32> to vector<1x8x32xf32>
    tpu.vector_store %arg11[%292, %c0_114, %c0_115], %295 {strides = array<i32>} : memref<12x8x32xf32, #tpu.memory_space<vmem>>, vector<1x8x32xf32>,
    %c7_i32 = arith.constant 7 : i32
    %296 = arith.index_cast %c7_i32 : i32 to index
    %c0_116 = arith.constant 0 : index
    %c0_117 = arith.constant 0 : index
    %297 = vector.load %arg10[%296, %c0_116, %c0_117] : memref<12x8x128xf32, #tpu.memory_space<vmem>>, vector<1x8x128xf32>
    %298 = vector.shape_cast %297 : vector<1x8x128xf32> to vector<8x128xf32>
    %cst_118 = arith.constant dense<0.000000e+00> : vector<8x128xf32>
    %299 = tpu.matmul %291, %14, %cst_118 {dimension_numbers = #tpu.dot_dimension_numbers<[1], [0], [0], [1], [0, 0, 1, 1], [], []>} : vector<8x32xf32>, vector<32x128xf32>, vector<8x128xf32> -> vector<8x128xf32>
    %300 = arith.addf %298, %299 : vector<8x128xf32>
    %301 = vector.extract_strided_slice %300 {offsets = [0, 0], sizes = [8, 32], strides = [1, 1]} : vector<8x128xf32> to vector<8x32xf32>
    %cst_119 = arith.constant 0.000000e+00 : f32
    %302 = vector.broadcast %cst_119 : f32 to vector<8x32xf32>
    %303 = arith.subf %302, %301 : vector<8x32xf32>
    %304 = math.exp %303 : vector<8x32xf32>
    %cst_120 = arith.constant 1.000000e+00 : f32
    %305 = vector.broadcast %cst_120 : f32 to vector<8x32xf32>
    %306 = arith.addf %305, %304 : vector<8x32xf32>
    %cst_121 = arith.constant 1.000000e+00 : f32
    %307 = vector.broadcast %cst_121 : f32 to vector<8x32xf32>
    %308 = arith.divf %307, %306 : vector<8x32xf32>
    %309 = vector.extract_strided_slice %300 {offsets = [0, 32], sizes = [8, 32], strides = [1, 1]} : vector<8x128xf32> to vector<8x32xf32>
    %cst_122 = arith.constant 0.000000e+00 : f32
    %310 = vector.broadcast %cst_122 : f32 to vector<8x32xf32>
    %311 = arith.subf %310, %309 : vector<8x32xf32>
    %312 = math.exp %311 : vector<8x32xf32>
    %cst_123 = arith.constant 1.000000e+00 : f32
    %313 = vector.broadcast %cst_123 : f32 to vector<8x32xf32>
    %314 = arith.addf %313, %312 : vector<8x32xf32>
    %cst_124 = arith.constant 1.000000e+00 : f32
    %315 = vector.broadcast %cst_124 : f32 to vector<8x32xf32>
    %316 = arith.divf %315, %314 : vector<8x32xf32>
    %317 = vector.extract_strided_slice %300 {offsets = [0, 64], sizes = [8, 32], strides = [1, 1]} : vector<8x128xf32> to vector<8x32xf32>
    %318 = math.tanh %317 : vector<8x32xf32>
    %319 = vector.extract_strided_slice %300 {offsets = [0, 96], sizes = [8, 32], strides = [1, 1]} : vector<8x128xf32> to vector<8x32xf32>
    %cst_125 = arith.constant 0.000000e+00 : f32
    %320 = vector.broadcast %cst_125 : f32 to vector<8x32xf32>
    %321 = arith.subf %320, %319 : vector<8x32xf32>
    %322 = math.exp %321 : vector<8x32xf32>
    %cst_126 = arith.constant 1.000000e+00 : f32
    %323 = vector.broadcast %cst_126 : f32 to vector<8x32xf32>
    %324 = arith.addf %323, %322 : vector<8x32xf32>
    %cst_127 = arith.constant 1.000000e+00 : f32
    %325 = vector.broadcast %cst_127 : f32 to vector<8x32xf32>
    %326 = arith.divf %325, %324 : vector<8x32xf32>
    %327 = arith.mulf %316, %289 : vector<8x32xf32>
    %328 = arith.mulf %308, %318 : vector<8x32xf32>
    %329 = arith.addf %327, %328 : vector<8x32xf32>
    %330 = math.tanh %329 : vector<8x32xf32>
    %331 = arith.mulf %326, %330 : vector<8x32xf32>
    %332 = arith.index_cast %c7_i32 : i32 to index
    %c0_128 = arith.constant 0 : index
    %c0_129 = arith.constant 0 : index
    %333 = vector.load %arg11[%332, %c0_128, %c0_129] : memref<12x8x32xf32, #tpu.memory_space<vmem>>, vector<1x8x32xf32>
    %334 = vector.shape_cast %333 : vector<1x8x32xf32> to vector<8x32xf32>
    %335 = vector.shape_cast %331 : vector<8x32xf32> to vector<1x8x32xf32>
    tpu.vector_store %arg11[%332, %c0_128, %c0_129], %335 {strides = array<i32>} : memref<12x8x32xf32, #tpu.memory_space<vmem>>, vector<1x8x32xf32>,
    %c8_i32 = arith.constant 8 : i32
    %336 = arith.index_cast %c8_i32 : i32 to index
    %c0_130 = arith.constant 0 : index
    %c0_131 = arith.constant 0 : index
    %337 = vector.load %arg10[%336, %c0_130, %c0_131] : memref<12x8x128xf32, #tpu.memory_space<vmem>>, vector<1x8x128xf32>
    %338 = vector.shape_cast %337 : vector<1x8x128xf32> to vector<8x128xf32>
    %cst_132 = arith.constant dense<0.000000e+00> : vector<8x128xf32>
    %339 = tpu.matmul %331, %14, %cst_132 {dimension_numbers = #tpu.dot_dimension_numbers<[1], [0], [0], [1], [0, 0, 1, 1], [], []>} : vector<8x32xf32>, vector<32x128xf32>, vector<8x128xf32> -> vector<8x128xf32>
    %340 = arith.addf %338, %339 : vector<8x128xf32>
    %341 = vector.extract_strided_slice %340 {offsets = [0, 0], sizes = [8, 32], strides = [1, 1]} : vector<8x128xf32> to vector<8x32xf32>
    %cst_133 = arith.constant 0.000000e+00 : f32
    %342 = vector.broadcast %cst_133 : f32 to vector<8x32xf32>
    %343 = arith.subf %342, %341 : vector<8x32xf32>
    %344 = math.exp %343 : vector<8x32xf32>
    %cst_134 = arith.constant 1.000000e+00 : f32
    %345 = vector.broadcast %cst_134 : f32 to vector<8x32xf32>
    %346 = arith.addf %345, %344 : vector<8x32xf32>
    %cst_135 = arith.constant 1.000000e+00 : f32
    %347 = vector.broadcast %cst_135 : f32 to vector<8x32xf32>
    %348 = arith.divf %347, %346 : vector<8x32xf32>
    %349 = vector.extract_strided_slice %340 {offsets = [0, 32], sizes = [8, 32], strides = [1, 1]} : vector<8x128xf32> to vector<8x32xf32>
    %cst_136 = arith.constant 0.000000e+00 : f32
    %350 = vector.broadcast %cst_136 : f32 to vector<8x32xf32>
    %351 = arith.subf %350, %349 : vector<8x32xf32>
    %352 = math.exp %351 : vector<8x32xf32>
    %cst_137 = arith.constant 1.000000e+00 : f32
    %353 = vector.broadcast %cst_137 : f32 to vector<8x32xf32>
    %354 = arith.addf %353, %352 : vector<8x32xf32>
    %cst_138 = arith.constant 1.000000e+00 : f32
    %355 = vector.broadcast %cst_138 : f32 to vector<8x32xf32>
    %356 = arith.divf %355, %354 : vector<8x32xf32>
    %357 = vector.extract_strided_slice %340 {offsets = [0, 64], sizes = [8, 32], strides = [1, 1]} : vector<8x128xf32> to vector<8x32xf32>
    %358 = math.tanh %357 : vector<8x32xf32>
    %359 = vector.extract_strided_slice %340 {offsets = [0, 96], sizes = [8, 32], strides = [1, 1]} : vector<8x128xf32> to vector<8x32xf32>
    %cst_139 = arith.constant 0.000000e+00 : f32
    %360 = vector.broadcast %cst_139 : f32 to vector<8x32xf32>
    %361 = arith.subf %360, %359 : vector<8x32xf32>
    %362 = math.exp %361 : vector<8x32xf32>
    %cst_140 = arith.constant 1.000000e+00 : f32
    %363 = vector.broadcast %cst_140 : f32 to vector<8x32xf32>
    %364 = arith.addf %363, %362 : vector<8x32xf32>
    %cst_141 = arith.constant 1.000000e+00 : f32
    %365 = vector.broadcast %cst_141 : f32 to vector<8x32xf32>
    %366 = arith.divf %365, %364 : vector<8x32xf32>
    %367 = arith.mulf %356, %329 : vector<8x32xf32>
    %368 = arith.mulf %348, %358 : vector<8x32xf32>
    %369 = arith.addf %367, %368 : vector<8x32xf32>
    %370 = math.tanh %369 : vector<8x32xf32>
    %371 = arith.mulf %366, %370 : vector<8x32xf32>
    %372 = arith.index_cast %c8_i32 : i32 to index
    %c0_142 = arith.constant 0 : index
    %c0_143 = arith.constant 0 : index
    %373 = vector.load %arg11[%372, %c0_142, %c0_143] : memref<12x8x32xf32, #tpu.memory_space<vmem>>, vector<1x8x32xf32>
    %374 = vector.shape_cast %373 : vector<1x8x32xf32> to vector<8x32xf32>
    %375 = vector.shape_cast %371 : vector<8x32xf32> to vector<1x8x32xf32>
    tpu.vector_store %arg11[%372, %c0_142, %c0_143], %375 {strides = array<i32>} : memref<12x8x32xf32, #tpu.memory_space<vmem>>, vector<1x8x32xf32>,
    %c9_i32 = arith.constant 9 : i32
    %376 = arith.index_cast %c9_i32 : i32 to index
    %c0_144 = arith.constant 0 : index
    %c0_145 = arith.constant 0 : index
    %377 = vector.load %arg10[%376, %c0_144, %c0_145] : memref<12x8x128xf32, #tpu.memory_space<vmem>>, vector<1x8x128xf32>
    %378 = vector.shape_cast %377 : vector<1x8x128xf32> to vector<8x128xf32>
    %cst_146 = arith.constant dense<0.000000e+00> : vector<8x128xf32>
    %379 = tpu.matmul %371, %14, %cst_146 {dimension_numbers = #tpu.dot_dimension_numbers<[1], [0], [0], [1], [0, 0, 1, 1], [], []>} : vector<8x32xf32>, vector<32x128xf32>, vector<8x128xf32> -> vector<8x128xf32>
    %380 = arith.addf %378, %379 : vector<8x128xf32>
    %381 = vector.extract_strided_slice %380 {offsets = [0, 0], sizes = [8, 32], strides = [1, 1]} : vector<8x128xf32> to vector<8x32xf32>
    %cst_147 = arith.constant 0.000000e+00 : f32
    %382 = vector.broadcast %cst_147 : f32 to vector<8x32xf32>
    %383 = arith.subf %382, %381 : vector<8x32xf32>
    %384 = math.exp %383 : vector<8x32xf32>
    %cst_148 = arith.constant 1.000000e+00 : f32
    %385 = vector.broadcast %cst_148 : f32 to vector<8x32xf32>
    %386 = arith.addf %385, %384 : vector<8x32xf32>
    %cst_149 = arith.constant 1.000000e+00 : f32
    %387 = vector.broadcast %cst_149 : f32 to vector<8x32xf32>
    %388 = arith.divf %387, %386 : vector<8x32xf32>
    %389 = vector.extract_strided_slice %380 {offsets = [0, 32], sizes = [8, 32], strides = [1, 1]} : vector<8x128xf32> to vector<8x32xf32>
    %cst_150 = arith.constant 0.000000e+00 : f32
    %390 = vector.broadcast %cst_150 : f32 to vector<8x32xf32>
    %391 = arith.subf %390, %389 : vector<8x32xf32>
    %392 = math.exp %391 : vector<8x32xf32>
    %cst_151 = arith.constant 1.000000e+00 : f32
    %393 = vector.broadcast %cst_151 : f32 to vector<8x32xf32>
    %394 = arith.addf %393, %392 : vector<8x32xf32>
    %cst_152 = arith.constant 1.000000e+00 : f32
    %395 = vector.broadcast %cst_152 : f32 to vector<8x32xf32>
    %396 = arith.divf %395, %394 : vector<8x32xf32>
    %397 = vector.extract_strided_slice %380 {offsets = [0, 64], sizes = [8, 32], strides = [1, 1]} : vector<8x128xf32> to vector<8x32xf32>
    %398 = math.tanh %397 : vector<8x32xf32>
    %399 = vector.extract_strided_slice %380 {offsets = [0, 96], sizes = [8, 32], strides = [1, 1]} : vector<8x128xf32> to vector<8x32xf32>
    %cst_153 = arith.constant 0.000000e+00 : f32
    %400 = vector.broadcast %cst_153 : f32 to vector<8x32xf32>
    %401 = arith.subf %400, %399 : vector<8x32xf32>
    %402 = math.exp %401 : vector<8x32xf32>
    %cst_154 = arith.constant 1.000000e+00 : f32
    %403 = vector.broadcast %cst_154 : f32 to vector<8x32xf32>
    %404 = arith.addf %403, %402 : vector<8x32xf32>
    %cst_155 = arith.constant 1.000000e+00 : f32
    %405 = vector.broadcast %cst_155 : f32 to vector<8x32xf32>
    %406 = arith.divf %405, %404 : vector<8x32xf32>
    %407 = arith.mulf %396, %369 : vector<8x32xf32>
    %408 = arith.mulf %388, %398 : vector<8x32xf32>
    %409 = arith.addf %407, %408 : vector<8x32xf32>
    %410 = math.tanh %409 : vector<8x32xf32>
    %411 = arith.mulf %406, %410 : vector<8x32xf32>
    %412 = arith.index_cast %c9_i32 : i32 to index
    %c0_156 = arith.constant 0 : index
    %c0_157 = arith.constant 0 : index
    %413 = vector.load %arg11[%412, %c0_156, %c0_157] : memref<12x8x32xf32, #tpu.memory_space<vmem>>, vector<1x8x32xf32>
    %414 = vector.shape_cast %413 : vector<1x8x32xf32> to vector<8x32xf32>
    %415 = vector.shape_cast %411 : vector<8x32xf32> to vector<1x8x32xf32>
    tpu.vector_store %arg11[%412, %c0_156, %c0_157], %415 {strides = array<i32>} : memref<12x8x32xf32, #tpu.memory_space<vmem>>, vector<1x8x32xf32>,
    %c10_i32 = arith.constant 10 : i32
    %416 = arith.index_cast %c10_i32 : i32 to index
    %c0_158 = arith.constant 0 : index
    %c0_159 = arith.constant 0 : index
    %417 = vector.load %arg10[%416, %c0_158, %c0_159] : memref<12x8x128xf32, #tpu.memory_space<vmem>>, vector<1x8x128xf32>
    %418 = vector.shape_cast %417 : vector<1x8x128xf32> to vector<8x128xf32>
    %cst_160 = arith.constant dense<0.000000e+00> : vector<8x128xf32>
    %419 = tpu.matmul %411, %14, %cst_160 {dimension_numbers = #tpu.dot_dimension_numbers<[1], [0], [0], [1], [0, 0, 1, 1], [], []>} : vector<8x32xf32>, vector<32x128xf32>, vector<8x128xf32> -> vector<8x128xf32>
    %420 = arith.addf %418, %419 : vector<8x128xf32>
    %421 = vector.extract_strided_slice %420 {offsets = [0, 0], sizes = [8, 32], strides = [1, 1]} : vector<8x128xf32> to vector<8x32xf32>
    %cst_161 = arith.constant 0.000000e+00 : f32
    %422 = vector.broadcast %cst_161 : f32 to vector<8x32xf32>
    %423 = arith.subf %422, %421 : vector<8x32xf32>
    %424 = math.exp %423 : vector<8x32xf32>
    %cst_162 = arith.constant 1.000000e+00 : f32
    %425 = vector.broadcast %cst_162 : f32 to vector<8x32xf32>
    %426 = arith.addf %425, %424 : vector<8x32xf32>
    %cst_163 = arith.constant 1.000000e+00 : f32
    %427 = vector.broadcast %cst_163 : f32 to vector<8x32xf32>
    %428 = arith.divf %427, %426 : vector<8x32xf32>
    %429 = vector.extract_strided_slice %420 {offsets = [0, 32], sizes = [8, 32], strides = [1, 1]} : vector<8x128xf32> to vector<8x32xf32>
    %cst_164 = arith.constant 0.000000e+00 : f32
    %430 = vector.broadcast %cst_164 : f32 to vector<8x32xf32>
    %431 = arith.subf %430, %429 : vector<8x32xf32>
    %432 = math.exp %431 : vector<8x32xf32>
    %cst_165 = arith.constant 1.000000e+00 : f32
    %433 = vector.broadcast %cst_165 : f32 to vector<8x32xf32>
    %434 = arith.addf %433, %432 : vector<8x32xf32>
    %cst_166 = arith.constant 1.000000e+00 : f32
    %435 = vector.broadcast %cst_166 : f32 to vector<8x32xf32>
    %436 = arith.divf %435, %434 : vector<8x32xf32>
    %437 = vector.extract_strided_slice %420 {offsets = [0, 64], sizes = [8, 32], strides = [1, 1]} : vector<8x128xf32> to vector<8x32xf32>
    %438 = math.tanh %437 : vector<8x32xf32>
    %439 = vector.extract_strided_slice %420 {offsets = [0, 96], sizes = [8, 32], strides = [1, 1]} : vector<8x128xf32> to vector<8x32xf32>
    %cst_167 = arith.constant 0.000000e+00 : f32
    %440 = vector.broadcast %cst_167 : f32 to vector<8x32xf32>
    %441 = arith.subf %440, %439 : vector<8x32xf32>
    %442 = math.exp %441 : vector<8x32xf32>
    %cst_168 = arith.constant 1.000000e+00 : f32
    %443 = vector.broadcast %cst_168 : f32 to vector<8x32xf32>
    %444 = arith.addf %443, %442 : vector<8x32xf32>
    %cst_169 = arith.constant 1.000000e+00 : f32
    %445 = vector.broadcast %cst_169 : f32 to vector<8x32xf32>
    %446 = arith.divf %445, %444 : vector<8x32xf32>
    %447 = arith.mulf %436, %409 : vector<8x32xf32>
    %448 = arith.mulf %428, %438 : vector<8x32xf32>
    %449 = arith.addf %447, %448 : vector<8x32xf32>
    %450 = math.tanh %449 : vector<8x32xf32>
    %451 = arith.mulf %446, %450 : vector<8x32xf32>
    %452 = arith.index_cast %c10_i32 : i32 to index
    %c0_170 = arith.constant 0 : index
    %c0_171 = arith.constant 0 : index
    %453 = vector.load %arg11[%452, %c0_170, %c0_171] : memref<12x8x32xf32, #tpu.memory_space<vmem>>, vector<1x8x32xf32>
    %454 = vector.shape_cast %453 : vector<1x8x32xf32> to vector<8x32xf32>
    %455 = vector.shape_cast %451 : vector<8x32xf32> to vector<1x8x32xf32>
    tpu.vector_store %arg11[%452, %c0_170, %c0_171], %455 {strides = array<i32>} : memref<12x8x32xf32, #tpu.memory_space<vmem>>, vector<1x8x32xf32>,
    %c11_i32 = arith.constant 11 : i32
    %456 = arith.index_cast %c11_i32 : i32 to index
    %c0_172 = arith.constant 0 : index
    %c0_173 = arith.constant 0 : index
    %457 = vector.load %arg10[%456, %c0_172, %c0_173] : memref<12x8x128xf32, #tpu.memory_space<vmem>>, vector<1x8x128xf32>
    %458 = vector.shape_cast %457 : vector<1x8x128xf32> to vector<8x128xf32>
    %cst_174 = arith.constant dense<0.000000e+00> : vector<8x128xf32>
    %459 = tpu.matmul %451, %14, %cst_174 {dimension_numbers = #tpu.dot_dimension_numbers<[1], [0], [0], [1], [0, 0, 1, 1], [], []>} : vector<8x32xf32>, vector<32x128xf32>, vector<8x128xf32> -> vector<8x128xf32>
    %460 = arith.addf %458, %459 : vector<8x128xf32>
    %461 = vector.extract_strided_slice %460 {offsets = [0, 0], sizes = [8, 32], strides = [1, 1]} : vector<8x128xf32> to vector<8x32xf32>
    %cst_175 = arith.constant 0.000000e+00 : f32
    %462 = vector.broadcast %cst_175 : f32 to vector<8x32xf32>
    %463 = arith.subf %462, %461 : vector<8x32xf32>
    %464 = math.exp %463 : vector<8x32xf32>
    %cst_176 = arith.constant 1.000000e+00 : f32
    %465 = vector.broadcast %cst_176 : f32 to vector<8x32xf32>
    %466 = arith.addf %465, %464 : vector<8x32xf32>
    %cst_177 = arith.constant 1.000000e+00 : f32
    %467 = vector.broadcast %cst_177 : f32 to vector<8x32xf32>
    %468 = arith.divf %467, %466 : vector<8x32xf32>
    %469 = vector.extract_strided_slice %460 {offsets = [0, 32], sizes = [8, 32], strides = [1, 1]} : vector<8x128xf32> to vector<8x32xf32>
    %cst_178 = arith.constant 0.000000e+00 : f32
    %470 = vector.broadcast %cst_178 : f32 to vector<8x32xf32>
    %471 = arith.subf %470, %469 : vector<8x32xf32>
    %472 = math.exp %471 : vector<8x32xf32>
    %cst_179 = arith.constant 1.000000e+00 : f32
    %473 = vector.broadcast %cst_179 : f32 to vector<8x32xf32>
    %474 = arith.addf %473, %472 : vector<8x32xf32>
    %cst_180 = arith.constant 1.000000e+00 : f32
    %475 = vector.broadcast %cst_180 : f32 to vector<8x32xf32>
    %476 = arith.divf %475, %474 : vector<8x32xf32>
    %477 = vector.extract_strided_slice %460 {offsets = [0, 64], sizes = [8, 32], strides = [1, 1]} : vector<8x128xf32> to vector<8x32xf32>
    %478 = math.tanh %477 : vector<8x32xf32>
    %479 = vector.extract_strided_slice %460 {offsets = [0, 96], sizes = [8, 32], strides = [1, 1]} : vector<8x128xf32> to vector<8x32xf32>
    %cst_181 = arith.constant 0.000000e+00 : f32
    %480 = vector.broadcast %cst_181 : f32 to vector<8x32xf32>
    %481 = arith.subf %480, %479 : vector<8x32xf32>
    %482 = math.exp %481 : vector<8x32xf32>
    %cst_182 = arith.constant 1.000000e+00 : f32
    %483 = vector.broadcast %cst_182 : f32 to vector<8x32xf32>
    %484 = arith.addf %483, %482 : vector<8x32xf32>
    %cst_183 = arith.constant 1.000000e+00 : f32
    %485 = vector.broadcast %cst_183 : f32 to vector<8x32xf32>
    %486 = arith.divf %485, %484 : vector<8x32xf32>
    %487 = arith.mulf %476, %449 : vector<8x32xf32>
    %488 = arith.mulf %468, %478 : vector<8x32xf32>
    %489 = arith.addf %487, %488 : vector<8x32xf32>
    %490 = math.tanh %489 : vector<8x32xf32>
    %491 = arith.mulf %486, %490 : vector<8x32xf32>
    %492 = arith.index_cast %c11_i32 : i32 to index
    %c0_184 = arith.constant 0 : index
    %c0_185 = arith.constant 0 : index
    %493 = vector.load %arg11[%492, %c0_184, %c0_185] : memref<12x8x32xf32, #tpu.memory_space<vmem>>, vector<1x8x32xf32>
    %494 = vector.shape_cast %493 : vector<1x8x32xf32> to vector<8x32xf32>
    %495 = vector.shape_cast %491 : vector<8x32xf32> to vector<1x8x32xf32>
    tpu.vector_store %arg11[%492, %c0_184, %c0_185], %495 {strides = array<i32>} : memref<12x8x32xf32, #tpu.memory_space<vmem>>, vector<1x8x32xf32>,
    %c12_i32 = arith.constant 12 : i32
    %c0_186 = arith.constant 0 : index
    %c0_187 = arith.constant 0 : index
    %c0_188 = arith.constant 0 : index
    %496 = vector.load %arg11[%c0_186, %c0_187, %c0_188] : memref<12x8x32xf32, #tpu.memory_space<vmem>>, vector<12x8x32xf32>
    %497 = vector.shape_cast %496 : vector<12x8x32xf32> to vector<96x32xf32>
    %c0_189 = arith.constant 0 : index
    %c0_190 = arith.constant 0 : index
    %498 = vector.load %arg6[%c0_189, %c0_190] : memref<32x16xf32, #tpu.memory_space<vmem>>, vector<32x16xf32>
    %cst_191 = arith.constant dense<0.000000e+00> : vector<96x16xf32>
    %499 = tpu.matmul %497, %498, %cst_191 {dimension_numbers = #tpu.dot_dimension_numbers<[1], [0], [0], [1], [0, 0, 1, 1], [], []>} : vector<96x32xf32>, vector<32x16xf32>, vector<96x16xf32> -> vector<96x16xf32>
    %c0_192 = arith.constant 0 : index
    %c0_193 = arith.constant 0 : index
    %500 = vector.load %arg8[%c0_192, %c0_193] : memref<1x16xf32, #tpu.memory_space<vmem>>, vector<1x16xf32>
    %501 = vector.broadcast %500 : vector<1x16xf32> to vector<96x16xf32>
    %502 = arith.addf %499, %501 : vector<96x16xf32>
    %503 = vector.shape_cast %502 : vector<96x16xf32> to vector<12x8x16xf32>
    %c0_194 = arith.constant 0 : index
    %c0_195 = arith.constant 0 : index
    %c0_196 = arith.constant 0 : index
    %504 = vector.load %arg12[%c0_194, %c0_195, %c0_196] : memref<12x8x16xf32, #tpu.memory_space<vmem>>, vector<12x8x16xf32>
    tpu.vector_store %arg12[%c0_194, %c0_195, %c0_196], %503 {strides = array<i32>} : memref<12x8x16xf32, #tpu.memory_space<vmem>>, vector<12x8x16xf32>,
    %c0_197 = arith.constant 0 : index
    %c0_198 = arith.constant 0 : index
    %505 = vector.load %arg7[%c0_197, %c0_198] : memref<4x16xf32, #tpu.memory_space<vmem>>, vector<4x16xf32>
    %cst_199 = arith.constant 0.000000e+00 : f32
    %506 = vector.broadcast %cst_199 : f32 to vector<8x4xf32>
    %c0_i32_200 = arith.constant 0 : i32
    %507 = arith.index_cast %c0_i32_200 : i32 to index
    %c0_201 = arith.constant 0 : index
    %c0_202 = arith.constant 0 : index
    %508 = vector.load %arg12[%507, %c0_201, %c0_202] : memref<12x8x16xf32, #tpu.memory_space<vmem>>, vector<1x8x16xf32>
    %509 = vector.shape_cast %508 : vector<1x8x16xf32> to vector<8x16xf32>
    %cst_203 = arith.constant dense<0.000000e+00> : vector<8x16xf32>
    %510 = tpu.matmul %506, %505, %cst_203 {dimension_numbers = #tpu.dot_dimension_numbers<[1], [0], [0], [1], [0, 0, 1, 1], [], []>} : vector<8x4xf32>, vector<4x16xf32>, vector<8x16xf32> -> vector<8x16xf32>
    %511 = arith.addf %509, %510 : vector<8x16xf32>
    %512 = vector.extract_strided_slice %511 {offsets = [0, 0], sizes = [8, 4], strides = [1, 1]} : vector<8x16xf32> to vector<8x4xf32>
    %cst_204 = arith.constant 0.000000e+00 : f32
    %513 = vector.broadcast %cst_204 : f32 to vector<8x4xf32>
    %514 = arith.subf %513, %512 : vector<8x4xf32>
    %515 = math.exp %514 : vector<8x4xf32>
    %cst_205 = arith.constant 1.000000e+00 : f32
    %516 = vector.broadcast %cst_205 : f32 to vector<8x4xf32>
    %517 = arith.addf %516, %515 : vector<8x4xf32>
    %cst_206 = arith.constant 1.000000e+00 : f32
    %518 = vector.broadcast %cst_206 : f32 to vector<8x4xf32>
    %519 = arith.divf %518, %517 : vector<8x4xf32>
    %520 = vector.extract_strided_slice %511 {offsets = [0, 4], sizes = [8, 4], strides = [1, 1]} : vector<8x16xf32> to vector<8x4xf32>
    %cst_207 = arith.constant 0.000000e+00 : f32
    %521 = vector.broadcast %cst_207 : f32 to vector<8x4xf32>
    %522 = arith.subf %521, %520 : vector<8x4xf32>
    %523 = math.exp %522 : vector<8x4xf32>
    %cst_208 = arith.constant 1.000000e+00 : f32
    %524 = vector.broadcast %cst_208 : f32 to vector<8x4xf32>
    %525 = arith.addf %524, %523 : vector<8x4xf32>
    %cst_209 = arith.constant 1.000000e+00 : f32
    %526 = vector.broadcast %cst_209 : f32 to vector<8x4xf32>
    %527 = arith.divf %526, %525 : vector<8x4xf32>
    %528 = vector.extract_strided_slice %511 {offsets = [0, 8], sizes = [8, 4], strides = [1, 1]} : vector<8x16xf32> to vector<8x4xf32>
    %529 = math.tanh %528 : vector<8x4xf32>
    %530 = vector.extract_strided_slice %511 {offsets = [0, 12], sizes = [8, 4], strides = [1, 1]} : vector<8x16xf32> to vector<8x4xf32>
    %cst_210 = arith.constant 0.000000e+00 : f32
    %531 = vector.broadcast %cst_210 : f32 to vector<8x4xf32>
    %532 = arith.subf %531, %530 : vector<8x4xf32>
    %533 = math.exp %532 : vector<8x4xf32>
    %cst_211 = arith.constant 1.000000e+00 : f32
    %534 = vector.broadcast %cst_211 : f32 to vector<8x4xf32>
    %535 = arith.addf %534, %533 : vector<8x4xf32>
    %cst_212 = arith.constant 1.000000e+00 : f32
    %536 = vector.broadcast %cst_212 : f32 to vector<8x4xf32>
    %537 = arith.divf %536, %535 : vector<8x4xf32>
    %538 = arith.mulf %527, %506 : vector<8x4xf32>
    %539 = arith.mulf %519, %529 : vector<8x4xf32>
    %540 = arith.addf %538, %539 : vector<8x4xf32>
    %541 = math.tanh %540 : vector<8x4xf32>
    %542 = arith.mulf %537, %541 : vector<8x4xf32>
    %543 = arith.index_cast %c0_i32_200 : i32 to index
    %c0_213 = arith.constant 0 : index
    %c0_214 = arith.constant 0 : index
    %544 = vector.load %arg9[%543, %c0_213, %c0_214] : memref<12x8x4xf32, #tpu.memory_space<vmem>>, vector<1x8x4xf32>
    %545 = vector.shape_cast %544 : vector<1x8x4xf32> to vector<8x4xf32>
    %546 = vector.shape_cast %542 : vector<8x4xf32> to vector<1x8x4xf32>
    tpu.vector_store %arg9[%543, %c0_213, %c0_214], %546 {strides = array<i32>} : memref<12x8x4xf32, #tpu.memory_space<vmem>>, vector<1x8x4xf32>,
    %c1_i32_215 = arith.constant 1 : i32
    %547 = arith.index_cast %c1_i32_215 : i32 to index
    %c0_216 = arith.constant 0 : index
    %c0_217 = arith.constant 0 : index
    %548 = vector.load %arg12[%547, %c0_216, %c0_217] : memref<12x8x16xf32, #tpu.memory_space<vmem>>, vector<1x8x16xf32>
    %549 = vector.shape_cast %548 : vector<1x8x16xf32> to vector<8x16xf32>
    %cst_218 = arith.constant dense<0.000000e+00> : vector<8x16xf32>
    %550 = tpu.matmul %542, %505, %cst_218 {dimension_numbers = #tpu.dot_dimension_numbers<[1], [0], [0], [1], [0, 0, 1, 1], [], []>} : vector<8x4xf32>, vector<4x16xf32>, vector<8x16xf32> -> vector<8x16xf32>
    %551 = arith.addf %549, %550 : vector<8x16xf32>
    %552 = vector.extract_strided_slice %551 {offsets = [0, 0], sizes = [8, 4], strides = [1, 1]} : vector<8x16xf32> to vector<8x4xf32>
    %cst_219 = arith.constant 0.000000e+00 : f32
    %553 = vector.broadcast %cst_219 : f32 to vector<8x4xf32>
    %554 = arith.subf %553, %552 : vector<8x4xf32>
    %555 = math.exp %554 : vector<8x4xf32>
    %cst_220 = arith.constant 1.000000e+00 : f32
    %556 = vector.broadcast %cst_220 : f32 to vector<8x4xf32>
    %557 = arith.addf %556, %555 : vector<8x4xf32>
    %cst_221 = arith.constant 1.000000e+00 : f32
    %558 = vector.broadcast %cst_221 : f32 to vector<8x4xf32>
    %559 = arith.divf %558, %557 : vector<8x4xf32>
    %560 = vector.extract_strided_slice %551 {offsets = [0, 4], sizes = [8, 4], strides = [1, 1]} : vector<8x16xf32> to vector<8x4xf32>
    %cst_222 = arith.constant 0.000000e+00 : f32
    %561 = vector.broadcast %cst_222 : f32 to vector<8x4xf32>
    %562 = arith.subf %561, %560 : vector<8x4xf32>
    %563 = math.exp %562 : vector<8x4xf32>
    %cst_223 = arith.constant 1.000000e+00 : f32
    %564 = vector.broadcast %cst_223 : f32 to vector<8x4xf32>
    %565 = arith.addf %564, %563 : vector<8x4xf32>
    %cst_224 = arith.constant 1.000000e+00 : f32
    %566 = vector.broadcast %cst_224 : f32 to vector<8x4xf32>
    %567 = arith.divf %566, %565 : vector<8x4xf32>
    %568 = vector.extract_strided_slice %551 {offsets = [0, 8], sizes = [8, 4], strides = [1, 1]} : vector<8x16xf32> to vector<8x4xf32>
    %569 = math.tanh %568 : vector<8x4xf32>
    %570 = vector.extract_strided_slice %551 {offsets = [0, 12], sizes = [8, 4], strides = [1, 1]} : vector<8x16xf32> to vector<8x4xf32>
    %cst_225 = arith.constant 0.000000e+00 : f32
    %571 = vector.broadcast %cst_225 : f32 to vector<8x4xf32>
    %572 = arith.subf %571, %570 : vector<8x4xf32>
    %573 = math.exp %572 : vector<8x4xf32>
    %cst_226 = arith.constant 1.000000e+00 : f32
    %574 = vector.broadcast %cst_226 : f32 to vector<8x4xf32>
    %575 = arith.addf %574, %573 : vector<8x4xf32>
    %cst_227 = arith.constant 1.000000e+00 : f32
    %576 = vector.broadcast %cst_227 : f32 to vector<8x4xf32>
    %577 = arith.divf %576, %575 : vector<8x4xf32>
    %578 = arith.mulf %567, %540 : vector<8x4xf32>
    %579 = arith.mulf %559, %569 : vector<8x4xf32>
    %580 = arith.addf %578, %579 : vector<8x4xf32>
    %581 = math.tanh %580 : vector<8x4xf32>
    %582 = arith.mulf %577, %581 : vector<8x4xf32>
    %583 = arith.index_cast %c1_i32_215 : i32 to index
    %c0_228 = arith.constant 0 : index
    %c0_229 = arith.constant 0 : index
    %584 = vector.load %arg9[%583, %c0_228, %c0_229] : memref<12x8x4xf32, #tpu.memory_space<vmem>>, vector<1x8x4xf32>
    %585 = vector.shape_cast %584 : vector<1x8x4xf32> to vector<8x4xf32>
    %586 = vector.shape_cast %582 : vector<8x4xf32> to vector<1x8x4xf32>
    tpu.vector_store %arg9[%583, %c0_228, %c0_229], %586 {strides = array<i32>} : memref<12x8x4xf32, #tpu.memory_space<vmem>>, vector<1x8x4xf32>,
    %c2_i32_230 = arith.constant 2 : i32
    %587 = arith.index_cast %c2_i32_230 : i32 to index
    %c0_231 = arith.constant 0 : index
    %c0_232 = arith.constant 0 : index
    %588 = vector.load %arg12[%587, %c0_231, %c0_232] : memref<12x8x16xf32, #tpu.memory_space<vmem>>, vector<1x8x16xf32>
    %589 = vector.shape_cast %588 : vector<1x8x16xf32> to vector<8x16xf32>
    %cst_233 = arith.constant dense<0.000000e+00> : vector<8x16xf32>
    %590 = tpu.matmul %582, %505, %cst_233 {dimension_numbers = #tpu.dot_dimension_numbers<[1], [0], [0], [1], [0, 0, 1, 1], [], []>} : vector<8x4xf32>, vector<4x16xf32>, vector<8x16xf32> -> vector<8x16xf32>
    %591 = arith.addf %589, %590 : vector<8x16xf32>
    %592 = vector.extract_strided_slice %591 {offsets = [0, 0], sizes = [8, 4], strides = [1, 1]} : vector<8x16xf32> to vector<8x4xf32>
    %cst_234 = arith.constant 0.000000e+00 : f32
    %593 = vector.broadcast %cst_234 : f32 to vector<8x4xf32>
    %594 = arith.subf %593, %592 : vector<8x4xf32>
    %595 = math.exp %594 : vector<8x4xf32>
    %cst_235 = arith.constant 1.000000e+00 : f32
    %596 = vector.broadcast %cst_235 : f32 to vector<8x4xf32>
    %597 = arith.addf %596, %595 : vector<8x4xf32>
    %cst_236 = arith.constant 1.000000e+00 : f32
    %598 = vector.broadcast %cst_236 : f32 to vector<8x4xf32>
    %599 = arith.divf %598, %597 : vector<8x4xf32>
    %600 = vector.extract_strided_slice %591 {offsets = [0, 4], sizes = [8, 4], strides = [1, 1]} : vector<8x16xf32> to vector<8x4xf32>
    %cst_237 = arith.constant 0.000000e+00 : f32
    %601 = vector.broadcast %cst_237 : f32 to vector<8x4xf32>
    %602 = arith.subf %601, %600 : vector<8x4xf32>
    %603 = math.exp %602 : vector<8x4xf32>
    %cst_238 = arith.constant 1.000000e+00 : f32
    %604 = vector.broadcast %cst_238 : f32 to vector<8x4xf32>
    %605 = arith.addf %604, %603 : vector<8x4xf32>
    %cst_239 = arith.constant 1.000000e+00 : f32
    %606 = vector.broadcast %cst_239 : f32 to vector<8x4xf32>
    %607 = arith.divf %606, %605 : vector<8x4xf32>
    %608 = vector.extract_strided_slice %591 {offsets = [0, 8], sizes = [8, 4], strides = [1, 1]} : vector<8x16xf32> to vector<8x4xf32>
    %609 = math.tanh %608 : vector<8x4xf32>
    %610 = vector.extract_strided_slice %591 {offsets = [0, 12], sizes = [8, 4], strides = [1, 1]} : vector<8x16xf32> to vector<8x4xf32>
    %cst_240 = arith.constant 0.000000e+00 : f32
    %611 = vector.broadcast %cst_240 : f32 to vector<8x4xf32>
    %612 = arith.subf %611, %610 : vector<8x4xf32>
    %613 = math.exp %612 : vector<8x4xf32>
    %cst_241 = arith.constant 1.000000e+00 : f32
    %614 = vector.broadcast %cst_241 : f32 to vector<8x4xf32>
    %615 = arith.addf %614, %613 : vector<8x4xf32>
    %cst_242 = arith.constant 1.000000e+00 : f32
    %616 = vector.broadcast %cst_242 : f32 to vector<8x4xf32>
    %617 = arith.divf %616, %615 : vector<8x4xf32>
    %618 = arith.mulf %607, %580 : vector<8x4xf32>
    %619 = arith.mulf %599, %609 : vector<8x4xf32>
    %620 = arith.addf %618, %619 : vector<8x4xf32>
    %621 = math.tanh %620 : vector<8x4xf32>
    %622 = arith.mulf %617, %621 : vector<8x4xf32>
    %623 = arith.index_cast %c2_i32_230 : i32 to index
    %c0_243 = arith.constant 0 : index
    %c0_244 = arith.constant 0 : index
    %624 = vector.load %arg9[%623, %c0_243, %c0_244] : memref<12x8x4xf32, #tpu.memory_space<vmem>>, vector<1x8x4xf32>
    %625 = vector.shape_cast %624 : vector<1x8x4xf32> to vector<8x4xf32>
    %626 = vector.shape_cast %622 : vector<8x4xf32> to vector<1x8x4xf32>
    tpu.vector_store %arg9[%623, %c0_243, %c0_244], %626 {strides = array<i32>} : memref<12x8x4xf32, #tpu.memory_space<vmem>>, vector<1x8x4xf32>,
    %c3_i32_245 = arith.constant 3 : i32
    %627 = arith.index_cast %c3_i32_245 : i32 to index
    %c0_246 = arith.constant 0 : index
    %c0_247 = arith.constant 0 : index
    %628 = vector.load %arg12[%627, %c0_246, %c0_247] : memref<12x8x16xf32, #tpu.memory_space<vmem>>, vector<1x8x16xf32>
    %629 = vector.shape_cast %628 : vector<1x8x16xf32> to vector<8x16xf32>
    %cst_248 = arith.constant dense<0.000000e+00> : vector<8x16xf32>
    %630 = tpu.matmul %622, %505, %cst_248 {dimension_numbers = #tpu.dot_dimension_numbers<[1], [0], [0], [1], [0, 0, 1, 1], [], []>} : vector<8x4xf32>, vector<4x16xf32>, vector<8x16xf32> -> vector<8x16xf32>
    %631 = arith.addf %629, %630 : vector<8x16xf32>
    %632 = vector.extract_strided_slice %631 {offsets = [0, 0], sizes = [8, 4], strides = [1, 1]} : vector<8x16xf32> to vector<8x4xf32>
    %cst_249 = arith.constant 0.000000e+00 : f32
    %633 = vector.broadcast %cst_249 : f32 to vector<8x4xf32>
    %634 = arith.subf %633, %632 : vector<8x4xf32>
    %635 = math.exp %634 : vector<8x4xf32>
    %cst_250 = arith.constant 1.000000e+00 : f32
    %636 = vector.broadcast %cst_250 : f32 to vector<8x4xf32>
    %637 = arith.addf %636, %635 : vector<8x4xf32>
    %cst_251 = arith.constant 1.000000e+00 : f32
    %638 = vector.broadcast %cst_251 : f32 to vector<8x4xf32>
    %639 = arith.divf %638, %637 : vector<8x4xf32>
    %640 = vector.extract_strided_slice %631 {offsets = [0, 4], sizes = [8, 4], strides = [1, 1]} : vector<8x16xf32> to vector<8x4xf32>
    %cst_252 = arith.constant 0.000000e+00 : f32
    %641 = vector.broadcast %cst_252 : f32 to vector<8x4xf32>
    %642 = arith.subf %641, %640 : vector<8x4xf32>
    %643 = math.exp %642 : vector<8x4xf32>
    %cst_253 = arith.constant 1.000000e+00 : f32
    %644 = vector.broadcast %cst_253 : f32 to vector<8x4xf32>
    %645 = arith.addf %644, %643 : vector<8x4xf32>
    %cst_254 = arith.constant 1.000000e+00 : f32
    %646 = vector.broadcast %cst_254 : f32 to vector<8x4xf32>
    %647 = arith.divf %646, %645 : vector<8x4xf32>
    %648 = vector.extract_strided_slice %631 {offsets = [0, 8], sizes = [8, 4], strides = [1, 1]} : vector<8x16xf32> to vector<8x4xf32>
    %649 = math.tanh %648 : vector<8x4xf32>
    %650 = vector.extract_strided_slice %631 {offsets = [0, 12], sizes = [8, 4], strides = [1, 1]} : vector<8x16xf32> to vector<8x4xf32>
    %cst_255 = arith.constant 0.000000e+00 : f32
    %651 = vector.broadcast %cst_255 : f32 to vector<8x4xf32>
    %652 = arith.subf %651, %650 : vector<8x4xf32>
    %653 = math.exp %652 : vector<8x4xf32>
    %cst_256 = arith.constant 1.000000e+00 : f32
    %654 = vector.broadcast %cst_256 : f32 to vector<8x4xf32>
    %655 = arith.addf %654, %653 : vector<8x4xf32>
    %cst_257 = arith.constant 1.000000e+00 : f32
    %656 = vector.broadcast %cst_257 : f32 to vector<8x4xf32>
    %657 = arith.divf %656, %655 : vector<8x4xf32>
    %658 = arith.mulf %647, %620 : vector<8x4xf32>
    %659 = arith.mulf %639, %649 : vector<8x4xf32>
    %660 = arith.addf %658, %659 : vector<8x4xf32>
    %661 = math.tanh %660 : vector<8x4xf32>
    %662 = arith.mulf %657, %661 : vector<8x4xf32>
    %663 = arith.index_cast %c3_i32_245 : i32 to index
    %c0_258 = arith.constant 0 : index
    %c0_259 = arith.constant 0 : index
    %664 = vector.load %arg9[%663, %c0_258, %c0_259] : memref<12x8x4xf32, #tpu.memory_space<vmem>>, vector<1x8x4xf32>
    %665 = vector.shape_cast %664 : vector<1x8x4xf32> to vector<8x4xf32>
    %666 = vector.shape_cast %662 : vector<8x4xf32> to vector<1x8x4xf32>
    tpu.vector_store %arg9[%663, %c0_258, %c0_259], %666 {strides = array<i32>} : memref<12x8x4xf32, #tpu.memory_space<vmem>>, vector<1x8x4xf32>,
    %c4_i32_260 = arith.constant 4 : i32
    %667 = arith.index_cast %c4_i32_260 : i32 to index
    %c0_261 = arith.constant 0 : index
    %c0_262 = arith.constant 0 : index
    %668 = vector.load %arg12[%667, %c0_261, %c0_262] : memref<12x8x16xf32, #tpu.memory_space<vmem>>, vector<1x8x16xf32>
    %669 = vector.shape_cast %668 : vector<1x8x16xf32> to vector<8x16xf32>
    %cst_263 = arith.constant dense<0.000000e+00> : vector<8x16xf32>
    %670 = tpu.matmul %662, %505, %cst_263 {dimension_numbers = #tpu.dot_dimension_numbers<[1], [0], [0], [1], [0, 0, 1, 1], [], []>} : vector<8x4xf32>, vector<4x16xf32>, vector<8x16xf32> -> vector<8x16xf32>
    %671 = arith.addf %669, %670 : vector<8x16xf32>
    %672 = vector.extract_strided_slice %671 {offsets = [0, 0], sizes = [8, 4], strides = [1, 1]} : vector<8x16xf32> to vector<8x4xf32>
    %cst_264 = arith.constant 0.000000e+00 : f32
    %673 = vector.broadcast %cst_264 : f32 to vector<8x4xf32>
    %674 = arith.subf %673, %672 : vector<8x4xf32>
    %675 = math.exp %674 : vector<8x4xf32>
    %cst_265 = arith.constant 1.000000e+00 : f32
    %676 = vector.broadcast %cst_265 : f32 to vector<8x4xf32>
    %677 = arith.addf %676, %675 : vector<8x4xf32>
    %cst_266 = arith.constant 1.000000e+00 : f32
    %678 = vector.broadcast %cst_266 : f32 to vector<8x4xf32>
    %679 = arith.divf %678, %677 : vector<8x4xf32>
    %680 = vector.extract_strided_slice %671 {offsets = [0, 4], sizes = [8, 4], strides = [1, 1]} : vector<8x16xf32> to vector<8x4xf32>
    %cst_267 = arith.constant 0.000000e+00 : f32
    %681 = vector.broadcast %cst_267 : f32 to vector<8x4xf32>
    %682 = arith.subf %681, %680 : vector<8x4xf32>
    %683 = math.exp %682 : vector<8x4xf32>
    %cst_268 = arith.constant 1.000000e+00 : f32
    %684 = vector.broadcast %cst_268 : f32 to vector<8x4xf32>
    %685 = arith.addf %684, %683 : vector<8x4xf32>
    %cst_269 = arith.constant 1.000000e+00 : f32
    %686 = vector.broadcast %cst_269 : f32 to vector<8x4xf32>
    %687 = arith.divf %686, %685 : vector<8x4xf32>
    %688 = vector.extract_strided_slice %671 {offsets = [0, 8], sizes = [8, 4], strides = [1, 1]} : vector<8x16xf32> to vector<8x4xf32>
    %689 = math.tanh %688 : vector<8x4xf32>
    %690 = vector.extract_strided_slice %671 {offsets = [0, 12], sizes = [8, 4], strides = [1, 1]} : vector<8x16xf32> to vector<8x4xf32>
    %cst_270 = arith.constant 0.000000e+00 : f32
    %691 = vector.broadcast %cst_270 : f32 to vector<8x4xf32>
    %692 = arith.subf %691, %690 : vector<8x4xf32>
    %693 = math.exp %692 : vector<8x4xf32>
    %cst_271 = arith.constant 1.000000e+00 : f32
    %694 = vector.broadcast %cst_271 : f32 to vector<8x4xf32>
    %695 = arith.addf %694, %693 : vector<8x4xf32>
    %cst_272 = arith.constant 1.000000e+00 : f32
    %696 = vector.broadcast %cst_272 : f32 to vector<8x4xf32>
    %697 = arith.divf %696, %695 : vector<8x4xf32>
    %698 = arith.mulf %687, %660 : vector<8x4xf32>
    %699 = arith.mulf %679, %689 : vector<8x4xf32>
    %700 = arith.addf %698, %699 : vector<8x4xf32>
    %701 = math.tanh %700 : vector<8x4xf32>
    %702 = arith.mulf %697, %701 : vector<8x4xf32>
    %703 = arith.index_cast %c4_i32_260 : i32 to index
    %c0_273 = arith.constant 0 : index
    %c0_274 = arith.constant 0 : index
    %704 = vector.load %arg9[%703, %c0_273, %c0_274] : memref<12x8x4xf32, #tpu.memory_space<vmem>>, vector<1x8x4xf32>
    %705 = vector.shape_cast %704 : vector<1x8x4xf32> to vector<8x4xf32>
    %706 = vector.shape_cast %702 : vector<8x4xf32> to vector<1x8x4xf32>
    tpu.vector_store %arg9[%703, %c0_273, %c0_274], %706 {strides = array<i32>} : memref<12x8x4xf32, #tpu.memory_space<vmem>>, vector<1x8x4xf32>,
    %c5_i32_275 = arith.constant 5 : i32
    %707 = arith.index_cast %c5_i32_275 : i32 to index
    %c0_276 = arith.constant 0 : index
    %c0_277 = arith.constant 0 : index
    %708 = vector.load %arg12[%707, %c0_276, %c0_277] : memref<12x8x16xf32, #tpu.memory_space<vmem>>, vector<1x8x16xf32>
    %709 = vector.shape_cast %708 : vector<1x8x16xf32> to vector<8x16xf32>
    %cst_278 = arith.constant dense<0.000000e+00> : vector<8x16xf32>
    %710 = tpu.matmul %702, %505, %cst_278 {dimension_numbers = #tpu.dot_dimension_numbers<[1], [0], [0], [1], [0, 0, 1, 1], [], []>} : vector<8x4xf32>, vector<4x16xf32>, vector<8x16xf32> -> vector<8x16xf32>
    %711 = arith.addf %709, %710 : vector<8x16xf32>
    %712 = vector.extract_strided_slice %711 {offsets = [0, 0], sizes = [8, 4], strides = [1, 1]} : vector<8x16xf32> to vector<8x4xf32>
    %cst_279 = arith.constant 0.000000e+00 : f32
    %713 = vector.broadcast %cst_279 : f32 to vector<8x4xf32>
    %714 = arith.subf %713, %712 : vector<8x4xf32>
    %715 = math.exp %714 : vector<8x4xf32>
    %cst_280 = arith.constant 1.000000e+00 : f32
    %716 = vector.broadcast %cst_280 : f32 to vector<8x4xf32>
    %717 = arith.addf %716, %715 : vector<8x4xf32>
    %cst_281 = arith.constant 1.000000e+00 : f32
    %718 = vector.broadcast %cst_281 : f32 to vector<8x4xf32>
    %719 = arith.divf %718, %717 : vector<8x4xf32>
    %720 = vector.extract_strided_slice %711 {offsets = [0, 4], sizes = [8, 4], strides = [1, 1]} : vector<8x16xf32> to vector<8x4xf32>
    %cst_282 = arith.constant 0.000000e+00 : f32
    %721 = vector.broadcast %cst_282 : f32 to vector<8x4xf32>
    %722 = arith.subf %721, %720 : vector<8x4xf32>
    %723 = math.exp %722 : vector<8x4xf32>
    %cst_283 = arith.constant 1.000000e+00 : f32
    %724 = vector.broadcast %cst_283 : f32 to vector<8x4xf32>
    %725 = arith.addf %724, %723 : vector<8x4xf32>
    %cst_284 = arith.constant 1.000000e+00 : f32
    %726 = vector.broadcast %cst_284 : f32 to vector<8x4xf32>
    %727 = arith.divf %726, %725 : vector<8x4xf32>
    %728 = vector.extract_strided_slice %711 {offsets = [0, 8], sizes = [8, 4], strides = [1, 1]} : vector<8x16xf32> to vector<8x4xf32>
    %729 = math.tanh %728 : vector<8x4xf32>
    %730 = vector.extract_strided_slice %711 {offsets = [0, 12], sizes = [8, 4], strides = [1, 1]} : vector<8x16xf32> to vector<8x4xf32>
    %cst_285 = arith.constant 0.000000e+00 : f32
    %731 = vector.broadcast %cst_285 : f32 to vector<8x4xf32>
    %732 = arith.subf %731, %730 : vector<8x4xf32>
    %733 = math.exp %732 : vector<8x4xf32>
    %cst_286 = arith.constant 1.000000e+00 : f32
    %734 = vector.broadcast %cst_286 : f32 to vector<8x4xf32>
    %735 = arith.addf %734, %733 : vector<8x4xf32>
    %cst_287 = arith.constant 1.000000e+00 : f32
    %736 = vector.broadcast %cst_287 : f32 to vector<8x4xf32>
    %737 = arith.divf %736, %735 : vector<8x4xf32>
    %738 = arith.mulf %727, %700 : vector<8x4xf32>
    %739 = arith.mulf %719, %729 : vector<8x4xf32>
    %740 = arith.addf %738, %739 : vector<8x4xf32>
    %741 = math.tanh %740 : vector<8x4xf32>
    %742 = arith.mulf %737, %741 : vector<8x4xf32>
    %743 = arith.index_cast %c5_i32_275 : i32 to index
    %c0_288 = arith.constant 0 : index
    %c0_289 = arith.constant 0 : index
    %744 = vector.load %arg9[%743, %c0_288, %c0_289] : memref<12x8x4xf32, #tpu.memory_space<vmem>>, vector<1x8x4xf32>
    %745 = vector.shape_cast %744 : vector<1x8x4xf32> to vector<8x4xf32>
    %746 = vector.shape_cast %742 : vector<8x4xf32> to vector<1x8x4xf32>
    tpu.vector_store %arg9[%743, %c0_288, %c0_289], %746 {strides = array<i32>} : memref<12x8x4xf32, #tpu.memory_space<vmem>>, vector<1x8x4xf32>,
    %c6_i32_290 = arith.constant 6 : i32
    %747 = arith.index_cast %c6_i32_290 : i32 to index
    %c0_291 = arith.constant 0 : index
    %c0_292 = arith.constant 0 : index
    %748 = vector.load %arg12[%747, %c0_291, %c0_292] : memref<12x8x16xf32, #tpu.memory_space<vmem>>, vector<1x8x16xf32>
    %749 = vector.shape_cast %748 : vector<1x8x16xf32> to vector<8x16xf32>
    %cst_293 = arith.constant dense<0.000000e+00> : vector<8x16xf32>
    %750 = tpu.matmul %742, %505, %cst_293 {dimension_numbers = #tpu.dot_dimension_numbers<[1], [0], [0], [1], [0, 0, 1, 1], [], []>} : vector<8x4xf32>, vector<4x16xf32>, vector<8x16xf32> -> vector<8x16xf32>
    %751 = arith.addf %749, %750 : vector<8x16xf32>
    %752 = vector.extract_strided_slice %751 {offsets = [0, 0], sizes = [8, 4], strides = [1, 1]} : vector<8x16xf32> to vector<8x4xf32>
    %cst_294 = arith.constant 0.000000e+00 : f32
    %753 = vector.broadcast %cst_294 : f32 to vector<8x4xf32>
    %754 = arith.subf %753, %752 : vector<8x4xf32>
    %755 = math.exp %754 : vector<8x4xf32>
    %cst_295 = arith.constant 1.000000e+00 : f32
    %756 = vector.broadcast %cst_295 : f32 to vector<8x4xf32>
    %757 = arith.addf %756, %755 : vector<8x4xf32>
    %cst_296 = arith.constant 1.000000e+00 : f32
    %758 = vector.broadcast %cst_296 : f32 to vector<8x4xf32>
    %759 = arith.divf %758, %757 : vector<8x4xf32>
    %760 = vector.extract_strided_slice %751 {offsets = [0, 4], sizes = [8, 4], strides = [1, 1]} : vector<8x16xf32> to vector<8x4xf32>
    %cst_297 = arith.constant 0.000000e+00 : f32
    %761 = vector.broadcast %cst_297 : f32 to vector<8x4xf32>
    %762 = arith.subf %761, %760 : vector<8x4xf32>
    %763 = math.exp %762 : vector<8x4xf32>
    %cst_298 = arith.constant 1.000000e+00 : f32
    %764 = vector.broadcast %cst_298 : f32 to vector<8x4xf32>
    %765 = arith.addf %764, %763 : vector<8x4xf32>
    %cst_299 = arith.constant 1.000000e+00 : f32
    %766 = vector.broadcast %cst_299 : f32 to vector<8x4xf32>
    %767 = arith.divf %766, %765 : vector<8x4xf32>
    %768 = vector.extract_strided_slice %751 {offsets = [0, 8], sizes = [8, 4], strides = [1, 1]} : vector<8x16xf32> to vector<8x4xf32>
    %769 = math.tanh %768 : vector<8x4xf32>
    %770 = vector.extract_strided_slice %751 {offsets = [0, 12], sizes = [8, 4], strides = [1, 1]} : vector<8x16xf32> to vector<8x4xf32>
    %cst_300 = arith.constant 0.000000e+00 : f32
    %771 = vector.broadcast %cst_300 : f32 to vector<8x4xf32>
    %772 = arith.subf %771, %770 : vector<8x4xf32>
    %773 = math.exp %772 : vector<8x4xf32>
    %cst_301 = arith.constant 1.000000e+00 : f32
    %774 = vector.broadcast %cst_301 : f32 to vector<8x4xf32>
    %775 = arith.addf %774, %773 : vector<8x4xf32>
    %cst_302 = arith.constant 1.000000e+00 : f32
    %776 = vector.broadcast %cst_302 : f32 to vector<8x4xf32>
    %777 = arith.divf %776, %775 : vector<8x4xf32>
    %778 = arith.mulf %767, %740 : vector<8x4xf32>
    %779 = arith.mulf %759, %769 : vector<8x4xf32>
    %780 = arith.addf %778, %779 : vector<8x4xf32>
    %781 = math.tanh %780 : vector<8x4xf32>
    %782 = arith.mulf %777, %781 : vector<8x4xf32>
    %783 = arith.index_cast %c6_i32_290 : i32 to index
    %c0_303 = arith.constant 0 : index
    %c0_304 = arith.constant 0 : index
    %784 = vector.load %arg9[%783, %c0_303, %c0_304] : memref<12x8x4xf32, #tpu.memory_space<vmem>>, vector<1x8x4xf32>
    %785 = vector.shape_cast %784 : vector<1x8x4xf32> to vector<8x4xf32>
    %786 = vector.shape_cast %782 : vector<8x4xf32> to vector<1x8x4xf32>
    tpu.vector_store %arg9[%783, %c0_303, %c0_304], %786 {strides = array<i32>} : memref<12x8x4xf32, #tpu.memory_space<vmem>>, vector<1x8x4xf32>,
    %c7_i32_305 = arith.constant 7 : i32
    %787 = arith.index_cast %c7_i32_305 : i32 to index
    %c0_306 = arith.constant 0 : index
    %c0_307 = arith.constant 0 : index
    %788 = vector.load %arg12[%787, %c0_306, %c0_307] : memref<12x8x16xf32, #tpu.memory_space<vmem>>, vector<1x8x16xf32>
    %789 = vector.shape_cast %788 : vector<1x8x16xf32> to vector<8x16xf32>
    %cst_308 = arith.constant dense<0.000000e+00> : vector<8x16xf32>
    %790 = tpu.matmul %782, %505, %cst_308 {dimension_numbers = #tpu.dot_dimension_numbers<[1], [0], [0], [1], [0, 0, 1, 1], [], []>} : vector<8x4xf32>, vector<4x16xf32>, vector<8x16xf32> -> vector<8x16xf32>
    %791 = arith.addf %789, %790 : vector<8x16xf32>
    %792 = vector.extract_strided_slice %791 {offsets = [0, 0], sizes = [8, 4], strides = [1, 1]} : vector<8x16xf32> to vector<8x4xf32>
    %cst_309 = arith.constant 0.000000e+00 : f32
    %793 = vector.broadcast %cst_309 : f32 to vector<8x4xf32>
    %794 = arith.subf %793, %792 : vector<8x4xf32>
    %795 = math.exp %794 : vector<8x4xf32>
    %cst_310 = arith.constant 1.000000e+00 : f32
    %796 = vector.broadcast %cst_310 : f32 to vector<8x4xf32>
    %797 = arith.addf %796, %795 : vector<8x4xf32>
    %cst_311 = arith.constant 1.000000e+00 : f32
    %798 = vector.broadcast %cst_311 : f32 to vector<8x4xf32>
    %799 = arith.divf %798, %797 : vector<8x4xf32>
    %800 = vector.extract_strided_slice %791 {offsets = [0, 4], sizes = [8, 4], strides = [1, 1]} : vector<8x16xf32> to vector<8x4xf32>
    %cst_312 = arith.constant 0.000000e+00 : f32
    %801 = vector.broadcast %cst_312 : f32 to vector<8x4xf32>
    %802 = arith.subf %801, %800 : vector<8x4xf32>
    %803 = math.exp %802 : vector<8x4xf32>
    %cst_313 = arith.constant 1.000000e+00 : f32
    %804 = vector.broadcast %cst_313 : f32 to vector<8x4xf32>
    %805 = arith.addf %804, %803 : vector<8x4xf32>
    %cst_314 = arith.constant 1.000000e+00 : f32
    %806 = vector.broadcast %cst_314 : f32 to vector<8x4xf32>
    %807 = arith.divf %806, %805 : vector<8x4xf32>
    %808 = vector.extract_strided_slice %791 {offsets = [0, 8], sizes = [8, 4], strides = [1, 1]} : vector<8x16xf32> to vector<8x4xf32>
    %809 = math.tanh %808 : vector<8x4xf32>
    %810 = vector.extract_strided_slice %791 {offsets = [0, 12], sizes = [8, 4], strides = [1, 1]} : vector<8x16xf32> to vector<8x4xf32>
    %cst_315 = arith.constant 0.000000e+00 : f32
    %811 = vector.broadcast %cst_315 : f32 to vector<8x4xf32>
    %812 = arith.subf %811, %810 : vector<8x4xf32>
    %813 = math.exp %812 : vector<8x4xf32>
    %cst_316 = arith.constant 1.000000e+00 : f32
    %814 = vector.broadcast %cst_316 : f32 to vector<8x4xf32>
    %815 = arith.addf %814, %813 : vector<8x4xf32>
    %cst_317 = arith.constant 1.000000e+00 : f32
    %816 = vector.broadcast %cst_317 : f32 to vector<8x4xf32>
    %817 = arith.divf %816, %815 : vector<8x4xf32>
    %818 = arith.mulf %807, %780 : vector<8x4xf32>
    %819 = arith.mulf %799, %809 : vector<8x4xf32>
    %820 = arith.addf %818, %819 : vector<8x4xf32>
    %821 = math.tanh %820 : vector<8x4xf32>
    %822 = arith.mulf %817, %821 : vector<8x4xf32>
    %823 = arith.index_cast %c7_i32_305 : i32 to index
    %c0_318 = arith.constant 0 : index
    %c0_319 = arith.constant 0 : index
    %824 = vector.load %arg9[%823, %c0_318, %c0_319] : memref<12x8x4xf32, #tpu.memory_space<vmem>>, vector<1x8x4xf32>
    %825 = vector.shape_cast %824 : vector<1x8x4xf32> to vector<8x4xf32>
    %826 = vector.shape_cast %822 : vector<8x4xf32> to vector<1x8x4xf32>
    tpu.vector_store %arg9[%823, %c0_318, %c0_319], %826 {strides = array<i32>} : memref<12x8x4xf32, #tpu.memory_space<vmem>>, vector<1x8x4xf32>,
    %c8_i32_320 = arith.constant 8 : i32
    %827 = arith.index_cast %c8_i32_320 : i32 to index
    %c0_321 = arith.constant 0 : index
    %c0_322 = arith.constant 0 : index
    %828 = vector.load %arg12[%827, %c0_321, %c0_322] : memref<12x8x16xf32, #tpu.memory_space<vmem>>, vector<1x8x16xf32>
    %829 = vector.shape_cast %828 : vector<1x8x16xf32> to vector<8x16xf32>
    %cst_323 = arith.constant dense<0.000000e+00> : vector<8x16xf32>
    %830 = tpu.matmul %822, %505, %cst_323 {dimension_numbers = #tpu.dot_dimension_numbers<[1], [0], [0], [1], [0, 0, 1, 1], [], []>} : vector<8x4xf32>, vector<4x16xf32>, vector<8x16xf32> -> vector<8x16xf32>
    %831 = arith.addf %829, %830 : vector<8x16xf32>
    %832 = vector.extract_strided_slice %831 {offsets = [0, 0], sizes = [8, 4], strides = [1, 1]} : vector<8x16xf32> to vector<8x4xf32>
    %cst_324 = arith.constant 0.000000e+00 : f32
    %833 = vector.broadcast %cst_324 : f32 to vector<8x4xf32>
    %834 = arith.subf %833, %832 : vector<8x4xf32>
    %835 = math.exp %834 : vector<8x4xf32>
    %cst_325 = arith.constant 1.000000e+00 : f32
    %836 = vector.broadcast %cst_325 : f32 to vector<8x4xf32>
    %837 = arith.addf %836, %835 : vector<8x4xf32>
    %cst_326 = arith.constant 1.000000e+00 : f32
    %838 = vector.broadcast %cst_326 : f32 to vector<8x4xf32>
    %839 = arith.divf %838, %837 : vector<8x4xf32>
    %840 = vector.extract_strided_slice %831 {offsets = [0, 4], sizes = [8, 4], strides = [1, 1]} : vector<8x16xf32> to vector<8x4xf32>
    %cst_327 = arith.constant 0.000000e+00 : f32
    %841 = vector.broadcast %cst_327 : f32 to vector<8x4xf32>
    %842 = arith.subf %841, %840 : vector<8x4xf32>
    %843 = math.exp %842 : vector<8x4xf32>
    %cst_328 = arith.constant 1.000000e+00 : f32
    %844 = vector.broadcast %cst_328 : f32 to vector<8x4xf32>
    %845 = arith.addf %844, %843 : vector<8x4xf32>
    %cst_329 = arith.constant 1.000000e+00 : f32
    %846 = vector.broadcast %cst_329 : f32 to vector<8x4xf32>
    %847 = arith.divf %846, %845 : vector<8x4xf32>
    %848 = vector.extract_strided_slice %831 {offsets = [0, 8], sizes = [8, 4], strides = [1, 1]} : vector<8x16xf32> to vector<8x4xf32>
    %849 = math.tanh %848 : vector<8x4xf32>
    %850 = vector.extract_strided_slice %831 {offsets = [0, 12], sizes = [8, 4], strides = [1, 1]} : vector<8x16xf32> to vector<8x4xf32>
    %cst_330 = arith.constant 0.000000e+00 : f32
    %851 = vector.broadcast %cst_330 : f32 to vector<8x4xf32>
    %852 = arith.subf %851, %850 : vector<8x4xf32>
    %853 = math.exp %852 : vector<8x4xf32>
    %cst_331 = arith.constant 1.000000e+00 : f32
    %854 = vector.broadcast %cst_331 : f32 to vector<8x4xf32>
    %855 = arith.addf %854, %853 : vector<8x4xf32>
    %cst_332 = arith.constant 1.000000e+00 : f32
    %856 = vector.broadcast %cst_332 : f32 to vector<8x4xf32>
    %857 = arith.divf %856, %855 : vector<8x4xf32>
    %858 = arith.mulf %847, %820 : vector<8x4xf32>
    %859 = arith.mulf %839, %849 : vector<8x4xf32>
    %860 = arith.addf %858, %859 : vector<8x4xf32>
    %861 = math.tanh %860 : vector<8x4xf32>
    %862 = arith.mulf %857, %861 : vector<8x4xf32>
    %863 = arith.index_cast %c8_i32_320 : i32 to index
    %c0_333 = arith.constant 0 : index
    %c0_334 = arith.constant 0 : index
    %864 = vector.load %arg9[%863, %c0_333, %c0_334] : memref<12x8x4xf32, #tpu.memory_space<vmem>>, vector<1x8x4xf32>
    %865 = vector.shape_cast %864 : vector<1x8x4xf32> to vector<8x4xf32>
    %866 = vector.shape_cast %862 : vector<8x4xf32> to vector<1x8x4xf32>
    tpu.vector_store %arg9[%863, %c0_333, %c0_334], %866 {strides = array<i32>} : memref<12x8x4xf32, #tpu.memory_space<vmem>>, vector<1x8x4xf32>,
    %c9_i32_335 = arith.constant 9 : i32
    %867 = arith.index_cast %c9_i32_335 : i32 to index
    %c0_336 = arith.constant 0 : index
    %c0_337 = arith.constant 0 : index
    %868 = vector.load %arg12[%867, %c0_336, %c0_337] : memref<12x8x16xf32, #tpu.memory_space<vmem>>, vector<1x8x16xf32>
    %869 = vector.shape_cast %868 : vector<1x8x16xf32> to vector<8x16xf32>
    %cst_338 = arith.constant dense<0.000000e+00> : vector<8x16xf32>
    %870 = tpu.matmul %862, %505, %cst_338 {dimension_numbers = #tpu.dot_dimension_numbers<[1], [0], [0], [1], [0, 0, 1, 1], [], []>} : vector<8x4xf32>, vector<4x16xf32>, vector<8x16xf32> -> vector<8x16xf32>
    %871 = arith.addf %869, %870 : vector<8x16xf32>
    %872 = vector.extract_strided_slice %871 {offsets = [0, 0], sizes = [8, 4], strides = [1, 1]} : vector<8x16xf32> to vector<8x4xf32>
    %cst_339 = arith.constant 0.000000e+00 : f32
    %873 = vector.broadcast %cst_339 : f32 to vector<8x4xf32>
    %874 = arith.subf %873, %872 : vector<8x4xf32>
    %875 = math.exp %874 : vector<8x4xf32>
    %cst_340 = arith.constant 1.000000e+00 : f32
    %876 = vector.broadcast %cst_340 : f32 to vector<8x4xf32>
    %877 = arith.addf %876, %875 : vector<8x4xf32>
    %cst_341 = arith.constant 1.000000e+00 : f32
    %878 = vector.broadcast %cst_341 : f32 to vector<8x4xf32>
    %879 = arith.divf %878, %877 : vector<8x4xf32>
    %880 = vector.extract_strided_slice %871 {offsets = [0, 4], sizes = [8, 4], strides = [1, 1]} : vector<8x16xf32> to vector<8x4xf32>
    %cst_342 = arith.constant 0.000000e+00 : f32
    %881 = vector.broadcast %cst_342 : f32 to vector<8x4xf32>
    %882 = arith.subf %881, %880 : vector<8x4xf32>
    %883 = math.exp %882 : vector<8x4xf32>
    %cst_343 = arith.constant 1.000000e+00 : f32
    %884 = vector.broadcast %cst_343 : f32 to vector<8x4xf32>
    %885 = arith.addf %884, %883 : vector<8x4xf32>
    %cst_344 = arith.constant 1.000000e+00 : f32
    %886 = vector.broadcast %cst_344 : f32 to vector<8x4xf32>
    %887 = arith.divf %886, %885 : vector<8x4xf32>
    %888 = vector.extract_strided_slice %871 {offsets = [0, 8], sizes = [8, 4], strides = [1, 1]} : vector<8x16xf32> to vector<8x4xf32>
    %889 = math.tanh %888 : vector<8x4xf32>
    %890 = vector.extract_strided_slice %871 {offsets = [0, 12], sizes = [8, 4], strides = [1, 1]} : vector<8x16xf32> to vector<8x4xf32>
    %cst_345 = arith.constant 0.000000e+00 : f32
    %891 = vector.broadcast %cst_345 : f32 to vector<8x4xf32>
    %892 = arith.subf %891, %890 : vector<8x4xf32>
    %893 = math.exp %892 : vector<8x4xf32>
    %cst_346 = arith.constant 1.000000e+00 : f32
    %894 = vector.broadcast %cst_346 : f32 to vector<8x4xf32>
    %895 = arith.addf %894, %893 : vector<8x4xf32>
    %cst_347 = arith.constant 1.000000e+00 : f32
    %896 = vector.broadcast %cst_347 : f32 to vector<8x4xf32>
    %897 = arith.divf %896, %895 : vector<8x4xf32>
    %898 = arith.mulf %887, %860 : vector<8x4xf32>
    %899 = arith.mulf %879, %889 : vector<8x4xf32>
    %900 = arith.addf %898, %899 : vector<8x4xf32>
    %901 = math.tanh %900 : vector<8x4xf32>
    %902 = arith.mulf %897, %901 : vector<8x4xf32>
    %903 = arith.index_cast %c9_i32_335 : i32 to index
    %c0_348 = arith.constant 0 : index
    %c0_349 = arith.constant 0 : index
    %904 = vector.load %arg9[%903, %c0_348, %c0_349] : memref<12x8x4xf32, #tpu.memory_space<vmem>>, vector<1x8x4xf32>
    %905 = vector.shape_cast %904 : vector<1x8x4xf32> to vector<8x4xf32>
    %906 = vector.shape_cast %902 : vector<8x4xf32> to vector<1x8x4xf32>
    tpu.vector_store %arg9[%903, %c0_348, %c0_349], %906 {strides = array<i32>} : memref<12x8x4xf32, #tpu.memory_space<vmem>>, vector<1x8x4xf32>,
    %c10_i32_350 = arith.constant 10 : i32
    %907 = arith.index_cast %c10_i32_350 : i32 to index
    %c0_351 = arith.constant 0 : index
    %c0_352 = arith.constant 0 : index
    %908 = vector.load %arg12[%907, %c0_351, %c0_352] : memref<12x8x16xf32, #tpu.memory_space<vmem>>, vector<1x8x16xf32>
    %909 = vector.shape_cast %908 : vector<1x8x16xf32> to vector<8x16xf32>
    %cst_353 = arith.constant dense<0.000000e+00> : vector<8x16xf32>
    %910 = tpu.matmul %902, %505, %cst_353 {dimension_numbers = #tpu.dot_dimension_numbers<[1], [0], [0], [1], [0, 0, 1, 1], [], []>} : vector<8x4xf32>, vector<4x16xf32>, vector<8x16xf32> -> vector<8x16xf32>
    %911 = arith.addf %909, %910 : vector<8x16xf32>
    %912 = vector.extract_strided_slice %911 {offsets = [0, 0], sizes = [8, 4], strides = [1, 1]} : vector<8x16xf32> to vector<8x4xf32>
    %cst_354 = arith.constant 0.000000e+00 : f32
    %913 = vector.broadcast %cst_354 : f32 to vector<8x4xf32>
    %914 = arith.subf %913, %912 : vector<8x4xf32>
    %915 = math.exp %914 : vector<8x4xf32>
    %cst_355 = arith.constant 1.000000e+00 : f32
    %916 = vector.broadcast %cst_355 : f32 to vector<8x4xf32>
    %917 = arith.addf %916, %915 : vector<8x4xf32>
    %cst_356 = arith.constant 1.000000e+00 : f32
    %918 = vector.broadcast %cst_356 : f32 to vector<8x4xf32>
    %919 = arith.divf %918, %917 : vector<8x4xf32>
    %920 = vector.extract_strided_slice %911 {offsets = [0, 4], sizes = [8, 4], strides = [1, 1]} : vector<8x16xf32> to vector<8x4xf32>
    %cst_357 = arith.constant 0.000000e+00 : f32
    %921 = vector.broadcast %cst_357 : f32 to vector<8x4xf32>
    %922 = arith.subf %921, %920 : vector<8x4xf32>
    %923 = math.exp %922 : vector<8x4xf32>
    %cst_358 = arith.constant 1.000000e+00 : f32
    %924 = vector.broadcast %cst_358 : f32 to vector<8x4xf32>
    %925 = arith.addf %924, %923 : vector<8x4xf32>
    %cst_359 = arith.constant 1.000000e+00 : f32
    %926 = vector.broadcast %cst_359 : f32 to vector<8x4xf32>
    %927 = arith.divf %926, %925 : vector<8x4xf32>
    %928 = vector.extract_strided_slice %911 {offsets = [0, 8], sizes = [8, 4], strides = [1, 1]} : vector<8x16xf32> to vector<8x4xf32>
    %929 = math.tanh %928 : vector<8x4xf32>
    %930 = vector.extract_strided_slice %911 {offsets = [0, 12], sizes = [8, 4], strides = [1, 1]} : vector<8x16xf32> to vector<8x4xf32>
    %cst_360 = arith.constant 0.000000e+00 : f32
    %931 = vector.broadcast %cst_360 : f32 to vector<8x4xf32>
    %932 = arith.subf %931, %930 : vector<8x4xf32>
    %933 = math.exp %932 : vector<8x4xf32>
    %cst_361 = arith.constant 1.000000e+00 : f32
    %934 = vector.broadcast %cst_361 : f32 to vector<8x4xf32>
    %935 = arith.addf %934, %933 : vector<8x4xf32>
    %cst_362 = arith.constant 1.000000e+00 : f32
    %936 = vector.broadcast %cst_362 : f32 to vector<8x4xf32>
    %937 = arith.divf %936, %935 : vector<8x4xf32>
    %938 = arith.mulf %927, %900 : vector<8x4xf32>
    %939 = arith.mulf %919, %929 : vector<8x4xf32>
    %940 = arith.addf %938, %939 : vector<8x4xf32>
    %941 = math.tanh %940 : vector<8x4xf32>
    %942 = arith.mulf %937, %941 : vector<8x4xf32>
    %943 = arith.index_cast %c10_i32_350 : i32 to index
    %c0_363 = arith.constant 0 : index
    %c0_364 = arith.constant 0 : index
    %944 = vector.load %arg9[%943, %c0_363, %c0_364] : memref<12x8x4xf32, #tpu.memory_space<vmem>>, vector<1x8x4xf32>
    %945 = vector.shape_cast %944 : vector<1x8x4xf32> to vector<8x4xf32>
    %946 = vector.shape_cast %942 : vector<8x4xf32> to vector<1x8x4xf32>
    tpu.vector_store %arg9[%943, %c0_363, %c0_364], %946 {strides = array<i32>} : memref<12x8x4xf32, #tpu.memory_space<vmem>>, vector<1x8x4xf32>,
    %c11_i32_365 = arith.constant 11 : i32
    %947 = arith.index_cast %c11_i32_365 : i32 to index
    %c0_366 = arith.constant 0 : index
    %c0_367 = arith.constant 0 : index
    %948 = vector.load %arg12[%947, %c0_366, %c0_367] : memref<12x8x16xf32, #tpu.memory_space<vmem>>, vector<1x8x16xf32>
    %949 = vector.shape_cast %948 : vector<1x8x16xf32> to vector<8x16xf32>
    %cst_368 = arith.constant dense<0.000000e+00> : vector<8x16xf32>
    %950 = tpu.matmul %942, %505, %cst_368 {dimension_numbers = #tpu.dot_dimension_numbers<[1], [0], [0], [1], [0, 0, 1, 1], [], []>} : vector<8x4xf32>, vector<4x16xf32>, vector<8x16xf32> -> vector<8x16xf32>
    %951 = arith.addf %949, %950 : vector<8x16xf32>
    %952 = vector.extract_strided_slice %951 {offsets = [0, 0], sizes = [8, 4], strides = [1, 1]} : vector<8x16xf32> to vector<8x4xf32>
    %cst_369 = arith.constant 0.000000e+00 : f32
    %953 = vector.broadcast %cst_369 : f32 to vector<8x4xf32>
    %954 = arith.subf %953, %952 : vector<8x4xf32>
    %955 = math.exp %954 : vector<8x4xf32>
    %cst_370 = arith.constant 1.000000e+00 : f32
    %956 = vector.broadcast %cst_370 : f32 to vector<8x4xf32>
    %957 = arith.addf %956, %955 : vector<8x4xf32>
    %cst_371 = arith.constant 1.000000e+00 : f32
    %958 = vector.broadcast %cst_371 : f32 to vector<8x4xf32>
    %959 = arith.divf %958, %957 : vector<8x4xf32>
    %960 = vector.extract_strided_slice %951 {offsets = [0, 4], sizes = [8, 4], strides = [1, 1]} : vector<8x16xf32> to vector<8x4xf32>
    %cst_372 = arith.constant 0.000000e+00 : f32
    %961 = vector.broadcast %cst_372 : f32 to vector<8x4xf32>
    %962 = arith.subf %961, %960 : vector<8x4xf32>
    %963 = math.exp %962 : vector<8x4xf32>
    %cst_373 = arith.constant 1.000000e+00 : f32
    %964 = vector.broadcast %cst_373 : f32 to vector<8x4xf32>
    %965 = arith.addf %964, %963 : vector<8x4xf32>
    %cst_374 = arith.constant 1.000000e+00 : f32
    %966 = vector.broadcast %cst_374 : f32 to vector<8x4xf32>
    %967 = arith.divf %966, %965 : vector<8x4xf32>
    %968 = vector.extract_strided_slice %951 {offsets = [0, 8], sizes = [8, 4], strides = [1, 1]} : vector<8x16xf32> to vector<8x4xf32>
    %969 = math.tanh %968 : vector<8x4xf32>
    %970 = vector.extract_strided_slice %951 {offsets = [0, 12], sizes = [8, 4], strides = [1, 1]} : vector<8x16xf32> to vector<8x4xf32>
    %cst_375 = arith.constant 0.000000e+00 : f32
    %971 = vector.broadcast %cst_375 : f32 to vector<8x4xf32>
    %972 = arith.subf %971, %970 : vector<8x4xf32>
    %973 = math.exp %972 : vector<8x4xf32>
    %cst_376 = arith.constant 1.000000e+00 : f32
    %974 = vector.broadcast %cst_376 : f32 to vector<8x4xf32>
    %975 = arith.addf %974, %973 : vector<8x4xf32>
    %cst_377 = arith.constant 1.000000e+00 : f32
    %976 = vector.broadcast %cst_377 : f32 to vector<8x4xf32>
    %977 = arith.divf %976, %975 : vector<8x4xf32>
    %978 = arith.mulf %967, %940 : vector<8x4xf32>
    %979 = arith.mulf %959, %969 : vector<8x4xf32>
    %980 = arith.addf %978, %979 : vector<8x4xf32>
    %981 = math.tanh %980 : vector<8x4xf32>
    %982 = arith.mulf %977, %981 : vector<8x4xf32>
    %983 = arith.index_cast %c11_i32_365 : i32 to index
    %c0_378 = arith.constant 0 : index
    %c0_379 = arith.constant 0 : index
    %984 = vector.load %arg9[%983, %c0_378, %c0_379] : memref<12x8x4xf32, #tpu.memory_space<vmem>>, vector<1x8x4xf32>
    %985 = vector.shape_cast %984 : vector<1x8x4xf32> to vector<8x4xf32>
    %986 = vector.shape_cast %982 : vector<8x4xf32> to vector<1x8x4xf32>
    tpu.vector_store %arg9[%983, %c0_378, %c0_379], %986 {strides = array<i32>} : memref<12x8x4xf32, #tpu.memory_space<vmem>>, vector<1x8x4xf32>,
    %c12_i32_380 = arith.constant 12 : i32
    return
  }
}

</mosaic_0001>

<llo_original>
// kernel: mann_forward.1
$region0: #{mann_forward.1}
  #allocation0 [shape = 'u32[]', space=smem, size = 0x4, offset = 0x4, fixed_abs, tag = 'smem constant byte address 0x4 - core index']
  #allocation1 [shape = 'u32[144,128]{1,0:T(1,128)}', space=vmem, size = 0x12000, scoped, tag = 'internal scratch']
  #allocation2 [shape = 'f32[12,8,128]{2,1,0:T(8,128)}', space=vmem, size = 0xc000, scoped, tag = 'scratch operand']
  #allocation3 [shape = 'f32[12,8,32]{2,1,0:T(8,128)}', space=vmem, size = 0xc000, scoped, tag = 'scratch operand']
  #allocation4 [shape = 'f32[12,8,16]{2,1,0:T(8,128)}', space=vmem, size = 0xc000, scoped, tag = 'scratch operand']
  %s0 = inlined_call_operand.vmem [shape: f32[12,8,784], index: 0, kind: input, shape index: {}]
  %s1 = inlined_call_operand.vmem [shape: f32[12,8,4], index: 1, kind: input, shape index: {}]
  %s2 = inlined_call_operand.vmem [shape: f32[784,128], index: 2, kind: input, shape index: {}]
  %s3 = inlined_call_operand.vmem [shape: f32[4,128], index: 3, kind: input, shape index: {}]
  %s4 = inlined_call_operand.vmem [shape: f32[32,128], index: 4, kind: input, shape index: {}]
  %s5 = inlined_call_operand.vmem [shape: f32[1,128], index: 5, kind: input, shape index: {}]
  %s6 = inlined_call_operand.vmem [shape: f32[32,16], index: 6, kind: input, shape index: {}]
  %s7 = inlined_call_operand.vmem [shape: f32[4,16], index: 7, kind: input, shape index: {}]
  %s8 = inlined_call_operand.vmem [shape: f32[1,16], index: 8, kind: input, shape index: {}]
  %s9 = inlined_call_operand.vmem [shape: f32[12,8,4], index: 9, kind: output, shape index: {}]
  %s10 = sld [smem:[#allocation0]]
  $region46: #{mann_forward.1} parent=0
    _
  %s12 = ssub.s32 1, %s10
  %s13 = scalar_select 0, %s12, %s10
  // Predicated region
  $region2: #{mann_forward.1} parent=0 // pred_check
    _
  $region3: #{mann_forward.1} parent=0 // pred_check_branch
    %15 = sbr.rel (0) target = $region5
  $region4: #{mann_forward.1} parent=0 // pred_region
    _
  $region5: #{mann_forward.1} parent=0 // pred_fallthru
    _
  // Predicated region
  $region6: #{mann_forward.1} parent=0 // pred_check
    _
  $region7: #{mann_forward.1} parent=0 // pred_check_branch
    %17 = sbr.rel (0) target = $region9
  $region8: #{mann_forward.1} parent=0 // pred_region
    _
  $region9: #{mann_forward.1} parent=0 // pred_fallthru
    _
  // Predicated region
  $region10: #{mann_forward.1} parent=0 // pred_check
    _
  $region11: #{mann_forward.1} parent=0 // pred_check_branch
    %19 = sbr.rel (0) target = $region13
  $region12: #{mann_forward.1} parent=0 // pred_region
    _
  $region13: #{mann_forward.1} parent=0 // pred_fallthru
    _
  // Predicated region
  $region14: #{mann_forward.1} parent=0 // pred_check
    _
  $region15: #{mann_forward.1} parent=0 // pred_check_branch
    %21 = sbr.rel (0) target = $region17
  $region16: #{mann_forward.1} parent=0 // pred_region
    _
  $region17: #{mann_forward.1} parent=0 // pred_fallthru
    _
  // Predicated region
  $region18: #{mann_forward.1} parent=0 // pred_check
    _
  $region19: #{mann_forward.1} parent=0 // pred_check_branch
    %23 = sbr.rel (0) target = $region21
  $region20: #{mann_forward.1} parent=0 // pred_region
    _
  $region21: #{mann_forward.1} parent=0 // pred_fallthru
    _
  // Predicated region
  $region22: #{mann_forward.1} parent=0 // pred_check
    _
  $region23: #{mann_forward.1} parent=0 // pred_check_branch
    %25 = sbr.rel (0) target = $region25
  $region24: #{mann_forward.1} parent=0 // pred_region
    _
  $region25: #{mann_forward.1} parent=0 // pred_fallthru
    _
  // Predicated region
  $region26: #{mann_forward.1} parent=0 // pred_check
    _
  $region27: #{mann_forward.1} parent=0 // pred_check_branch
    %27 = sbr.rel (0) target = $region29
  $region28: #{mann_forward.1} parent=0 // pred_region
    _
  $region29: #{mann_forward.1} parent=0 // pred_fallthru
    _
  // Predicated region
  $region30: #{mann_forward.1} parent=0 // pred_check
    _
  $region31: #{mann_forward.1} parent=0 // pred_check_branch
    %29 = sbr.rel (0) target = $region33
  $region32: #{mann_forward.1} parent=0 // pred_region
    _
  $region33: #{mann_forward.1} parent=0 // pred_fallthru
    _
  // Predicated region
  $region34: #{mann_forward.1} parent=0 // pred_check
    _
  $region35: #{mann_forward.1} parent=0 // pred_check_branch
    %31 = sbr.rel (0) target = $region37
  $region36: #{mann_forward.1} parent=0 // pred_region
    _
  $region37: #{mann_forward.1} parent=0 // pred_fallthru
    _
  %v32 = vld [vmem:[%s0] sm:$0xff]
  %v33 = vld [vmem:[%s0 + $0x8] sm:$0xff]
  %v34 = vld [vmem:[%s0 + $0x10] sm:$0xff]
  %v35 = vld [vmem:[%s0 + $0x18] sm:$0xff]
  %v36 = vld [vmem:[%s0 + $0x20] sm:$0xff]
  %v37 = vld [vmem:[%s0 + $0x28] sm:$0xff]
  %v38 = vld [vmem:[%s0 + $0x30] sm:$0xff]
  %v39 = vld [vmem:[%s0 + $0x38] sm:$0xff]
  %v40 = vld [vmem:[%s0 + $0x40] sm:$0xff]
  %v41 = vld [vmem:[%s0 + $0x48] sm:$0xff]
  %v42 = vld [vmem:[%s0 + $0x50] sm:$0xff]
  %v43 = vld [vmem:[%s0 + $0x58] sm:$0xff]
  %v44 = vld [vmem:[%s0 + $0x60] sm:$0xff]
  %v45 = vld [vmem:[%s0 + $0x68] sm:$0xff]
  %v46 = vld [vmem:[%s0 + $0x70] sm:$0xff]
  %v47 = vld [vmem:[%s0 + $0x78] sm:$0xff]
  %v48 = vld [vmem:[%s0 + $0x80] sm:$0xff]
  %v49 = vld [vmem:[%s0 + $0x88] sm:$0xff]
  %v50 = vld [vmem:[%s0 + $0x90] sm:$0xff]
  %v51 = vld [vmem:[%s0 + $0x98] sm:$0xff]
  %v52 = vld [vmem:[%s0 + $0xa0] sm:$0xff]
  %v53 = vld [vmem:[%s0 + $0xa8] sm:$0xff]
  %v54 = vld [vmem:[%s0 + $0xb0] sm:$0xff]
  %v55 = vld [vmem:[%s0 + $0xb8] sm:$0xff]
  %v56 = vld [vmem:[%s0 + $0xc0] sm:$0xff]
  %v57 = vld [vmem:[%s0 + $0xc8] sm:$0xff]
  %v58 = vld [vmem:[%s0 + $0xd0] sm:$0xff]
  %v59 = vld [vmem:[%s0 + $0xd8] sm:$0xff]
  %v60 = vld [vmem:[%s0 + $0xe0] sm:$0xff]
  %v61 = vld [vmem:[%s0 + $0xe8] sm:$0xff]
  %v62 = vld [vmem:[%s0 + $0xf0] sm:$0xff]
  %v63 = vld [vmem:[%s0 + $0xf8] sm:$0xff]
  %v64 = vld [vmem:[%s0 + $0x100] sm:$0xff]
  %v65 = vld [vmem:[%s0 + $0x108] sm:$0xff]
  %v66 = vld [vmem:[%s0 + $0x110] sm:$0xff]
  %v67 = vld [vmem:[%s0 + $0x118] sm:$0xff]
  %v68 = vld [vmem:[%s0 + $0x120] sm:$0xff]
  %v69 = vld [vmem:[%s0 + $0x128] sm:$0xff]
  %v70 = vld [vmem:[%s0 + $0x130] sm:$0xff]
  %v71 = vld [vmem:[%s0 + $0x138] sm:$0xff]
  %v72 = vld [vmem:[%s0 + $0x140] sm:$0xff]
  %v73 = vld [vmem:[%s0 + $0x148] sm:$0xff]
  %v74 = vld [vmem:[%s0 + $0x150] sm:$0xff]
  %v75 = vld [vmem:[%s0 + $0x158] sm:$0xff]
  %v76 = vld [vmem:[%s0 + $0x160] sm:$0xff]
  %v77 = vld [vmem:[%s0 + $0x168] sm:$0xff]
  %v78 = vld [vmem:[%s0 + $0x170] sm:$0xff]
  %v79 = vld [vmem:[%s0 + $0x178] sm:$0xff]
  %v80 = vld [vmem:[%s0 + $0x180] sm:$0xff]
  %v81 = vld [vmem:[%s0 + $0x188] sm:$0xff]
  %v82 = vld [vmem:[%s0 + $0x190] sm:$0xff]
  %v83 = vld [vmem:[%s0 + $0x198] sm:$0xff]
  %v84 = vld [vmem:[%s0 + $0x1a0] sm:$0xff]
  %v85 = vld [vmem:[%s0 + $0x1a8] sm:$0xff]
  %v86 = vld [vmem:[%s0 + $0x1b0] sm:$0xff]
  %v87 = vld [vmem:[%s0 + $0x1b8] sm:$0xff]
  %v88 = vld [vmem:[%s0 + $0x1c0] sm:$0xff]
  %v89 = vld [vmem:[%s0 + $0x1c8] sm:$0xff]
  %v90 = vld [vmem:[%s0 + $0x1d0] sm:$0xff]
  %v91 = vld [vmem:[%s0 + $0x1d8] sm:$0xff]
  %v92 = vld [vmem:[%s0 + $0x1e0] sm:$0xff]
  %v93 = vld [vmem:[%s0 + $0x1e8] sm:$0xff]
  %v94 = vld [vmem:[%s0 + $0x1f0] sm:$0xff]
  %v95 = vld [vmem:[%s0 + $0x1f8] sm:$0xff]
  %v96 = vld [vmem:[%s0 + $0x200] sm:$0xff]
  %v97 = vld [vmem:[%s0 + $0x208] sm:$0xff]
  %v98 = vld [vmem:[%s0 + $0x210] sm:$0xff]
  %v99 = vld [vmem:[%s0 + $0x218] sm:$0xff]
  %v100 = vld [vmem:[%s0 + $0x220] sm:$0xff]
  %v101 = vld [vmem:[%s0 + $0x228] sm:$0xff]
  %v102 = vld [vmem:[%s0 + $0x230] sm:$0xff]
  %v103 = vld [vmem:[%s0 + $0x238] sm:$0xff]
  %v104 = vld [vmem:[%s0 + $0x240] sm:$0xff]
  %v105 = vld [vmem:[%s0 + $0x248] sm:$0xff]
  %v106 = vld [vmem:[%s0 + $0x250] sm:$0xff]
  %v107 = vld [vmem:[%s0 + $0x258] sm:$0xff]
  %v108 = vld [vmem:[%s0 + $0x260] sm:$0xff]
  %v109 = vld [vmem:[%s0 + $0x268] sm:$0xff]
  %v110 = vld [vmem:[%s0 + $0x270] sm:$0xff]
  %v111 = vld [vmem:[%s0 + $0x278] sm:$0xff]
  %v112 = vld [vmem:[%s0 + $0x280] sm:$0xff]
  %v113 = vld [vmem:[%s0 + $0x288] sm:$0xff]
  %v114 = vld [vmem:[%s0 + $0x290] sm:$0xff]
  %v115 = vld [vmem:[%s0 + $0x298] sm:$0xff]
  %v116 = vld [vmem:[%s1] sm:$0xff]
  %v117 = vld [vmem:[%s1 + $0x8] sm:$0xff]
  %v118 = vld [vmem:[%s1 + $0x10] sm:$0xff]
  %v119 = vld [vmem:[%s1 + $0x18] sm:$0xff]
  %v120 = vld [vmem:[%s1 + $0x20] sm:$0xff]
  %v121 = vld [vmem:[%s1 + $0x28] sm:$0xff]
  %v122 = vld [vmem:[%s1 + $0x30] sm:$0xff]
  %v123 = vld [vmem:[%s1 + $0x38] sm:$0xff]
  %v124 = vld [vmem:[%s1 + $0x40] sm:$0xff]
  %v125 = vld [vmem:[%s1 + $0x48] sm:$0xff]
  %v126 = vld [vmem:[%s1 + $0x50] sm:$0xff]
  %v127 = vld [vmem:[%s1 + $0x58] sm:$0xff]
  %v128 = vld [vmem:[%s2] sm:$0xff]
  %v129 = vld [vmem:[%s2 + $0x8] sm:$0xff]
  %v130 = vld [vmem:[%s2 + $0x10] sm:$0xff]
  %v131 = vld [vmem:[%s2 + $0x18] sm:$0xff]
  %v132 = vld [vmem:[%s2 + $0x20] sm:$0xff]
  %v133 = vld [vmem:[%s2 + $0x28] sm:$0xff]
  %v134 = vld [vmem:[%s2 + $0x30] sm:$0xff]
  %v135 = vld [vmem:[%s2 + $0x38] sm:$0xff]
  %v136 = vld [vmem:[%s2 + $0x40] sm:$0xff]
  %v137 = vld [vmem:[%s2 + $0x48] sm:$0xff]
  %v138 = vld [vmem:[%s2 + $0x50] sm:$0xff]
  %v139 = vld [vmem:[%s2 + $0x58] sm:$0xff]
  %v140 = vld [vmem:[%s2 + $0x60] sm:$0xff]
  %v141 = vld [vmem:[%s2 + $0x68] sm:$0xff]
  %v142 = vld [vmem:[%s2 + $0x70] sm:$0xff]
  %v143 = vld [vmem:[%s2 + $0x78] sm:$0xff]
  %v144 = vld [vmem:[%s2 + $0x80] sm:$0xff]
  %v145 = vld [vmem:[%s2 + $0x88] sm:$0xff]
  %v146 = vld [vmem:[%s2 + $0x90] sm:$0xff]
  %v147 = vld [vmem:[%s2 + $0x98] sm:$0xff]
  %v148 = vld [vmem:[%s2 + $0xa0] sm:$0xff]
  %v149 = vld [vmem:[%s2 + $0xa8] sm:$0xff]
  %v150 = vld [vmem:[%s2 + $0xb0] sm:$0xff]
  %v151 = vld [vmem:[%s2 + $0xb8] sm:$0xff]
  %v152 = vld [vmem:[%s2 + $0xc0] sm:$0xff]
  %v153 = vld [vmem:[%s2 + $0xc8] sm:$0xff]
  %v154 = vld [vmem:[%s2 + $0xd0] sm:$0xff]
  %v155 = vld [vmem:[%s2 + $0xd8] sm:$0xff]
  %v156 = vld [vmem:[%s2 + $0xe0] sm:$0xff]
  %v157 = vld [vmem:[%s2 + $0xe8] sm:$0xff]
  %v158 = vld [vmem:[%s2 + $0xf0] sm:$0xff]
  %v159 = vld [vmem:[%s2 + $0xf8] sm:$0xff]
  %v160 = vld [vmem:[%s2 + $0x100] sm:$0xff]
  %v161 = vld [vmem:[%s2 + $0x108] sm:$0xff]
  %v162 = vld [vmem:[%s2 + $0x110] sm:$0xff]
  %v163 = vld [vmem:[%s2 + $0x118] sm:$0xff]
  %v164 = vld [vmem:[%s2 + $0x120] sm:$0xff]
  %v165 = vld [vmem:[%s2 + $0x128] sm:$0xff]
  %v166 = vld [vmem:[%s2 + $0x130] sm:$0xff]
  %v167 = vld [vmem:[%s2 + $0x138] sm:$0xff]
  %v168 = vld [vmem:[%s2 + $0x140] sm:$0xff]
  %v169 = vld [vmem:[%s2 + $0x148] sm:$0xff]
  %v170 = vld [vmem:[%s2 + $0x150] sm:$0xff]
  %v171 = vld [vmem:[%s2 + $0x158] sm:$0xff]
  %v172 = vld [vmem:[%s2 + $0x160] sm:$0xff]
  %v173 = vld [vmem:[%s2 + $0x168] sm:$0xff]
  %v174 = vld [vmem:[%s2 + $0x170] sm:$0xff]
  %v175 = vld [vmem:[%s2 + $0x178] sm:$0xff]
  %v176 = vld [vmem:[%s2 + $0x180] sm:$0xff]
  %v177 = vld [vmem:[%s2 + $0x188] sm:$0xff]
  %v178 = vld [vmem:[%s2 + $0x190] sm:$0xff]
  %v179 = vld [vmem:[%s2 + $0x198] sm:$0xff]
  %v180 = vld [vmem:[%s2 + $0x1a0] sm:$0xff]
  %v181 = vld [vmem:[%s2 + $0x1a8] sm:$0xff]
  %v182 = vld [vmem:[%s2 + $0x1b0] sm:$0xff]
  %v183 = vld [vmem:[%s2 + $0x1b8] sm:$0xff]
  %v184 = vld [vmem:[%s2 + $0x1c0] sm:$0xff]
  %v185 = vld [vmem:[%s2 + $0x1c8] sm:$0xff]
  %v186 = vld [vmem:[%s2 + $0x1d0] sm:$0xff]
  %v187 = vld [vmem:[%s2 + $0x1d8] sm:$0xff]
  %v188 = vld [vmem:[%s2 + $0x1e0] sm:$0xff]
  %v189 = vld [vmem:[%s2 + $0x1e8] sm:$0xff]
  %v190 = vld [vmem:[%s2 + $0x1f0] sm:$0xff]
  %v191 = vld [vmem:[%s2 + $0x1f8] sm:$0xff]
  %v192 = vld [vmem:[%s2 + $0x200] sm:$0xff]
  %v193 = vld [vmem:[%s2 + $0x208] sm:$0xff]
  %v194 = vld [vmem:[%s2 + $0x210] sm:$0xff]
  %v195 = vld [vmem:[%s2 + $0x218] sm:$0xff]
  %v196 = vld [vmem:[%s2 + $0x220] sm:$0xff]
  %v197 = vld [vmem:[%s2 + $0x228] sm:$0xff]
  %v198 = vld [vmem:[%s2 + $0x230] sm:$0xff]
  %v199 = vld [vmem:[%s2 + $0x238] sm:$0xff]
  %v200 = vld [vmem:[%s2 + $0x240] sm:$0xff]
  %v201 = vld [vmem:[%s2 + $0x248] sm:$0xff]
  %v202 = vld [vmem:[%s2 + $0x250] sm:$0xff]
  %v203 = vld [vmem:[%s2 + $0x258] sm:$0xff]
  %v204 = vld [vmem:[%s2 + $0x260] sm:$0xff]
  %v205 = vld [vmem:[%s2 + $0x268] sm:$0xff]
  %v206 = vld [vmem:[%s2 + $0x270] sm:$0xff]
  %v207 = vld [vmem:[%s2 + $0x278] sm:$0xff]
  %v208 = vld [vmem:[%s2 + $0x280] sm:$0xff]
  %v209 = vld [vmem:[%s2 + $0x288] sm:$0xff]
  %v210 = vld [vmem:[%s2 + $0x290] sm:$0xff]
  %v211 = vld [vmem:[%s2 + $0x298] sm:$0xff]
  %v212 = vld [vmem:[%s2 + $0x2a0] sm:$0xff]
  %v213 = vld [vmem:[%s2 + $0x2a8] sm:$0xff]
  %v214 = vld [vmem:[%s2 + $0x2b0] sm:$0xff]
  %v215 = vld [vmem:[%s2 + $0x2b8] sm:$0xff]
  %v216 = vld [vmem:[%s2 + $0x2c0] sm:$0xff]
  %v217 = vld [vmem:[%s2 + $0x2c8] sm:$0xff]
  %v218 = vld [vmem:[%s2 + $0x2d0] sm:$0xff]
  %v219 = vld [vmem:[%s2 + $0x2d8] sm:$0xff]
  %v220 = vld [vmem:[%s2 + $0x2e0] sm:$0xff]
  %v221 = vld [vmem:[%s2 + $0x2e8] sm:$0xff]
  %v222 = vld [vmem:[%s2 + $0x2f0] sm:$0xff]
  %v223 = vld [vmem:[%s2 + $0x2f8] sm:$0xff]
  %v224 = vld [vmem:[%s2 + $0x300] sm:$0xff]
  %v225 = vld [vmem:[%s2 + $0x308] sm:$0xff]
  %v226 = vld [vmem:[%s3] sm:$0xf]
  %vm227 = vcmask 31744
  %v229 = vsel %vm227, %v116, 0
  %v232 = vsel %vm227, %v117, 0
  %v235 = vsel %vm227, %v118, 0
  %v238 = vsel %vm227, %v119, 0
  %v241 = vsel %vm227, %v120, 0
  %v244 = vsel %vm227, %v121, 0
  %v247 = vsel %vm227, %v122, 0
  %v250 = vsel %vm227, %v123, 0
  %v253 = vsel %vm227, %v124, 0
  %v256 = vsel %vm227, %v125, 0
  %v259 = vsel %vm227, %v126, 0
  %v262 = vsel %vm227, %v127, 0
  %vm264 = vcmask 1043456
  %v266 = vsel %vm264, %v226, 0
  %268 = vmatprep.subr.mxu0 0.0
  %269 = vmatpush1.msra.mxu0 %v266
  %270 = vmatprep.subr.mxu0 0.0
  %271 = vmatpush1.msra.mxu0 0.0
  %272 = vmatprep.subr.mxu0 0.0
  %273 = vmatpush1.msra.mxu0 0.0
  %274 = vmatprep.subr.mxu0 0.0
  %275 = vmatpush1.msra.mxu0 0.0
  %276 = vmatprep.subr.mxu0 0.0
  %277 = vmatpush1.msra.mxu0 0.0
  %278 = vmatprep.subr.mxu0 0.0
  %279 = vmatpush1.msra.mxu0 0.0
  %280 = vmatprep.subr.mxu0 0.0
  %281 = vmatpush1.msra.mxu0 0.0
  %282 = vmatprep.subr.mxu0 0.0
  %283 = vmatpush1.msra.mxu0 0.0
  %284 = vmatprep.subr.mxu0 0.0
  %285 = vmatpush1.msra.mxu0 0.0
  %286 = vmatprep.subr.mxu0 0.0
  %287 = vmatpush1.msra.mxu0 0.0
  %288 = vmatprep.subr.mxu0 0.0
  %289 = vmatpush1.msra.mxu0 0.0
  %290 = vmatprep.subr.mxu0 0.0
  %291 = vmatpush1.msra.mxu0 0.0
  %292 = vmatprep.subr.mxu0 0.0
  %293 = vmatpush1.msra.mxu0 0.0
  %294 = vmatprep.subr.mxu0 0.0
  %295 = vmatpush1.msra.mxu0 0.0
  %296 = vmatprep.subr.mxu0 0.0
  %297 = vmatpush1.msra.mxu0 0.0
  %298 = vmatprep.subr.mxu0 0.0
  %299 = vmatpush1.msra.mxu0 0.0
  %300 = vmatprep.subr.mxu0 0.0
  %301 = vmatpush1.msra.mxu0 0.0
  %302 = vmatprep.subr.mxu0 0.0
  %303 = vmatpush1.msra.mxu0 0.0
  %304 = vmatprep.subr.mxu0 0.0
  %305 = vmatpush1.msra.mxu0 0.0
  %306 = vmatprep.subr.mxu0 0.0
  %307 = vmatpush1.msra.mxu0 0.0
  %308 = vmatprep.subr.mxu0 0.0
  %309 = vmatpush1.msra.mxu0 0.0
  %310 = vmatprep.subr.mxu0 0.0
  %311 = vmatpush1.msra.mxu0 0.0
  %312 = vmatprep.subr.mxu0 0.0
  %313 = vmatpush1.msra.mxu0 0.0
  %314 = vmatprep.subr.mxu0 0.0
  %315 = vmatpush1.msra.mxu0 0.0
  %316 = vmatprep.subr.mxu0 0.0
  %317 = vmatpush1.msra.mxu0 0.0
  %318 = vmatprep.subr.mxu0 0.0
  %319 = vmatpush1.msra.mxu0 0.0
  %320 = vmatprep.subr.mxu0 0.0
  %321 = vmatpush1.msra.mxu0 0.0
  %322 = vmatprep.subr.mxu0 0.0
  %323 = vmatpush1.msra.mxu0 0.0
  %324 = vmatprep.subr.mxu0 0.0
  %325 = vmatpush1.msra.mxu0 0.0
  %326 = vmatprep.subr.mxu0 0.0
  %327 = vmatpush1.msra.mxu0 0.0
  %328 = vmatprep.subr.mxu0 0.0
  %329 = vmatpush1.msra.mxu0 0.0
  %330 = vmatprep.subr.mxu0 0.0
  %331 = vmatpush1.msra.mxu0 0.0
  %332 = vmatprep.mubr.f32.mxu0 0.0
  %333 = vmatmul.mubr.f32.gmra.mrb[0].mxu0 %v229
  %v334 = vpop.f32.mrb[0].mxu0
  %v335 = vadd.f32 0.0, %v334
  %v336 = vpop.f32.mrb[0].mxu0
  %337 = vmatprep.mubr.f32.mxu0 0.0
  %338 = vmatmul.mubr.f32.gmra.mrb[0].mxu0 %v232
  %v339 = vpop.f32.mrb[0].mxu0
  %v340 = vadd.f32 0.0, %v339
  %v341 = vpop.f32.mrb[0].mxu0
  %342 = vmatprep.mubr.f32.mxu0 0.0
  %343 = vmatmul.mubr.f32.gmra.mrb[0].mxu0 %v235
  %v344 = vpop.f32.mrb[0].mxu0
  %v345 = vadd.f32 0.0, %v344
  %v346 = vpop.f32.mrb[0].mxu0
  %347 = vmatprep.mubr.f32.mxu0 0.0
  %348 = vmatmul.mubr.f32.gmra.mrb[0].mxu0 %v238
  %v349 = vpop.f32.mrb[0].mxu0
  %v350 = vadd.f32 0.0, %v349
  %v351 = vpop.f32.mrb[0].mxu0
  %352 = vmatprep.mubr.f32.mxu0 0.0
  %353 = vmatmul.mubr.f32.gmra.mrb[0].mxu0 %v241
  %v354 = vpop.f32.mrb[0].mxu0
  %v355 = vadd.f32 0.0, %v354
  %v356 = vpop.f32.mrb[0].mxu0
  %357 = vmatprep.mubr.f32.mxu0 0.0
  %358 = vmatmul.mubr.f32.gmra.mrb[0].mxu0 %v244
  %v359 = vpop.f32.mrb[0].mxu0
  %v360 = vadd.f32 0.0, %v359
  %v361 = vpop.f32.mrb[0].mxu0
  %362 = vmatprep.mubr.f32.mxu0 0.0
  %363 = vmatmul.mubr.f32.gmra.mrb[0].mxu0 %v247
  %v364 = vpop.f32.mrb[0].mxu0
  %v365 = vadd.f32 0.0, %v364
  %v366 = vpop.f32.mrb[0].mxu0
  %367 = vmatprep.mubr.f32.mxu0 0.0
  %368 = vmatmul.mubr.f32.gmra.mrb[0].mxu0 %v250
  %v369 = vpop.f32.mrb[0].mxu0
  %v370 = vadd.f32 0.0, %v369
  %v371 = vpop.f32.mrb[0].mxu0
  %372 = vmatprep.mubr.f32.mxu0 0.0
  %373 = vmatmul.mubr.f32.gmra.mrb[0].mxu0 %v253
  %v374 = vpop.f32.mrb[0].mxu0
  %v375 = vadd.f32 0.0, %v374
  %v376 = vpop.f32.mrb[0].mxu0
  %377 = vmatprep.mubr.f32.mxu0 0.0
  %378 = vmatmul.mubr.f32.gmra.mrb[0].mxu0 %v256
  %v379 = vpop.f32.mrb[0].mxu0
  %v380 = vadd.f32 0.0, %v379
  %v381 = vpop.f32.mrb[0].mxu0
  %382 = vmatprep.mubr.f32.mxu0 0.0
  %383 = vmatmul.mubr.f32.gmra.mrb[0].mxu0 %v259
  %v384 = vpop.f32.mrb[0].mxu0
  %v385 = vadd.f32 0.0, %v384
  %v386 = vpop.f32.mrb[0].mxu0
  %387 = vmatprep.mubr.f32.mxu0 0.0
  %388 = vmatmul.mubr.f32.gmra.mrb[0].mxu0 %v262
  %v389 = vpop.f32.mrb[0].mxu0
  %v390 = vadd.f32 0.0, %v389
  %v391 = vpop.f32.mrb[0].mxu0
  %392 = vdwg.mxu0
  %vm393 = vcmask 130048
  %v395 = vsel %vm393, %v38, 0
  %v398 = vsel %vm393, %v45, 0
  %v401 = vsel %vm393, %v52, 0
  %v404 = vsel %vm393, %v59, 0
  %v407 = vsel %vm393, %v66, 0
  %v410 = vsel %vm393, %v73, 0
  %v413 = vsel %vm393, %v80, 0
  %v416 = vsel %vm393, %v87, 0
  %v419 = vsel %vm393, %v94, 0
  %v422 = vsel %vm393, %v101, 0
  %v425 = vsel %vm393, %v108, 0
  %v428 = vsel %vm393, %v115, 0
  %430 = vmatprep.subr.mxu0 0.0
  %431 = vmatpush1.msra.mxu0 %v128
  %432 = vmatprep.subr.mxu0 0.0
  %433 = vmatpush1.msra.mxu0 %v129
  %434 = vmatprep.subr.mxu0 0.0
  %435 = vmatpush1.msra.mxu0 %v130
  %436 = vmatprep.subr.mxu0 0.0
  %437 = vmatpush1.msra.mxu0 %v131
  %438 = vmatprep.subr.mxu0 0.0
  %439 = vmatpush1.msra.mxu0 %v132
  %440 = vmatprep.subr.mxu0 0.0
  %441 = vmatpush1.msra.mxu0 %v133
  %442 = vmatprep.subr.mxu0 0.0
  %443 = vmatpush1.msra.mxu0 %v134
  %444 = vmatprep.subr.mxu0 0.0
  %445 = vmatpush1.msra.mxu0 %v135
  %446 = vmatprep.subr.mxu0 0.0
  %447 = vmatpush1.msra.mxu0 %v136
  %448 = vmatprep.subr.mxu0 0.0
  %449 = vmatpush1.msra.mxu0 %v137
  %450 = vmatprep.subr.mxu0 0.0
  %451 = vmatpush1.msra.mxu0 %v138
  %452 = vmatprep.subr.mxu0 0.0
  %453 = vmatpush1.msra.mxu0 %v139
  %454 = vmatprep.subr.mxu0 0.0
  %455 = vmatpush1.msra.mxu0 %v140
  %456 = vmatprep.subr.mxu0 0.0
  %457 = vmatpush1.msra.mxu0 %v141
  %458 = vmatprep.subr.mxu0 0.0
  %459 = vmatpush1.msra.mxu0 %v142
  %460 = vmatprep.subr.mxu0 0.0
  %461 = vmatpush1.msra.mxu0 %v143
  %462 = vmatprep.subr.mxu0 0.0
  %463 = vmatpush1.msra.mxu0 %v144
  %464 = vmatprep.subr.mxu0 0.0
  %465 = vmatpush1.msra.mxu0 %v145
  %466 = vmatprep.subr.mxu0 0.0
  %467 = vmatpush1.msra.mxu0 %v146
  %468 = vmatprep.subr.mxu0 0.0
  %469 = vmatpush1.msra.mxu0 %v147
  %470 = vmatprep.subr.mxu0 0.0
  %471 = vmatpush1.msra.mxu0 %v148
  %472 = vmatprep.subr.mxu0 0.0
  %473 = vmatpush1.msra.mxu0 %v149
  %474 = vmatprep.subr.mxu0 0.0
  %475 = vmatpush1.msra.mxu0 %v150
  %476 = vmatprep.subr.mxu0 0.0
  %477 = vmatpush1.msra.mxu0 %v151
  %478 = vmatprep.subr.mxu0 0.0
  %479 = vmatpush1.msra.mxu0 %v152
  %480 = vmatprep.subr.mxu0 0.0
  %481 = vmatpush1.msra.mxu0 %v153
  %482 = vmatprep.subr.mxu0 0.0
  %483 = vmatpush1.msra.mxu0 %v154
  %484 = vmatprep.subr.mxu0 0.0
  %485 = vmatpush1.msra.mxu0 %v155
  %486 = vmatprep.subr.mxu0 0.0
  %487 = vmatpush1.msra.mxu0 %v156
  %488 = vmatprep.subr.mxu0 0.0
  %489 = vmatpush1.msra.mxu0 %v157
  %490 = vmatprep.subr.mxu0 0.0
  %491 = vmatpush1.msra.mxu0 %v158
  %492 = vmatprep.subr.mxu0 0.0
  %493 = vmatpush1.msra.mxu0 %v159
  %494 = vmatprep.mubr.f32.mxu0 %v33
  %495 = vmatmul.mubr.f32.gmra.mrb[0].mxu0 %v32
  %v496 = vpop.f32.mrb[0].mxu0
  %v497 = vadd.f32 %v335, %v496
  %v498 = vpop.f32.mrb[0].mxu0
  %499 = vmatprep.mubr.f32.mxu0 %v40
  %500 = vmatmul.mubr.f32.gmra.mrb[0].mxu0 %v39
  %v501 = vpop.f32.mrb[0].mxu0
  %v502 = vadd.f32 %v340, %v501
  %v503 = vpop.f32.mrb[0].mxu0
  %504 = vmatprep.mubr.f32.mxu0 %v47
  %505 = vmatmul.mubr.f32.gmra.mrb[0].mxu0 %v46
  %v506 = vpop.f32.mrb[0].mxu0
  %v507 = vadd.f32 %v345, %v506
  %v508 = vpop.f32.mrb[0].mxu0
  %509 = vmatprep.mubr.f32.mxu0 %v54
  %510 = vmatmul.mubr.f32.gmra.mrb[0].mxu0 %v53
  %v511 = vpop.f32.mrb[0].mxu0
  %v512 = vadd.f32 %v350, %v511
  %v513 = vpop.f32.mrb[0].mxu0
  %514 = vmatprep.mubr.f32.mxu0 %v61
  %515 = vmatmul.mubr.f32.gmra.mrb[0].mxu0 %v60
  %v516 = vpop.f32.mrb[0].mxu0
  %v517 = vadd.f32 %v355, %v516
  %v518 = vpop.f32.mrb[0].mxu0
  %519 = vmatprep.mubr.f32.mxu0 %v68
  %520 = vmatmul.mubr.f32.gmra.mrb[0].mxu0 %v67
  %v521 = vpop.f32.mrb[0].mxu0
  %v522 = vadd.f32 %v360, %v521
  %v523 = vpop.f32.mrb[0].mxu0
  %524 = vmatprep.mubr.f32.mxu0 %v75
  %525 = vmatmul.mubr.f32.gmra.mrb[0].mxu0 %v74
  %v526 = vpop.f32.mrb[0].mxu0
  %v527 = vadd.f32 %v365, %v526
  %v528 = vpop.f32.mrb[0].mxu0
  %529 = vmatprep.mubr.f32.mxu0 %v82
  %530 = vmatmul.mubr.f32.gmra.mrb[0].mxu0 %v81
  %v531 = vpop.f32.mrb[0].mxu0
  %v532 = vadd.f32 %v370, %v531
  %v533 = vpop.f32.mrb[0].mxu0
  %534 = vmatprep.mubr.f32.mxu0 %v89
  %535 = vmatmul.mubr.f32.gmra.mrb[0].mxu0 %v88
  %v536 = vpop.f32.mrb[0].mxu0
  %v537 = vadd.f32 %v375, %v536
  %v538 = vpop.f32.mrb[0].mxu0
  %539 = vmatprep.mubr.f32.mxu0 %v96
  %540 = vmatmul.mubr.f32.gmra.mrb[0].mxu0 %v95
  %v541 = vpop.f32.mrb[0].mxu0
  %v542 = vadd.f32 %v380, %v541
  %v543 = vpop.f32.mrb[0].mxu0
  %544 = vmatprep.mubr.f32.mxu0 %v103
  %545 = vmatmul.mubr.f32.gmra.mrb[0].mxu0 %v102
  %v546 = vpop.f32.mrb[0].mxu0
  %v547 = vadd.f32 %v385, %v546
  %v548 = vpop.f32.mrb[0].mxu0
  %549 = vmatprep.mubr.f32.mxu0 %v110
  %550 = vmatmul.mubr.f32.gmra.mrb[0].mxu0 %v109
  %v551 = vpop.f32.mrb[0].mxu0
  %v552 = vadd.f32 %v390, %v551
  %v553 = vpop.f32.mrb[0].mxu0
  %554 = vdwg.mxu0
  %555 = vmatprep.subr.mxu0 0.0
  %556 = vmatpush1.msra.mxu0 %v160
  %557 = vmatprep.subr.mxu0 0.0
  %558 = vmatpush1.msra.mxu0 %v161
  %559 = vmatprep.subr.mxu0 0.0
  %560 = vmatpush1.msra.mxu0 %v162
  %561 = vmatprep.subr.mxu0 0.0
  %562 = vmatpush1.msra.mxu0 %v163
  %563 = vmatprep.subr.mxu0 0.0
  %564 = vmatpush1.msra.mxu0 %v164
  %565 = vmatprep.subr.mxu0 0.0
  %566 = vmatpush1.msra.mxu0 %v165
  %567 = vmatprep.subr.mxu0 0.0
  %568 = vmatpush1.msra.mxu0 %v166
  %569 = vmatprep.subr.mxu0 0.0
  %570 = vmatpush1.msra.mxu0 %v167
  %571 = vmatprep.subr.mxu0 0.0
  %572 = vmatpush1.msra.mxu0 %v168
  %573 = vmatprep.subr.mxu0 0.0
  %574 = vmatpush1.msra.mxu0 %v169
  %575 = vmatprep.subr.mxu0 0.0
  %576 = vmatpush1.msra.mxu0 %v170
  %577 = vmatprep.subr.mxu0 0.0
  %578 = vmatpush1.msra.mxu0 %v171
  %579 = vmatprep.subr.mxu0 0.0
  %580 = vmatpush1.msra.mxu0 %v172
  %581 = vmatprep.subr.mxu0 0.0
  %582 = vmatpush1.msra.mxu0 %v173
  %583 = vmatprep.subr.mxu0 0.0
  %584 = vmatpush1.msra.mxu0 %v174
  %585 = vmatprep.subr.mxu0 0.0
  %586 = vmatpush1.msra.mxu0 %v175
  %587 = vmatprep.subr.mxu0 0.0
  %588 = vmatpush1.msra.mxu0 %v176
  %589 = vmatprep.subr.mxu0 0.0
  %590 = vmatpush1.msra.mxu0 %v177
  %591 = vmatprep.subr.mxu0 0.0
  %592 = vmatpush1.msra.mxu0 %v178
  %593 = vmatprep.subr.mxu0 0.0
  %594 = vmatpush1.msra.mxu0 %v179
  %595 = vmatprep.subr.mxu0 0.0
  %596 = vmatpush1.msra.mxu0 %v180
  %597 = vmatprep.subr.mxu0 0.0
  %598 = vmatpush1.msra.mxu0 %v181
  %599 = vmatprep.subr.mxu0 0.0
  %600 = vmatpush1.msra.mxu0 %v182
  %601 = vmatprep.subr.mxu0 0.0
  %602 = vmatpush1.msra.mxu0 %v183
  %603 = vmatprep.subr.mxu0 0.0
  %604 = vmatpush1.msra.mxu0 %v184
  %605 = vmatprep.subr.mxu0 0.0
  %606 = vmatpush1.msra.mxu0 %v185
  %607 = vmatprep.subr.mxu0 0.0
  %608 = vmatpush1.msra.mxu0 %v186
  %609 = vmatprep.subr.mxu0 0.0
  %610 = vmatpush1.msra.mxu0 %v187
  %611 = vmatprep.subr.mxu0 0.0
  %612 = vmatpush1.msra.mxu0 %v188
  %613 = vmatprep.subr.mxu0 0.0
  %614 = vmatpush1.msra.mxu0 %v189
  %615 = vmatprep.subr.mxu0 0.0
  %616 = vmatpush1.msra.mxu0 %v190
  %617 = vmatprep.subr.mxu0 0.0
  %618 = vmatpush1.msra.mxu0 %v191
  %619 = vmatprep.mubr.f32.mxu0 %v35
  %620 = vmatmul.mubr.f32.gmra.mrb[0].mxu0 %v34
  %v621 = vpop.f32.mrb[0].mxu0
  %v622 = vadd.f32 %v497, %v621
  %v623 = vpop.f32.mrb[0].mxu0
  %624 = vmatprep.mubr.f32.mxu0 %v42
  %625 = vmatmul.mubr.f32.gmra.mrb[0].mxu0 %v41
  %v626 = vpop.f32.mrb[0].mxu0
  %v627 = vadd.f32 %v502, %v626
  %v628 = vpop.f32.mrb[0].mxu0
  %629 = vmatprep.mubr.f32.mxu0 %v49
  %630 = vmatmul.mubr.f32.gmra.mrb[0].mxu0 %v48
  %v631 = vpop.f32.mrb[0].mxu0
  %v632 = vadd.f32 %v507, %v631
  %v633 = vpop.f32.mrb[0].mxu0
  %634 = vmatprep.mubr.f32.mxu0 %v56
  %635 = vmatmul.mubr.f32.gmra.mrb[0].mxu0 %v55
  %v636 = vpop.f32.mrb[0].mxu0
  %v637 = vadd.f32 %v512, %v636
  %v638 = vpop.f32.mrb[0].mxu0
  %639 = vmatprep.mubr.f32.mxu0 %v63
  %640 = vmatmul.mubr.f32.gmra.mrb[0].mxu0 %v62
  %v641 = vpop.f32.mrb[0].mxu0
  %v642 = vadd.f32 %v517, %v641
  %v643 = vpop.f32.mrb[0].mxu0
  %644 = vmatprep.mubr.f32.mxu0 %v70
  %645 = vmatmul.mubr.f32.gmra.mrb[0].mxu0 %v69
  %v646 = vpop.f32.mrb[0].mxu0
  %v647 = vadd.f32 %v522, %v646
  %v648 = vpop.f32.mrb[0].mxu0
  %649 = vmatprep.mubr.f32.mxu0 %v77
  %650 = vmatmul.mubr.f32.gmra.mrb[0].mxu0 %v76
  %v651 = vpop.f32.mrb[0].mxu0
  %v652 = vadd.f32 %v527, %v651
  %v653 = vpop.f32.mrb[0].mxu0
  %654 = vmatprep.mubr.f32.mxu0 %v84
  %655 = vmatmul.mubr.f32.gmra.mrb[0].mxu0 %v83
  %v656 = vpop.f32.mrb[0].mxu0
  %v657 = vadd.f32 %v532, %v656
  %v658 = vpop.f32.mrb[0].mxu0
  %659 = vmatprep.mubr.f32.mxu0 %v91
  %660 = vmatmul.mubr.f32.gmra.mrb[0].mxu0 %v90
  %v661 = vpop.f32.mrb[0].mxu0
  %v662 = vadd.f32 %v537, %v661
  %v663 = vpop.f32.mrb[0].mxu0
  %664 = vmatprep.mubr.f32.mxu0 %v98
  %665 = vmatmul.mubr.f32.gmra.mrb[0].mxu0 %v97
  %v666 = vpop.f32.mrb[0].mxu0
  %v667 = vadd.f32 %v542, %v666
  %v668 = vpop.f32.mrb[0].mxu0
  %669 = vmatprep.mubr.f32.mxu0 %v105
  %670 = vmatmul.mubr.f32.gmra.mrb[0].mxu0 %v104
  %v671 = vpop.f32.mrb[0].mxu0
  %v672 = vadd.f32 %v547, %v671
  %v673 = vpop.f32.mrb[0].mxu0
  %674 = vmatprep.mubr.f32.mxu0 %v112
  %675 = vmatmul.mubr.f32.gmra.mrb[0].mxu0 %v111
  %v676 = vpop.f32.mrb[0].mxu0
  %v677 = vadd.f32 %v552, %v676
  %v678 = vpop.f32.mrb[0].mxu0
  %679 = vdwg.mxu0
  %680 = vmatprep.subr.mxu0 0.0
  %681 = vmatpush1.msra.mxu0 %v192
  %682 = vmatprep.subr.mxu0 0.0
  %683 = vmatpush1.msra.mxu0 %v193
  %684 = vmatprep.subr.mxu0 0.0
  %685 = vmatpush1.msra.mxu0 %v194
  %686 = vmatprep.subr.mxu0 0.0
  %687 = vmatpush1.msra.mxu0 %v195
  %688 = vmatprep.subr.mxu0 0.0
  %689 = vmatpush1.msra.mxu0 %v196
  %690 = vmatprep.subr.mxu0 0.0
  %691 = vmatpush1.msra.mxu0 %v197
  %692 = vmatprep.subr.mxu0 0.0
  %693 = vmatpush1.msra.mxu0 %v198
  %694 = vmatprep.subr.mxu0 0.0
  %695 = vmatpush1.msra.mxu0 %v199
  %696 = vmatprep.subr.mxu0 0.0
  %697 = vmatpush1.msra.mxu0 %v200
  %698 = vmatprep.subr.mxu0 0.0
  %699 = vmatpush1.msra.mxu0 %v201
  %700 = vmatprep.subr.mxu0 0.0
  %701 = vmatpush1.msra.mxu0 %v202
  %702 = vmatprep.subr.mxu0 0.0
  %703 = vmatpush1.msra.mxu0 %v203
  %704 = vmatprep.subr.mxu0 0.0
  %705 = vmatpush1.msra.mxu0 %v204
  %706 = vmatprep.subr.mxu0 0.0
  %707 = vmatpush1.msra.mxu0 %v205
  %708 = vmatprep.subr.mxu0 0.0
  %709 = vmatpush1.msra.mxu0 %v206
  %710 = vmatprep.subr.mxu0 0.0
  %711 = vmatpush1.msra.mxu0 %v207
  %712 = vmatprep.subr.mxu0 0.0
  %713 = vmatpush1.msra.mxu0 %v208
  %714 = vmatprep.subr.mxu0 0.0
  %715 = vmatpush1.msra.mxu0 %v209
  %716 = vmatprep.subr.mxu0 0.0
  %717 = vmatpush1.msra.mxu0 %v210
  %718 = vmatprep.subr.mxu0 0.0
  %719 = vmatpush1.msra.mxu0 %v211
  %720 = vmatprep.subr.mxu0 0.0
  %721 = vmatpush1.msra.mxu0 %v212
  %722 = vmatprep.subr.mxu0 0.0
  %723 = vmatpush1.msra.mxu0 %v213
  %724 = vmatprep.subr.mxu0 0.0
  %725 = vmatpush1.msra.mxu0 %v214
  %726 = vmatprep.subr.mxu0 0.0
  %727 = vmatpush1.msra.mxu0 %v215
  %728 = vmatprep.subr.mxu0 0.0
  %729 = vmatpush1.msra.mxu0 %v216
  %730 = vmatprep.subr.mxu0 0.0
  %731 = vmatpush1.msra.mxu0 %v217
  %732 = vmatprep.subr.mxu0 0.0
  %733 = vmatpush1.msra.mxu0 %v218
  %734 = vmatprep.subr.mxu0 0.0
  %735 = vmatpush1.msra.mxu0 %v219
  %736 = vmatprep.subr.mxu0 0.0
  %737 = vmatpush1.msra.mxu0 %v220
  %738 = vmatprep.subr.mxu0 0.0
  %739 = vmatpush1.msra.mxu0 %v221
  %740 = vmatprep.subr.mxu0 0.0
  %741 = vmatpush1.msra.mxu0 %v222
  %742 = vmatprep.subr.mxu0 0.0
  %743 = vmatpush1.msra.mxu0 %v223
  %744 = vmatprep.mubr.f32.mxu0 %v37
  %745 = vmatmul.mubr.f32.gmra.mrb[0].mxu0 %v36
  %v746 = vpop.f32.mrb[0].mxu0
  %v747 = vadd.f32 %v622, %v746
  %v748 = vpop.f32.mrb[0].mxu0
  %749 = vmatprep.mubr.f32.mxu0 %v44
  %750 = vmatmul.mubr.f32.gmra.mrb[0].mxu0 %v43
  %v751 = vpop.f32.mrb[0].mxu0
  %v752 = vadd.f32 %v627, %v751
  %v753 = vpop.f32.mrb[0].mxu0
  %754 = vmatprep.mubr.f32.mxu0 %v51
  %755 = vmatmul.mubr.f32.gmra.mrb[0].mxu0 %v50
  %v756 = vpop.f32.mrb[0].mxu0
  %v757 = vadd.f32 %v632, %v756
  %v758 = vpop.f32.mrb[0].mxu0
  %759 = vmatprep.mubr.f32.mxu0 %v58
  %760 = vmatmul.mubr.f32.gmra.mrb[0].mxu0 %v57
  %v761 = vpop.f32.mrb[0].mxu0
  %v762 = vadd.f32 %v637, %v761
  %v763 = vpop.f32.mrb[0].mxu0
  %764 = vmatprep.mubr.f32.mxu0 %v65
  %765 = vmatmul.mubr.f32.gmra.mrb[0].mxu0 %v64
  %v766 = vpop.f32.mrb[0].mxu0
  %v767 = vadd.f32 %v642, %v766
  %v768 = vpop.f32.mrb[0].mxu0
  %769 = vmatprep.mubr.f32.mxu0 %v72
  %770 = vmatmul.mubr.f32.gmra.mrb[0].mxu0 %v71
  %v771 = vpop.f32.mrb[0].mxu0
  %v772 = vadd.f32 %v647, %v771
  %v773 = vpop.f32.mrb[0].mxu0
  %774 = vmatprep.mubr.f32.mxu0 %v79
  %775 = vmatmul.mubr.f32.gmra.mrb[0].mxu0 %v78
  %v776 = vpop.f32.mrb[0].mxu0
  %v777 = vadd.f32 %v652, %v776
  %v778 = vpop.f32.mrb[0].mxu0
  %779 = vmatprep.mubr.f32.mxu0 %v86
  %780 = vmatmul.mubr.f32.gmra.mrb[0].mxu0 %v85
  %v781 = vpop.f32.mrb[0].mxu0
  %v782 = vadd.f32 %v657, %v781
  %v783 = vpop.f32.mrb[0].mxu0
  %784 = vmatprep.mubr.f32.mxu0 %v93
  %785 = vmatmul.mubr.f32.gmra.mrb[0].mxu0 %v92
  %v786 = vpop.f32.mrb[0].mxu0
  %v787 = vadd.f32 %v662, %v786
  %v788 = vpop.f32.mrb[0].mxu0
  %789 = vmatprep.mubr.f32.mxu0 %v100
  %790 = vmatmul.mubr.f32.gmra.mrb[0].mxu0 %v99
  %v791 = vpop.f32.mrb[0].mxu0
  %v792 = vadd.f32 %v667, %v791
  %v793 = vpop.f32.mrb[0].mxu0
  %794 = vmatprep.mubr.f32.mxu0 %v107
  %795 = vmatmul.mubr.f32.gmra.mrb[0].mxu0 %v106
  %v796 = vpop.f32.mrb[0].mxu0
  %v797 = vadd.f32 %v672, %v796
  %v798 = vpop.f32.mrb[0].mxu0
  %799 = vmatprep.mubr.f32.mxu0 %v114
  %800 = vmatmul.mubr.f32.gmra.mrb[0].mxu0 %v113
  %v801 = vpop.f32.mrb[0].mxu0
  %v802 = vadd.f32 %v677, %v801
  %v803 = vpop.f32.mrb[0].mxu0
  %804 = vdwg.mxu0
  %805 = vmatprep.subr.mxu0 0.0
  %806 = vmatpush1.msra.mxu0 %v224
  %807 = vmatprep.subr.mxu0 0.0
  %808 = vmatpush1.msra.mxu0 %v225
  %809 = vmatprep.subr.mxu0 0.0
  %810 = vmatpush1.msra.mxu0 0.0
  %811 = vmatprep.subr.mxu0 0.0
  %812 = vmatpush1.msra.mxu0 0.0
  %813 = vmatprep.subr.mxu0 0.0
  %814 = vmatpush1.msra.mxu0 0.0
  %815 = vmatprep.subr.mxu0 0.0
  %816 = vmatpush1.msra.mxu0 0.0
  %817 = vmatprep.subr.mxu0 0.0
  %818 = vmatpush1.msra.mxu0 0.0
  %819 = vmatprep.subr.mxu0 0.0
  %820 = vmatpush1.msra.mxu0 0.0
  %821 = vmatprep.subr.mxu0 0.0
  %822 = vmatpush1.msra.mxu0 0.0
  %823 = vmatprep.subr.mxu0 0.0
  %824 = vmatpush1.msra.mxu0 0.0
  %825 = vmatprep.subr.mxu0 0.0
  %826 = vmatpush1.msra.mxu0 0.0
  %827 = vmatprep.subr.mxu0 0.0
  %828 = vmatpush1.msra.mxu0 0.0
  %829 = vmatprep.subr.mxu0 0.0
  %830 = vmatpush1.msra.mxu0 0.0
  %831 = vmatprep.subr.mxu0 0.0
  %832 = vmatpush1.msra.mxu0 0.0
  %833 = vmatprep.subr.mxu0 0.0
  %834 = vmatpush1.msra.mxu0 0.0
  %835 = vmatprep.subr.mxu0 0.0
  %836 = vmatpush1.msra.mxu0 0.0
  %837 = vmatprep.subr.mxu0 0.0
  %838 = vmatpush1.msra.mxu0 0.0
  %839 = vmatprep.subr.mxu0 0.0
  %840 = vmatpush1.msra.mxu0 0.0
  %841 = vmatprep.subr.mxu0 0.0
  %842 = vmatpush1.msra.mxu0 0.0
  %843 = vmatprep.subr.mxu0 0.0
  %844 = vmatpush1.msra.mxu0 0.0
  %845 = vmatprep.subr.mxu0 0.0
  %846 = vmatpush1.msra.mxu0 0.0
  %847 = vmatprep.subr.mxu0 0.0
  %848 = vmatpush1.msra.mxu0 0.0
  %849 = vmatprep.subr.mxu0 0.0
  %850 = vmatpush1.msra.mxu0 0.0
  %851 = vmatprep.subr.mxu0 0.0
  %852 = vmatpush1.msra.mxu0 0.0
  %853 = vmatprep.subr.mxu0 0.0
  %854 = vmatpush1.msra.mxu0 0.0
  %855 = vmatprep.subr.mxu0 0.0
  %856 = vmatpush1.msra.mxu0 0.0
  %857 = vmatprep.subr.mxu0 0.0
  %858 = vmatpush1.msra.mxu0 0.0
  %859 = vmatprep.subr.mxu0 0.0
  %860 = vmatpush1.msra.mxu0 0.0
  %861 = vmatprep.subr.mxu0 0.0
  %862 = vmatpush1.msra.mxu0 0.0
  %863 = vmatprep.subr.mxu0 0.0
  %864 = vmatpush1.msra.mxu0 0.0
  %865 = vmatprep.subr.mxu0 0.0
  %866 = vmatpush1.msra.mxu0 0.0
  %867 = vmatprep.subr.mxu0 0.0
  %868 = vmatpush1.msra.mxu0 0.0
  %869 = vmatprep.mubr.f32.mxu0 0.0
  %870 = vmatmul.mubr.f32.gmra.mrb[0].mxu0 %v395
  %v871 = vpop.f32.mrb[0].mxu0
  %v872 = vadd.f32 %v747, %v871
  %v873 = vpop.f32.mrb[0].mxu0
  %874 = vmatprep.mubr.f32.mxu0 0.0
  %875 = vmatmul.mubr.f32.gmra.mrb[0].mxu0 %v398
  %v876 = vpop.f32.mrb[0].mxu0
  %v877 = vadd.f32 %v752, %v876
  %v878 = vpop.f32.mrb[0].mxu0
  %879 = vmatprep.mubr.f32.mxu0 0.0
  %880 = vmatmul.mubr.f32.gmra.mrb[0].mxu0 %v401
  %v881 = vpop.f32.mrb[0].mxu0
  %v882 = vadd.f32 %v757, %v881
  %v883 = vpop.f32.mrb[0].mxu0
  %884 = vmatprep.mubr.f32.mxu0 0.0
  %885 = vmatmul.mubr.f32.gmra.mrb[0].mxu0 %v404
  %v886 = vpop.f32.mrb[0].mxu0
  %v887 = vadd.f32 %v762, %v886
  %v888 = vpop.f32.mrb[0].mxu0
  %889 = vmatprep.mubr.f32.mxu0 0.0
  %890 = vmatmul.mubr.f32.gmra.mrb[0].mxu0 %v407
  %v891 = vpop.f32.mrb[0].mxu0
  %v892 = vadd.f32 %v767, %v891
  %v893 = vpop.f32.mrb[0].mxu0
  %894 = vmatprep.mubr.f32.mxu0 0.0
  %895 = vmatmul.mubr.f32.gmra.mrb[0].mxu0 %v410
  %v896 = vpop.f32.mrb[0].mxu0
  %v897 = vadd.f32 %v772, %v896
  %v898 = vpop.f32.mrb[0].mxu0
  %899 = vmatprep.mubr.f32.mxu0 0.0
  %900 = vmatmul.mubr.f32.gmra.mrb[0].mxu0 %v413
  %v901 = vpop.f32.mrb[0].mxu0
  %v902 = vadd.f32 %v777, %v901
  %v903 = vpop.f32.mrb[0].mxu0
  %904 = vmatprep.mubr.f32.mxu0 0.0
  %905 = vmatmul.mubr.f32.gmra.mrb[0].mxu0 %v416
  %v906 = vpop.f32.mrb[0].mxu0
  %v907 = vadd.f32 %v782, %v906
  %v908 = vpop.f32.mrb[0].mxu0
  %909 = vmatprep.mubr.f32.mxu0 0.0
  %910 = vmatmul.mubr.f32.gmra.mrb[0].mxu0 %v419
  %v911 = vpop.f32.mrb[0].mxu0
  %v912 = vadd.f32 %v787, %v911
  %v913 = vpop.f32.mrb[0].mxu0
  %914 = vmatprep.mubr.f32.mxu0 0.0
  %915 = vmatmul.mubr.f32.gmra.mrb[0].mxu0 %v422
  %v916 = vpop.f32.mrb[0].mxu0
  %v917 = vadd.f32 %v792, %v916
  %v918 = vpop.f32.mrb[0].mxu0
  %919 = vmatprep.mubr.f32.mxu0 0.0
  %920 = vmatmul.mubr.f32.gmra.mrb[0].mxu0 %v425
  %v921 = vpop.f32.mrb[0].mxu0
  %v922 = vadd.f32 %v797, %v921
  %v923 = vpop.f32.mrb[0].mxu0
  %924 = vmatprep.mubr.f32.mxu0 0.0
  %925 = vmatmul.mubr.f32.gmra.mrb[0].mxu0 %v428
  %v926 = vpop.f32.mrb[0].mxu0
  %v927 = vadd.f32 %v802, %v926
  %v928 = vpop.f32.mrb[0].mxu0
  %929 = vdwg.mxu0
  %v930 = vld [vmem:[%s5] sm:$0x1]
  %v932 = vlaneseq
  %v933 = vshrl.u32 %v932, 7
  %v934 = vsub.s32 0, %v933
  %v935 = vrot.slane %v930, %v934
  %v937 = vadd.f32 %v872, %v935
  %v938 = vadd.f32 %v877, %v935
  %v939 = vadd.f32 %v882, %v935
  %v940 = vadd.f32 %v887, %v935
  %v941 = vadd.f32 %v892, %v935
  %v942 = vadd.f32 %v897, %v935
  %v943 = vadd.f32 %v902, %v935
  %v944 = vadd.f32 %v907, %v935
  %v945 = vadd.f32 %v912, %v935
  %v946 = vadd.f32 %v917, %v935
  %v947 = vadd.f32 %v922, %v935
  %v948 = vadd.f32 %v927, %v935
  %949 = vst [vmem:[#allocation2] sm:$0xff] %v937
  %950 = vst [vmem:[#allocation2 + $0x8] sm:$0xff] %v938
  %951 = vst [vmem:[#allocation2 + $0x10] sm:$0xff] %v939
  %952 = vst [vmem:[#allocation2 + $0x18] sm:$0xff] %v940
  %953 = vst [vmem:[#allocation2 + $0x20] sm:$0xff] %v941
  %954 = vst [vmem:[#allocation2 + $0x28] sm:$0xff] %v942
  %955 = vst [vmem:[#allocation2 + $0x30] sm:$0xff] %v943
  %956 = vst [vmem:[#allocation2 + $0x38] sm:$0xff] %v944
  %957 = vst [vmem:[#allocation2 + $0x40] sm:$0xff] %v945
  %958 = vst [vmem:[#allocation2 + $0x48] sm:$0xff] %v946
  %959 = vst [vmem:[#allocation2 + $0x50] sm:$0xff] %v947
  %960 = vst [vmem:[#allocation2 + $0x58] sm:$0xff] %v948
  %v961 = vld [vmem:[%s4] sm:$0xff]
  %v962 = vld [vmem:[%s4 + $0x8] sm:$0xff]
  %v963 = vld [vmem:[%s4 + $0x10] sm:$0xff]
  %v964 = vld [vmem:[%s4 + $0x18] sm:$0xff]
  %v965 = vld [vmem:[#allocation2] sm:$0xff]
  %vm966 = vcmask 261120
  %v968 = vsel %vm966, 0.0, 0
  %970 = vmatprep.subr.mxu0 0.0
  %971 = vmatpush1.msra.mxu0 %v961
  %972 = vmatprep.subr.mxu0 0.0
  %973 = vmatpush1.msra.mxu0 %v962
  %974 = vmatprep.subr.mxu0 0.0
  %975 = vmatpush1.msra.mxu0 %v963
  %976 = vmatprep.subr.mxu0 0.0
  %977 = vmatpush1.msra.mxu0 %v964
  %978 = vmatprep.subr.mxu0 0.0
  %979 = vmatpush1.msra.mxu0 0.0
  %980 = vmatprep.subr.mxu0 0.0
  %981 = vmatpush1.msra.mxu0 0.0
  %982 = vmatprep.subr.mxu0 0.0
  %983 = vmatpush1.msra.mxu0 0.0
  %984 = vmatprep.subr.mxu0 0.0
  %985 = vmatpush1.msra.mxu0 0.0
  %986 = vmatprep.subr.mxu0 0.0
  %987 = vmatpush1.msra.mxu0 0.0
  %988 = vmatprep.subr.mxu0 0.0
  %989 = vmatpush1.msra.mxu0 0.0
  %990 = vmatprep.subr.mxu0 0.0
  %991 = vmatpush1.msra.mxu0 0.0
  %992 = vmatprep.subr.mxu0 0.0
  %993 = vmatpush1.msra.mxu0 0.0
  %994 = vmatprep.subr.mxu0 0.0
  %995 = vmatpush1.msra.mxu0 0.0
  %996 = vmatprep.subr.mxu0 0.0
  %997 = vmatpush1.msra.mxu0 0.0
  %998 = vmatprep.subr.mxu0 0.0
  %999 = vmatpush1.msra.mxu0 0.0
  %1000 = vmatprep.subr.mxu0 0.0
  %1001 = vmatpush1.msra.mxu0 0.0
  %1002 = vmatprep.subr.mxu0 0.0
  %1003 = vmatpush1.msra.mxu0 0.0
  %1004 = vmatprep.subr.mxu0 0.0
  %1005 = vmatpush1.msra.mxu0 0.0
  %1006 = vmatprep.subr.mxu0 0.0
  %1007 = vmatpush1.msra.mxu0 0.0
  %1008 = vmatprep.subr.mxu0 0.0
  %1009 = vmatpush1.msra.mxu0 0.0
  %1010 = vmatprep.subr.mxu0 0.0
  %1011 = vmatpush1.msra.mxu0 0.0
  %1012 = vmatprep.subr.mxu0 0.0
  %1013 = vmatpush1.msra.mxu0 0.0
  %1014 = vmatprep.subr.mxu0 0.0
  %1015 = vmatpush1.msra.mxu0 0.0
  %1016 = vmatprep.subr.mxu0 0.0
  %1017 = vmatpush1.msra.mxu0 0.0
  %1018 = vmatprep.subr.mxu0 0.0
  %1019 = vmatpush1.msra.mxu0 0.0
  %1020 = vmatprep.subr.mxu0 0.0
  %1021 = vmatpush1.msra.mxu0 0.0
  %1022 = vmatprep.subr.mxu0 0.0
  %1023 = vmatpush1.msra.mxu0 0.0
  %1024 = vmatprep.subr.mxu0 0.0
  %1025 = vmatpush1.msra.mxu0 0.0
  %1026 = vmatprep.subr.mxu0 0.0
  %1027 = vmatpush1.msra.mxu0 0.0
  %1028 = vmatprep.subr.mxu0 0.0
  %1029 = vmatpush1.msra.mxu0 0.0
  %1030 = vmatprep.subr.mxu0 0.0
  %1031 = vmatpush1.msra.mxu0 0.0
  %1032 = vmatprep.subr.mxu0 0.0
  %1033 = vmatpush1.msra.mxu0 0.0
  %1034 = vmatprep.mubr.f32.mxu0 0.0
  %1035 = vmatmul.mubr.f32.gmra.mrb[0].mxu0 %v968
  %v1036 = vpop.f32.mrb[0].mxu0
  %v1037 = vadd.f32 0.0, %v1036
  %v1038 = vpop.f32.mrb[0].mxu0
  %1039 = vdwg.mxu0
  %v1040 = vadd.f32 %v965, %v1037
  %v1041 = vsub.f32 0.0, %v1040
  %v1042 = vmul.f32 %v1041, 1.442695
  %v1043 = vpow.pop %v1042
  %v1044 = vadd.f32 %v1043, 1.0
  %v1045 = vrcp.pop %v1044
  %v1046 = vmul.f32 1.0, %v1045
  %v1047 = vtanh.pop %v1040
  %v1048 = vmul.f32 %v1046, 0.0
  %1050 = vrot.lane.b32.xlu0 %v1047, 64
  %v1051 = vpop.permute.xlu0 %1050
  %v1053 = vmul.f32 %v1046, %v1051
  %1055 = vrot.lane.b32.xlu0 %v1053, 32
  %v1056 = vpop.permute.xlu0 %1055
  %v1058 = vadd.f32 %v1048, %v1056
  %v1059 = vtanh.pop %v1058
  %1061 = vrot.lane.b32.xlu0 %v1059, 64
  %v1062 = vpop.permute.xlu0 %1061
  %v1064 = vmul.f32 %v1046, %v1062
  %1066 = vrot.lane.b32.xlu0 %v1064, 32
  %v1067 = vpop.permute.xlu0 %1066
  %1069 = vst.msk [vmem:[#allocation3] sm:$0xff] %vm966, %v1067
  %s1070 = scalar_lea.vmem [#allocation2], 8
  %v1071 = vld [vmem:[%s1070] sm:$0xff]
  %v1072 = vsel %vm966, %v1067, 0
  %1074 = vmatprep.subr.mxu0 0.0
  %1075 = vmatpush1.msra.mxu0 %v961
  %1076 = vmatprep.subr.mxu0 0.0
  %1077 = vmatpush1.msra.mxu0 %v962
  %1078 = vmatprep.subr.mxu0 0.0
  %1079 = vmatpush1.msra.mxu0 %v963
  %1080 = vmatprep.subr.mxu0 0.0
  %1081 = vmatpush1.msra.mxu0 %v964
  %1082 = vmatprep.subr.mxu0 0.0
  %1083 = vmatpush1.msra.mxu0 0.0
  %1084 = vmatprep.subr.mxu0 0.0
  %1085 = vmatpush1.msra.mxu0 0.0
  %1086 = vmatprep.subr.mxu0 0.0
  %1087 = vmatpush1.msra.mxu0 0.0
  %1088 = vmatprep.subr.mxu0 0.0
  %1089 = vmatpush1.msra.mxu0 0.0
  %1090 = vmatprep.subr.mxu0 0.0
  %1091 = vmatpush1.msra.mxu0 0.0
  %1092 = vmatprep.subr.mxu0 0.0
  %1093 = vmatpush1.msra.mxu0 0.0
  %1094 = vmatprep.subr.mxu0 0.0
  %1095 = vmatpush1.msra.mxu0 0.0
  %1096 = vmatprep.subr.mxu0 0.0
  %1097 = vmatpush1.msra.mxu0 0.0
  %1098 = vmatprep.subr.mxu0 0.0
  %1099 = vmatpush1.msra.mxu0 0.0
  %1100 = vmatprep.subr.mxu0 0.0
  %1101 = vmatpush1.msra.mxu0 0.0
  %1102 = vmatprep.subr.mxu0 0.0
  %1103 = vmatpush1.msra.mxu0 0.0
  %1104 = vmatprep.subr.mxu0 0.0
  %1105 = vmatpush1.msra.mxu0 0.0
  %1106 = vmatprep.subr.mxu0 0.0
  %1107 = vmatpush1.msra.mxu0 0.0
  %1108 = vmatprep.subr.mxu0 0.0
  %1109 = vmatpush1.msra.mxu0 0.0
  %1110 = vmatprep.subr.mxu0 0.0
  %1111 = vmatpush1.msra.mxu0 0.0
  %1112 = vmatprep.subr.mxu0 0.0
  %1113 = vmatpush1.msra.mxu0 0.0
  %1114 = vmatprep.subr.mxu0 0.0
  %1115 = vmatpush1.msra.mxu0 0.0
  %1116 = vmatprep.subr.mxu0 0.0
  %1117 = vmatpush1.msra.mxu0 0.0
  %1118 = vmatprep.subr.mxu0 0.0
  %1119 = vmatpush1.msra.mxu0 0.0
  %1120 = vmatprep.subr.mxu0 0.0
  %1121 = vmatpush1.msra.mxu0 0.0
  %1122 = vmatprep.subr.mxu0 0.0
  %1123 = vmatpush1.msra.mxu0 0.0
  %1124 = vmatprep.subr.mxu0 0.0
  %1125 = vmatpush1.msra.mxu0 0.0
  %1126 = vmatprep.subr.mxu0 0.0
  %1127 = vmatpush1.msra.mxu0 0.0
  %1128 = vmatprep.subr.mxu0 0.0
  %1129 = vmatpush1.msra.mxu0 0.0
  %1130 = vmatprep.subr.mxu0 0.0
  %1131 = vmatpush1.msra.mxu0 0.0
  %1132 = vmatprep.subr.mxu0 0.0
  %1133 = vmatpush1.msra.mxu0 0.0
  %1134 = vmatprep.subr.mxu0 0.0
  %1135 = vmatpush1.msra.mxu0 0.0
  %1136 = vmatprep.subr.mxu0 0.0
  %1137 = vmatpush1.msra.mxu0 0.0
  %1138 = vmatprep.mubr.f32.mxu0 0.0
  %1139 = vmatmul.mubr.f32.gmra.mrb[0].mxu0 %v1072
  %v1140 = vpop.f32.mrb[0].mxu0
  %v1141 = vadd.f32 0.0, %v1140
  %v1142 = vpop.f32.mrb[0].mxu0
  %1143 = vdwg.mxu0
  %v1144 = vadd.f32 %v1071, %v1141
  %v1145 = vsub.f32 0.0, %v1144
  %v1146 = vmul.f32 %v1145, 1.442695
  %v1147 = vpow.pop %v1146
  %v1148 = vadd.f32 %v1147, 1.0
  %v1149 = vrcp.pop %v1148
  %v1150 = vmul.f32 1.0, %v1149
  %v1151 = vtanh.pop %v1144
  %v1152 = vmul.f32 %v1150, %v1058
  %1154 = vrot.lane.b32.xlu0 %v1151, 64
  %v1155 = vpop.permute.xlu0 %1154
  %v1157 = vmul.f32 %v1150, %v1155
  %1159 = vrot.lane.b32.xlu0 %v1157, 32
  %v1160 = vpop.permute.xlu0 %1159
  %v1162 = vadd.f32 %v1152, %v1160
  %v1163 = vtanh.pop %v1162
  %1165 = vrot.lane.b32.xlu0 %v1163, 64
  %v1166 = vpop.permute.xlu0 %1165
  %v1168 = vmul.f32 %v1150, %v1166
  %1170 = vrot.lane.b32.xlu0 %v1168, 32
  %v1171 = vpop.permute.xlu0 %1170
  %s1173 = scalar_lea.vmem [#allocation3], 8
  %1174 = vst.msk [vmem:[%s1173] sm:$0xff] %vm966, %v1171
  %s1175 = scalar_lea.vmem [#allocation2], 16
  %v1176 = vld [vmem:[%s1175] sm:$0xff]
  %v1177 = vsel %vm966, %v1171, 0
  %1179 = vmatprep.subr.mxu0 0.0
  %1180 = vmatpush1.msra.mxu0 %v961
  %1181 = vmatprep.subr.mxu0 0.0
  %1182 = vmatpush1.msra.mxu0 %v962
  %1183 = vmatprep.subr.mxu0 0.0
  %1184 = vmatpush1.msra.mxu0 %v963
  %1185 = vmatprep.subr.mxu0 0.0
  %1186 = vmatpush1.msra.mxu0 %v964
  %1187 = vmatprep.subr.mxu0 0.0
  %1188 = vmatpush1.msra.mxu0 0.0
  %1189 = vmatprep.subr.mxu0 0.0
  %1190 = vmatpush1.msra.mxu0 0.0
  %1191 = vmatprep.subr.mxu0 0.0
  %1192 = vmatpush1.msra.mxu0 0.0
  %1193 = vmatprep.subr.mxu0 0.0
  %1194 = vmatpush1.msra.mxu0 0.0
  %1195 = vmatprep.subr.mxu0 0.0
  %1196 = vmatpush1.msra.mxu0 0.0
  %1197 = vmatprep.subr.mxu0 0.0
  %1198 = vmatpush1.msra.mxu0 0.0
  %1199 = vmatprep.subr.mxu0 0.0
  %1200 = vmatpush1.msra.mxu0 0.0
  %1201 = vmatprep.subr.mxu0 0.0
  %1202 = vmatpush1.msra.mxu0 0.0
  %1203 = vmatprep.subr.mxu0 0.0
  %1204 = vmatpush1.msra.mxu0 0.0
  %1205 = vmatprep.subr.mxu0 0.0
  %1206 = vmatpush1.msra.mxu0 0.0
  %1207 = vmatprep.subr.mxu0 0.0
  %1208 = vmatpush1.msra.mxu0 0.0
  %1209 = vmatprep.subr.mxu0 0.0
  %1210 = vmatpush1.msra.mxu0 0.0
  %1211 = vmatprep.subr.mxu0 0.0
  %1212 = vmatpush1.msra.mxu0 0.0
  %1213 = vmatprep.subr.mxu0 0.0
  %1214 = vmatpush1.msra.mxu0 0.0
  %1215 = vmatprep.subr.mxu0 0.0
  %1216 = vmatpush1.msra.mxu0 0.0
  %1217 = vmatprep.subr.mxu0 0.0
  %1218 = vmatpush1.msra.mxu0 0.0
  %1219 = vmatprep.subr.mxu0 0.0
  %1220 = vmatpush1.msra.mxu0 0.0
  %1221 = vmatprep.subr.mxu0 0.0
  %1222 = vmatpush1.msra.mxu0 0.0
  %1223 = vmatprep.subr.mxu0 0.0
  %1224 = vmatpush1.msra.mxu0 0.0
  %1225 = vmatprep.subr.mxu0 0.0
  %1226 = vmatpush1.msra.mxu0 0.0
  %1227 = vmatprep.subr.mxu0 0.0
  %1228 = vmatpush1.msra.mxu0 0.0
  %1229 = vmatprep.subr.mxu0 0.0
  %1230 = vmatpush1.msra.mxu0 0.0
  %1231 = vmatprep.subr.mxu0 0.0
  %1232 = vmatpush1.msra.mxu0 0.0
  %1233 = vmatprep.subr.mxu0 0.0
  %1234 = vmatpush1.msra.mxu0 0.0
  %1235 = vmatprep.subr.mxu0 0.0
  %1236 = vmatpush1.msra.mxu0 0.0
  %1237 = vmatprep.subr.mxu0 0.0
  %1238 = vmatpush1.msra.mxu0 0.0
  %1239 = vmatprep.subr.mxu0 0.0
  %1240 = vmatpush1.msra.mxu0 0.0
  %1241 = vmatprep.subr.mxu0 0.0
  %1242 = vmatpush1.msra.mxu0 0.0
  %1243 = vmatprep.mubr.f32.mxu0 0.0
  %1244 = vmatmul.mubr.f32.gmra.mrb[0].mxu0 %v1177
  %v1245 = vpop.f32.mrb[0].mxu0
  %v1246 = vadd.f32 0.0, %v1245
  %v1247 = vpop.f32.mrb[0].mxu0
  %1248 = vdwg.mxu0
  %v1249 = vadd.f32 %v1176, %v1246
  %v1250 = vsub.f32 0.0, %v1249
  %v1251 = vmul.f32 %v1250, 1.442695
  %v1252 = vpow.pop %v1251
  %v1253 = vadd.f32 %v1252, 1.0
  %v1254 = vrcp.pop %v1253
  %v1255 = vmul.f32 1.0, %v1254
  %v1256 = vtanh.pop %v1249
  %v1257 = vmul.f32 %v1255, %v1162
  %1259 = vrot.lane.b32.xlu0 %v1256, 64
  %v1260 = vpop.permute.xlu0 %1259
  %v1262 = vmul.f32 %v1255, %v1260
  %1264 = vrot.lane.b32.xlu0 %v1262, 32
  %v1265 = vpop.permute.xlu0 %1264
  %v1267 = vadd.f32 %v1257, %v1265
  %v1268 = vtanh.pop %v1267
  %1270 = vrot.lane.b32.xlu0 %v1268, 64
  %v1271 = vpop.permute.xlu0 %1270
  %v1273 = vmul.f32 %v1255, %v1271
  %1275 = vrot.lane.b32.xlu0 %v1273, 32
  %v1276 = vpop.permute.xlu0 %1275
  %s1278 = scalar_lea.vmem [#allocation3], 16
  %1279 = vst.msk [vmem:[%s1278] sm:$0xff] %vm966, %v1276
  %s1280 = scalar_lea.vmem [#allocation2], 24
  %v1281 = vld [vmem:[%s1280] sm:$0xff]
  %v1282 = vsel %vm966, %v1276, 0
  %1284 = vmatprep.subr.mxu0 0.0
  %1285 = vmatpush1.msra.mxu0 %v961
  %1286 = vmatprep.subr.mxu0 0.0
  %1287 = vmatpush1.msra.mxu0 %v962
  %1288 = vmatprep.subr.mxu0 0.0
  %1289 = vmatpush1.msra.mxu0 %v963
  %1290 = vmatprep.subr.mxu0 0.0
  %1291 = vmatpush1.msra.mxu0 %v964
  %1292 = vmatprep.subr.mxu0 0.0
  %1293 = vmatpush1.msra.mxu0 0.0
  %1294 = vmatprep.subr.mxu0 0.0
  %1295 = vmatpush1.msra.mxu0 0.0
  %1296 = vmatprep.subr.mxu0 0.0
  %1297 = vmatpush1.msra.mxu0 0.0
  %1298 = vmatprep.subr.mxu0 0.0
  %1299 = vmatpush1.msra.mxu0 0.0
  %1300 = vmatprep.subr.mxu0 0.0
  %1301 = vmatpush1.msra.mxu0 0.0
  %1302 = vmatprep.subr.mxu0 0.0
  %1303 = vmatpush1.msra.mxu0 0.0
  %1304 = vmatprep.subr.mxu0 0.0
  %1305 = vmatpush1.msra.mxu0 0.0
  %1306 = vmatprep.subr.mxu0 0.0
  %1307 = vmatpush1.msra.mxu0 0.0
  %1308 = vmatprep.subr.mxu0 0.0
  %1309 = vmatpush1.msra.mxu0 0.0
  %1310 = vmatprep.subr.mxu0 0.0
  %1311 = vmatpush1.msra.mxu0 0.0
  %1312 = vmatprep.subr.mxu0 0.0
  %1313 = vmatpush1.msra.mxu0 0.0
  %1314 = vmatprep.subr.mxu0 0.0
  %1315 = vmatpush1.msra.mxu0 0.0
  %1316 = vmatprep.subr.mxu0 0.0
  %1317 = vmatpush1.msra.mxu0 0.0
  %1318 = vmatprep.subr.mxu0 0.0
  %1319 = vmatpush1.msra.mxu0 0.0
  %1320 = vmatprep.subr.mxu0 0.0
  %1321 = vmatpush1.msra.mxu0 0.0
  %1322 = vmatprep.subr.mxu0 0.0
  %1323 = vmatpush1.msra.mxu0 0.0
  %1324 = vmatprep.subr.mxu0 0.0
  %1325 = vmatpush1.msra.mxu0 0.0
  %1326 = vmatprep.subr.mxu0 0.0
  %1327 = vmatpush1.msra.mxu0 0.0
  %1328 = vmatprep.subr.mxu0 0.0
  %1329 = vmatpush1.msra.mxu0 0.0
  %1330 = vmatprep.subr.mxu0 0.0
  %1331 = vmatpush1.msra.mxu0 0.0
  %1332 = vmatprep.subr.mxu0 0.0
  %1333 = vmatpush1.msra.mxu0 0.0
  %1334 = vmatprep.subr.mxu0 0.0
  %1335 = vmatpush1.msra.mxu0 0.0
  %1336 = vmatprep.subr.mxu0 0.0
  %1337 = vmatpush1.msra.mxu0 0.0
  %1338 = vmatprep.subr.mxu0 0.0
  %1339 = vmatpush1.msra.mxu0 0.0
  %1340 = vmatprep.subr.mxu0 0.0
  %1341 = vmatpush1.msra.mxu0 0.0
  %1342 = vmatprep.subr.mxu0 0.0
  %1343 = vmatpush1.msra.mxu0 0.0
  %1344 = vmatprep.subr.mxu0 0.0
  %1345 = vmatpush1.msra.mxu0 0.0
  %1346 = vmatprep.subr.mxu0 0.0
  %1347 = vmatpush1.msra.mxu0 0.0
  %1348 = vmatprep.mubr.f32.mxu0 0.0
  %1349 = vmatmul.mubr.f32.gmra.mrb[0].mxu0 %v1282
  %v1350 = vpop.f32.mrb[0].mxu0
  %v1351 = vadd.f32 0.0, %v1350
  %v1352 = vpop.f32.mrb[0].mxu0
  %1353 = vdwg.mxu0
  %v1354 = vadd.f32 %v1281, %v1351
  %v1355 = vsub.f32 0.0, %v1354
  %v1356 = vmul.f32 %v1355, 1.442695
  %v1357 = vpow.pop %v1356
  %v1358 = vadd.f32 %v1357, 1.0
  %v1359 = vrcp.pop %v1358
  %v1360 = vmul.f32 1.0, %v1359
  %v1361 = vtanh.pop %v1354
  %v1362 = vmul.f32 %v1360, %v1267
  %1364 = vrot.lane.b32.xlu0 %v1361, 64
  %v1365 = vpop.permute.xlu0 %1364
  %v1367 = vmul.f32 %v1360, %v1365
  %1369 = vrot.lane.b32.xlu0 %v1367, 32
  %v1370 = vpop.permute.xlu0 %1369
  %v1372 = vadd.f32 %v1362, %v1370
  %v1373 = vtanh.pop %v1372
  %1375 = vrot.lane.b32.xlu0 %v1373, 64
  %v1376 = vpop.permute.xlu0 %1375
  %v1378 = vmul.f32 %v1360, %v1376
  %1380 = vrot.lane.b32.xlu0 %v1378, 32
  %v1381 = vpop.permute.xlu0 %1380
  %s1383 = scalar_lea.vmem [#allocation3], 24
  %1384 = vst.msk [vmem:[%s1383] sm:$0xff] %vm966, %v1381
  %s1385 = scalar_lea.vmem [#allocation2], 32
  %v1386 = vld [vmem:[%s1385] sm:$0xff]
  %v1387 = vsel %vm966, %v1381, 0
  %1389 = vmatprep.subr.mxu0 0.0
  %1390 = vmatpush1.msra.mxu0 %v961
  %1391 = vmatprep.subr.mxu0 0.0
  %1392 = vmatpush1.msra.mxu0 %v962
  %1393 = vmatprep.subr.mxu0 0.0
  %1394 = vmatpush1.msra.mxu0 %v963
  %1395 = vmatprep.subr.mxu0 0.0
  %1396 = vmatpush1.msra.mxu0 %v964
  %1397 = vmatprep.subr.mxu0 0.0
  %1398 = vmatpush1.msra.mxu0 0.0
  %1399 = vmatprep.subr.mxu0 0.0
  %1400 = vmatpush1.msra.mxu0 0.0
  %1401 = vmatprep.subr.mxu0 0.0
  %1402 = vmatpush1.msra.mxu0 0.0
  %1403 = vmatprep.subr.mxu0 0.0
  %1404 = vmatpush1.msra.mxu0 0.0
  %1405 = vmatprep.subr.mxu0 0.0
  %1406 = vmatpush1.msra.mxu0 0.0
  %1407 = vmatprep.subr.mxu0 0.0
  %1408 = vmatpush1.msra.mxu0 0.0
  %1409 = vmatprep.subr.mxu0 0.0
  %1410 = vmatpush1.msra.mxu0 0.0
  %1411 = vmatprep.subr.mxu0 0.0
  %1412 = vmatpush1.msra.mxu0 0.0
  %1413 = vmatprep.subr.mxu0 0.0
  %1414 = vmatpush1.msra.mxu0 0.0
  %1415 = vmatprep.subr.mxu0 0.0
  %1416 = vmatpush1.msra.mxu0 0.0
  %1417 = vmatprep.subr.mxu0 0.0
  %1418 = vmatpush1.msra.mxu0 0.0
  %1419 = vmatprep.subr.mxu0 0.0
  %1420 = vmatpush1.msra.mxu0 0.0
  %1421 = vmatprep.subr.mxu0 0.0
  %1422 = vmatpush1.msra.mxu0 0.0
  %1423 = vmatprep.subr.mxu0 0.0
  %1424 = vmatpush1.msra.mxu0 0.0
  %1425 = vmatprep.subr.mxu0 0.0
  %1426 = vmatpush1.msra.mxu0 0.0
  %1427 = vmatprep.subr.mxu0 0.0
  %1428 = vmatpush1.msra.mxu0 0.0
  %1429 = vmatprep.subr.mxu0 0.0
  %1430 = vmatpush1.msra.mxu0 0.0
  %1431 = vmatprep.subr.mxu0 0.0
  %1432 = vmatpush1.msra.mxu0 0.0
  %1433 = vmatprep.subr.mxu0 0.0
  %1434 = vmatpush1.msra.mxu0 0.0
  %1435 = vmatprep.subr.mxu0 0.0
  %1436 = vmatpush1.msra.mxu0 0.0
  %1437 = vmatprep.subr.mxu0 0.0
  %1438 = vmatpush1.msra.mxu0 0.0
  %1439 = vmatprep.subr.mxu0 0.0
  %1440 = vmatpush1.msra.mxu0 0.0
  %1441 = vmatprep.subr.mxu0 0.0
  %1442 = vmatpush1.msra.mxu0 0.0
  %1443 = vmatprep.subr.mxu0 0.0
  %1444 = vmatpush1.msra.mxu0 0.0
  %1445 = vmatprep.subr.mxu0 0.0
  %1446 = vmatpush1.msra.mxu0 0.0
  %1447 = vmatprep.subr.mxu0 0.0
  %1448 = vmatpush1.msra.mxu0 0.0
  %1449 = vmatprep.subr.mxu0 0.0
  %1450 = vmatpush1.msra.mxu0 0.0
  %1451 = vmatprep.subr.mxu0 0.0
  %1452 = vmatpush1.msra.mxu0 0.0
  %1453 = vmatprep.mubr.f32.mxu0 0.0
  %1454 = vmatmul.mubr.f32.gmra.mrb[0].mxu0 %v1387
  %v1455 = vpop.f32.mrb[0].mxu0
  %v1456 = vadd.f32 0.0, %v1455
  %v1457 = vpop.f32.mrb[0].mxu0
  %1458 = vdwg.mxu0
  %v1459 = vadd.f32 %v1386, %v1456
  %v1460 = vsub.f32 0.0, %v1459
  %v1461 = vmul.f32 %v1460, 1.442695
  %v1462 = vpow.pop %v1461
  %v1463 = vadd.f32 %v1462, 1.0
  %v1464 = vrcp.pop %v1463
  %v1465 = vmul.f32 1.0, %v1464
  %v1466 = vtanh.pop %v1459
  %v1467 = vmul.f32 %v1465, %v1372
  %1469 = vrot.lane.b32.xlu0 %v1466, 64
  %v1470 = vpop.permute.xlu0 %1469
  %v1472 = vmul.f32 %v1465, %v1470
  %1474 = vrot.lane.b32.xlu0 %v1472, 32
  %v1475 = vpop.permute.xlu0 %1474
  %v1477 = vadd.f32 %v1467, %v1475
  %v1478 = vtanh.pop %v1477
  %1480 = vrot.lane.b32.xlu0 %v1478, 64
  %v1481 = vpop.permute.xlu0 %1480
  %v1483 = vmul.f32 %v1465, %v1481
  %1485 = vrot.lane.b32.xlu0 %v1483, 32
  %v1486 = vpop.permute.xlu0 %1485
  %s1488 = scalar_lea.vmem [#allocation3], 32
  %1489 = vst.msk [vmem:[%s1488] sm:$0xff] %vm966, %v1486
  %s1490 = scalar_lea.vmem [#allocation2], 40
  %v1491 = vld [vmem:[%s1490] sm:$0xff]
  %v1492 = vsel %vm966, %v1486, 0
  %1494 = vmatprep.subr.mxu0 0.0
  %1495 = vmatpush1.msra.mxu0 %v961
  %1496 = vmatprep.subr.mxu0 0.0
  %1497 = vmatpush1.msra.mxu0 %v962
  %1498 = vmatprep.subr.mxu0 0.0
  %1499 = vmatpush1.msra.mxu0 %v963
  %1500 = vmatprep.subr.mxu0 0.0
  %1501 = vmatpush1.msra.mxu0 %v964
  %1502 = vmatprep.subr.mxu0 0.0
  %1503 = vmatpush1.msra.mxu0 0.0
  %1504 = vmatprep.subr.mxu0 0.0
  %1505 = vmatpush1.msra.mxu0 0.0
  %1506 = vmatprep.subr.mxu0 0.0
  %1507 = vmatpush1.msra.mxu0 0.0
  %1508 = vmatprep.subr.mxu0 0.0
  %1509 = vmatpush1.msra.mxu0 0.0
  %1510 = vmatprep.subr.mxu0 0.0
  %1511 = vmatpush1.msra.mxu0 0.0
  %1512 = vmatprep.subr.mxu0 0.0
  %1513 = vmatpush1.msra.mxu0 0.0
  %1514 = vmatprep.subr.mxu0 0.0
  %1515 = vmatpush1.msra.mxu0 0.0
  %1516 = vmatprep.subr.mxu0 0.0
  %1517 = vmatpush1.msra.mxu0 0.0
  %1518 = vmatprep.subr.mxu0 0.0
  %1519 = vmatpush1.msra.mxu0 0.0
  %1520 = vmatprep.subr.mxu0 0.0
  %1521 = vmatpush1.msra.mxu0 0.0
  %1522 = vmatprep.subr.mxu0 0.0
  %1523 = vmatpush1.msra.mxu0 0.0
  %1524 = vmatprep.subr.mxu0 0.0
  %1525 = vmatpush1.msra.mxu0 0.0
  %1526 = vmatprep.subr.mxu0 0.0
  %1527 = vmatpush1.msra.mxu0 0.0
  %1528 = vmatprep.subr.mxu0 0.0
  %1529 = vmatpush1.msra.mxu0 0.0
  %1530 = vmatprep.subr.mxu0 0.0
  %1531 = vmatpush1.msra.mxu0 0.0
  %1532 = vmatprep.subr.mxu0 0.0
  %1533 = vmatpush1.msra.mxu0 0.0
  %1534 = vmatprep.subr.mxu0 0.0
  %1535 = vmatpush1.msra.mxu0 0.0
  %1536 = vmatprep.subr.mxu0 0.0
  %1537 = vmatpush1.msra.mxu0 0.0
  %1538 = vmatprep.subr.mxu0 0.0
  %1539 = vmatpush1.msra.mxu0 0.0
  %1540 = vmatprep.subr.mxu0 0.0
  %1541 = vmatpush1.msra.mxu0 0.0
  %1542 = vmatprep.subr.mxu0 0.0
  %1543 = vmatpush1.msra.mxu0 0.0
  %1544 = vmatprep.subr.mxu0 0.0
  %1545 = vmatpush1.msra.mxu0 0.0
  %1546 = vmatprep.subr.mxu0 0.0
  %1547 = vmatpush1.msra.mxu0 0.0
  %1548 = vmatprep.subr.mxu0 0.0
  %1549 = vmatpush1.msra.mxu0 0.0
  %1550 = vmatprep.subr.mxu0 0.0
  %1551 = vmatpush1.msra.mxu0 0.0
  %1552 = vmatprep.subr.mxu0 0.0
  %1553 = vmatpush1.msra.mxu0 0.0
  %1554 = vmatprep.subr.mxu0 0.0
  %1555 = vmatpush1.msra.mxu0 0.0
  %1556 = vmatprep.subr.mxu0 0.0
  %1557 = vmatpush1.msra.mxu0 0.0
  %1558 = vmatprep.mubr.f32.mxu0 0.0
  %1559 = vmatmul.mubr.f32.gmra.mrb[0].mxu0 %v1492
  %v1560 = vpop.f32.mrb[0].mxu0
  %v1561 = vadd.f32 0.0, %v1560
  %v1562 = vpop.f32.mrb[0].mxu0
  %1563 = vdwg.mxu0
  %v1564 = vadd.f32 %v1491, %v1561
  %v1565 = vsub.f32 0.0, %v1564
  %v1566 = vmul.f32 %v1565, 1.442695
  %v1567 = vpow.pop %v1566
  %v1568 = vadd.f32 %v1567, 1.0
  %v1569 = vrcp.pop %v1568
  %v1570 = vmul.f32 1.0, %v1569
  %v1571 = vtanh.pop %v1564
  %v1572 = vmul.f32 %v1570, %v1477
  %1574 = vrot.lane.b32.xlu0 %v1571, 64
  %v1575 = vpop.permute.xlu0 %1574
  %v1577 = vmul.f32 %v1570, %v1575
  %1579 = vrot.lane.b32.xlu0 %v1577, 32
  %v1580 = vpop.permute.xlu0 %1579
  %v1582 = vadd.f32 %v1572, %v1580
  %v1583 = vtanh.pop %v1582
  %1585 = vrot.lane.b32.xlu0 %v1583, 64
  %v1586 = vpop.permute.xlu0 %1585
  %v1588 = vmul.f32 %v1570, %v1586
  %1590 = vrot.lane.b32.xlu0 %v1588, 32
  %v1591 = vpop.permute.xlu0 %1590
  %s1593 = scalar_lea.vmem [#allocation3], 40
  %1594 = vst.msk [vmem:[%s1593] sm:$0xff] %vm966, %v1591
  %s1595 = scalar_lea.vmem [#allocation2], 48
  %v1596 = vld [vmem:[%s1595] sm:$0xff]
  %v1597 = vsel %vm966, %v1591, 0
  %1599 = vmatprep.subr.mxu0 0.0
  %1600 = vmatpush1.msra.mxu0 %v961
  %1601 = vmatprep.subr.mxu0 0.0
  %1602 = vmatpush1.msra.mxu0 %v962
  %1603 = vmatprep.subr.mxu0 0.0
  %1604 = vmatpush1.msra.mxu0 %v963
  %1605 = vmatprep.subr.mxu0 0.0
  %1606 = vmatpush1.msra.mxu0 %v964
  %1607 = vmatprep.subr.mxu0 0.0
  %1608 = vmatpush1.msra.mxu0 0.0
  %1609 = vmatprep.subr.mxu0 0.0
  %1610 = vmatpush1.msra.mxu0 0.0
  %1611 = vmatprep.subr.mxu0 0.0
  %1612 = vmatpush1.msra.mxu0 0.0
  %1613 = vmatprep.subr.mxu0 0.0
  %1614 = vmatpush1.msra.mxu0 0.0
  %1615 = vmatprep.subr.mxu0 0.0
  %1616 = vmatpush1.msra.mxu0 0.0
  %1617 = vmatprep.subr.mxu0 0.0
  %1618 = vmatpush1.msra.mxu0 0.0
  %1619 = vmatprep.subr.mxu0 0.0
  %1620 = vmatpush1.msra.mxu0 0.0
  %1621 = vmatprep.subr.mxu0 0.0
  %1622 = vmatpush1.msra.mxu0 0.0
  %1623 = vmatprep.subr.mxu0 0.0
  %1624 = vmatpush1.msra.mxu0 0.0
  %1625 = vmatprep.subr.mxu0 0.0
  %1626 = vmatpush1.msra.mxu0 0.0
  %1627 = vmatprep.subr.mxu0 0.0
  %1628 = vmatpush1.msra.mxu0 0.0
  %1629 = vmatprep.subr.mxu0 0.0
  %1630 = vmatpush1.msra.mxu0 0.0
  %1631 = vmatprep.subr.mxu0 0.0
  %1632 = vmatpush1.msra.mxu0 0.0
  %1633 = vmatprep.subr.mxu0 0.0
  %1634 = vmatpush1.msra.mxu0 0.0
  %1635 = vmatprep.subr.mxu0 0.0
  %1636 = vmatpush1.msra.mxu0 0.0
  %1637 = vmatprep.subr.mxu0 0.0
  %1638 = vmatpush1.msra.mxu0 0.0
  %1639 = vmatprep.subr.mxu0 0.0
  %1640 = vmatpush1.msra.mxu0 0.0
  %1641 = vmatprep.subr.mxu0 0.0
  %1642 = vmatpush1.msra.mxu0 0.0
  %1643 = vmatprep.subr.mxu0 0.0
  %1644 = vmatpush1.msra.mxu0 0.0
  %1645 = vmatprep.subr.mxu0 0.0
  %1646 = vmatpush1.msra.mxu0 0.0
  %1647 = vmatprep.subr.mxu0 0.0
  %1648 = vmatpush1.msra.mxu0 0.0
  %1649 = vmatprep.subr.mxu0 0.0
  %1650 = vmatpush1.msra.mxu0 0.0
  %1651 = vmatprep.subr.mxu0 0.0
  %1652 = vmatpush1.msra.mxu0 0.0
  %1653 = vmatprep.subr.mxu0 0.0
  %1654 = vmatpush1.msra.mxu0 0.0
  %1655 = vmatprep.subr.mxu0 0.0
  %1656 = vmatpush1.msra.mxu0 0.0
  %1657 = vmatprep.subr.mxu0 0.0
  %1658 = vmatpush1.msra.mxu0 0.0
  %1659 = vmatprep.subr.mxu0 0.0
  %1660 = vmatpush1.msra.mxu0 0.0
  %1661 = vmatprep.subr.mxu0 0.0
  %1662 = vmatpush1.msra.mxu0 0.0
  %1663 = vmatprep.mubr.f32.mxu0 0.0
  %1664 = vmatmul.mubr.f32.gmra.mrb[0].mxu0 %v1597
  %v1665 = vpop.f32.mrb[0].mxu0
  %v1666 = vadd.f32 0.0, %v1665
  %v1667 = vpop.f32.mrb[0].mxu0
  %1668 = vdwg.mxu0
  %v1669 = vadd.f32 %v1596, %v1666
  %v1670 = vsub.f32 0.0, %v1669
  %v1671 = vmul.f32 %v1670, 1.442695
  %v1672 = vpow.pop %v1671
  %v1673 = vadd.f32 %v1672, 1.0
  %v1674 = vrcp.pop %v1673
  %v1675 = vmul.f32 1.0, %v1674
  %v1676 = vtanh.pop %v1669
  %v1677 = vmul.f32 %v1675, %v1582
  %1679 = vrot.lane.b32.xlu0 %v1676, 64
  %v1680 = vpop.permute.xlu0 %1679
  %v1682 = vmul.f32 %v1675, %v1680
  %1684 = vrot.lane.b32.xlu0 %v1682, 32
  %v1685 = vpop.permute.xlu0 %1684
  %v1687 = vadd.f32 %v1677, %v1685
  %v1688 = vtanh.pop %v1687
  %1690 = vrot.lane.b32.xlu0 %v1688, 64
  %v1691 = vpop.permute.xlu0 %1690
  %v1693 = vmul.f32 %v1675, %v1691
  %1695 = vrot.lane.b32.xlu0 %v1693, 32
  %v1696 = vpop.permute.xlu0 %1695
  %s1698 = scalar_lea.vmem [#allocation3], 48
  %1699 = vst.msk [vmem:[%s1698] sm:$0xff] %vm966, %v1696
  %s1700 = scalar_lea.vmem [#allocation2], 56
  %v1701 = vld [vmem:[%s1700] sm:$0xff]
  %v1702 = vsel %vm966, %v1696, 0
  %1704 = vmatprep.subr.mxu0 0.0
  %1705 = vmatpush1.msra.mxu0 %v961
  %1706 = vmatprep.subr.mxu0 0.0
  %1707 = vmatpush1.msra.mxu0 %v962
  %1708 = vmatprep.subr.mxu0 0.0
  %1709 = vmatpush1.msra.mxu0 %v963
  %1710 = vmatprep.subr.mxu0 0.0
  %1711 = vmatpush1.msra.mxu0 %v964
  %1712 = vmatprep.subr.mxu0 0.0
  %1713 = vmatpush1.msra.mxu0 0.0
  %1714 = vmatprep.subr.mxu0 0.0
  %1715 = vmatpush1.msra.mxu0 0.0
  %1716 = vmatprep.subr.mxu0 0.0
  %1717 = vmatpush1.msra.mxu0 0.0
  %1718 = vmatprep.subr.mxu0 0.0
  %1719 = vmatpush1.msra.mxu0 0.0
  %1720 = vmatprep.subr.mxu0 0.0
  %1721 = vmatpush1.msra.mxu0 0.0
  %1722 = vmatprep.subr.mxu0 0.0
  %1723 = vmatpush1.msra.mxu0 0.0
  %1724 = vmatprep.subr.mxu0 0.0
  %1725 = vmatpush1.msra.mxu0 0.0
  %1726 = vmatprep.subr.mxu0 0.0
  %1727 = vmatpush1.msra.mxu0 0.0
  %1728 = vmatprep.subr.mxu0 0.0
  %1729 = vmatpush1.msra.mxu0 0.0
  %1730 = vmatprep.subr.mxu0 0.0
  %1731 = vmatpush1.msra.mxu0 0.0
  %1732 = vmatprep.subr.mxu0 0.0
  %1733 = vmatpush1.msra.mxu0 0.0
  %1734 = vmatprep.subr.mxu0 0.0
  %1735 = vmatpush1.msra.mxu0 0.0
  %1736 = vmatprep.subr.mxu0 0.0
  %1737 = vmatpush1.msra.mxu0 0.0
  %1738 = vmatprep.subr.mxu0 0.0
  %1739 = vmatpush1.msra.mxu0 0.0
  %1740 = vmatprep.subr.mxu0 0.0
  %1741 = vmatpush1.msra.mxu0 0.0
  %1742 = vmatprep.subr.mxu0 0.0
  %1743 = vmatpush1.msra.mxu0 0.0
  %1744 = vmatprep.subr.mxu0 0.0
  %1745 = vmatpush1.msra.mxu0 0.0
  %1746 = vmatprep.subr.mxu0 0.0
  %1747 = vmatpush1.msra.mxu0 0.0
  %1748 = vmatprep.subr.mxu0 0.0
  %1749 = vmatpush1.msra.mxu0 0.0
  %1750 = vmatprep.subr.mxu0 0.0
  %1751 = vmatpush1.msra.mxu0 0.0
  %1752 = vmatprep.subr.mxu0 0.0
  %1753 = vmatpush1.msra.mxu0 0.0
  %1754 = vmatprep.subr.mxu0 0.0
  %1755 = vmatpush1.msra.mxu0 0.0
  %1756 = vmatprep.subr.mxu0 0.0
  %1757 = vmatpush1.msra.mxu0 0.0
  %1758 = vmatprep.subr.mxu0 0.0
  %1759 = vmatpush1.msra.mxu0 0.0
  %1760 = vmatprep.subr.mxu0 0.0
  %1761 = vmatpush1.msra.mxu0 0.0
  %1762 = vmatprep.subr.mxu0 0.0
  %1763 = vmatpush1.msra.mxu0 0.0
  %1764 = vmatprep.subr.mxu0 0.0
  %1765 = vmatpush1.msra.mxu0 0.0
  %1766 = vmatprep.subr.mxu0 0.0
  %1767 = vmatpush1.msra.mxu0 0.0
  %1768 = vmatprep.mubr.f32.mxu0 0.0
  %1769 = vmatmul.mubr.f32.gmra.mrb[0].mxu0 %v1702
  %v1770 = vpop.f32.mrb[0].mxu0
  %v1771 = vadd.f32 0.0, %v1770
  %v1772 = vpop.f32.mrb[0].mxu0
  %1773 = vdwg.mxu0
  %v1774 = vadd.f32 %v1701, %v1771
  %v1775 = vsub.f32 0.0, %v1774
  %v1776 = vmul.f32 %v1775, 1.442695
  %v1777 = vpow.pop %v1776
  %v1778 = vadd.f32 %v1777, 1.0
  %v1779 = vrcp.pop %v1778
  %v1780 = vmul.f32 1.0, %v1779
  %v1781 = vtanh.pop %v1774
  %v1782 = vmul.f32 %v1780, %v1687
  %1784 = vrot.lane.b32.xlu0 %v1781, 64
  %v1785 = vpop.permute.xlu0 %1784
  %v1787 = vmul.f32 %v1780, %v1785
  %1789 = vrot.lane.b32.xlu0 %v1787, 32
  %v1790 = vpop.permute.xlu0 %1789
  %v1792 = vadd.f32 %v1782, %v1790
  %v1793 = vtanh.pop %v1792
  %1795 = vrot.lane.b32.xlu0 %v1793, 64
  %v1796 = vpop.permute.xlu0 %1795
  %v1798 = vmul.f32 %v1780, %v1796
  %1800 = vrot.lane.b32.xlu0 %v1798, 32
  %v1801 = vpop.permute.xlu0 %1800
  %s1803 = scalar_lea.vmem [#allocation3], 56
  %1804 = vst.msk [vmem:[%s1803] sm:$0xff] %vm966, %v1801
  %s1805 = scalar_lea.vmem [#allocation2], 64
  %v1806 = vld [vmem:[%s1805] sm:$0xff]
  %v1807 = vsel %vm966, %v1801, 0
  %1809 = vmatprep.subr.mxu0 0.0
  %1810 = vmatpush1.msra.mxu0 %v961
  %1811 = vmatprep.subr.mxu0 0.0
  %1812 = vmatpush1.msra.mxu0 %v962
  %1813 = vmatprep.subr.mxu0 0.0
  %1814 = vmatpush1.msra.mxu0 %v963
  %1815 = vmatprep.subr.mxu0 0.0
  %1816 = vmatpush1.msra.mxu0 %v964
  %1817 = vmatprep.subr.mxu0 0.0
  %1818 = vmatpush1.msra.mxu0 0.0
  %1819 = vmatprep.subr.mxu0 0.0
  %1820 = vmatpush1.msra.mxu0 0.0
  %1821 = vmatprep.subr.mxu0 0.0
  %1822 = vmatpush1.msra.mxu0 0.0
  %1823 = vmatprep.subr.mxu0 0.0
  %1824 = vmatpush1.msra.mxu0 0.0
  %1825 = vmatprep.subr.mxu0 0.0
  %1826 = vmatpush1.msra.mxu0 0.0
  %1827 = vmatprep.subr.mxu0 0.0
  %1828 = vmatpush1.msra.mxu0 0.0
  %1829 = vmatprep.subr.mxu0 0.0
  %1830 = vmatpush1.msra.mxu0 0.0
  %1831 = vmatprep.subr.mxu0 0.0
  %1832 = vmatpush1.msra.mxu0 0.0
  %1833 = vmatprep.subr.mxu0 0.0
  %1834 = vmatpush1.msra.mxu0 0.0
  %1835 = vmatprep.subr.mxu0 0.0
  %1836 = vmatpush1.msra.mxu0 0.0
  %1837 = vmatprep.subr.mxu0 0.0
  %1838 = vmatpush1.msra.mxu0 0.0
  %1839 = vmatprep.subr.mxu0 0.0
  %1840 = vmatpush1.msra.mxu0 0.0
  %1841 = vmatprep.subr.mxu0 0.0
  %1842 = vmatpush1.msra.mxu0 0.0
  %1843 = vmatprep.subr.mxu0 0.0
  %1844 = vmatpush1.msra.mxu0 0.0
  %1845 = vmatprep.subr.mxu0 0.0
  %1846 = vmatpush1.msra.mxu0 0.0
  %1847 = vmatprep.subr.mxu0 0.0
  %1848 = vmatpush1.msra.mxu0 0.0
  %1849 = vmatprep.subr.mxu0 0.0
  %1850 = vmatpush1.msra.mxu0 0.0
  %1851 = vmatprep.subr.mxu0 0.0
  %1852 = vmatpush1.msra.mxu0 0.0
  %1853 = vmatprep.subr.mxu0 0.0
  %1854 = vmatpush1.msra.mxu0 0.0
  %1855 = vmatprep.subr.mxu0 0.0
  %1856 = vmatpush1.msra.mxu0 0.0
  %1857 = vmatprep.subr.mxu0 0.0
  %1858 = vmatpush1.msra.mxu0 0.0
  %1859 = vmatprep.subr.mxu0 0.0
  %1860 = vmatpush1.msra.mxu0 0.0
  %1861 = vmatprep.subr.mxu0 0.0
  %1862 = vmatpush1.msra.mxu0 0.0
  %1863 = vmatprep.subr.mxu0 0.0
  %1864 = vmatpush1.msra.mxu0 0.0
  %1865 = vmatprep.subr.mxu0 0.0
  %1866 = vmatpush1.msra.mxu0 0.0
  %1867 = vmatprep.subr.mxu0 0.0
  %1868 = vmatpush1.msra.mxu0 0.0
  %1869 = vmatprep.subr.mxu0 0.0
  %1870 = vmatpush1.msra.mxu0 0.0
  %1871 = vmatprep.subr.mxu0 0.0
  %1872 = vmatpush1.msra.mxu0 0.0
  %1873 = vmatprep.mubr.f32.mxu0 0.0
  %1874 = vmatmul.mubr.f32.gmra.mrb[0].mxu0 %v1807
  %v1875 = vpop.f32.mrb[0].mxu0
  %v1876 = vadd.f32 0.0, %v1875
  %v1877 = vpop.f32.mrb[0].mxu0
  %1878 = vdwg.mxu0
  %v1879 = vadd.f32 %v1806, %v1876
  %v1880 = vsub.f32 0.0, %v1879
  %v1881 = vmul.f32 %v1880, 1.442695
  %v1882 = vpow.pop %v1881
  %v1883 = vadd.f32 %v1882, 1.0
  %v1884 = vrcp.pop %v1883
  %v1885 = vmul.f32 1.0, %v1884
  %v1886 = vtanh.pop %v1879
  %v1887 = vmul.f32 %v1885, %v1792
  %1889 = vrot.lane.b32.xlu0 %v1886, 64
  %v1890 = vpop.permute.xlu0 %1889
  %v1892 = vmul.f32 %v1885, %v1890
  %1894 = vrot.lane.b32.xlu0 %v1892, 32
  %v1895 = vpop.permute.xlu0 %1894
  %v1897 = vadd.f32 %v1887, %v1895
  %v1898 = vtanh.pop %v1897
  %1900 = vrot.lane.b32.xlu0 %v1898, 64
  %v1901 = vpop.permute.xlu0 %1900
  %v1903 = vmul.f32 %v1885, %v1901
  %1905 = vrot.lane.b32.xlu0 %v1903, 32
  %v1906 = vpop.permute.xlu0 %1905
  %s1908 = scalar_lea.vmem [#allocation3], 64
  %1909 = vst.msk [vmem:[%s1908] sm:$0xff] %vm966, %v1906
  %s1910 = scalar_lea.vmem [#allocation2], 72
  %v1911 = vld [vmem:[%s1910] sm:$0xff]
  %v1912 = vsel %vm966, %v1906, 0
  %1914 = vmatprep.subr.mxu0 0.0
  %1915 = vmatpush1.msra.mxu0 %v961
  %1916 = vmatprep.subr.mxu0 0.0
  %1917 = vmatpush1.msra.mxu0 %v962
  %1918 = vmatprep.subr.mxu0 0.0
  %1919 = vmatpush1.msra.mxu0 %v963
  %1920 = vmatprep.subr.mxu0 0.0
  %1921 = vmatpush1.msra.mxu0 %v964
  %1922 = vmatprep.subr.mxu0 0.0
  %1923 = vmatpush1.msra.mxu0 0.0
  %1924 = vmatprep.subr.mxu0 0.0
  %1925 = vmatpush1.msra.mxu0 0.0
  %1926 = vmatprep.subr.mxu0 0.0
  %1927 = vmatpush1.msra.mxu0 0.0
  %1928 = vmatprep.subr.mxu0 0.0
  %1929 = vmatpush1.msra.mxu0 0.0
  %1930 = vmatprep.subr.mxu0 0.0
  %1931 = vmatpush1.msra.mxu0 0.0
  %1932 = vmatprep.subr.mxu0 0.0
  %1933 = vmatpush1.msra.mxu0 0.0
  %1934 = vmatprep.subr.mxu0 0.0
  %1935 = vmatpush1.msra.mxu0 0.0
  %1936 = vmatprep.subr.mxu0 0.0
  %1937 = vmatpush1.msra.mxu0 0.0
  %1938 = vmatprep.subr.mxu0 0.0
  %1939 = vmatpush1.msra.mxu0 0.0
  %1940 = vmatprep.subr.mxu0 0.0
  %1941 = vmatpush1.msra.mxu0 0.0
  %1942 = vmatprep.subr.mxu0 0.0
  %1943 = vmatpush1.msra.mxu0 0.0
  %1944 = vmatprep.subr.mxu0 0.0
  %1945 = vmatpush1.msra.mxu0 0.0
  %1946 = vmatprep.subr.mxu0 0.0
  %1947 = vmatpush1.msra.mxu0 0.0
  %1948 = vmatprep.subr.mxu0 0.0
  %1949 = vmatpush1.msra.mxu0 0.0
  %1950 = vmatprep.subr.mxu0 0.0
  %1951 = vmatpush1.msra.mxu0 0.0
  %1952 = vmatprep.subr.mxu0 0.0
  %1953 = vmatpush1.msra.mxu0 0.0
  %1954 = vmatprep.subr.mxu0 0.0
  %1955 = vmatpush1.msra.mxu0 0.0
  %1956 = vmatprep.subr.mxu0 0.0
  %1957 = vmatpush1.msra.mxu0 0.0
  %1958 = vmatprep.subr.mxu0 0.0
  %1959 = vmatpush1.msra.mxu0 0.0
  %1960 = vmatprep.subr.mxu0 0.0
  %1961 = vmatpush1.msra.mxu0 0.0
  %1962 = vmatprep.subr.mxu0 0.0
  %1963 = vmatpush1.msra.mxu0 0.0
  %1964 = vmatprep.subr.mxu0 0.0
  %1965 = vmatpush1.msra.mxu0 0.0
  %1966 = vmatprep.subr.mxu0 0.0
  %1967 = vmatpush1.msra.mxu0 0.0
  %1968 = vmatprep.subr.mxu0 0.0
  %1969 = vmatpush1.msra.mxu0 0.0
  %1970 = vmatprep.subr.mxu0 0.0
  %1971 = vmatpush1.msra.mxu0 0.0
  %1972 = vmatprep.subr.mxu0 0.0
  %1973 = vmatpush1.msra.mxu0 0.0
  %1974 = vmatprep.subr.mxu0 0.0
  %1975 = vmatpush1.msra.mxu0 0.0
  %1976 = vmatprep.subr.mxu0 0.0
  %1977 = vmatpush1.msra.mxu0 0.0
  %1978 = vmatprep.mubr.f32.mxu0 0.0
  %1979 = vmatmul.mubr.f32.gmra.mrb[0].mxu0 %v1912
  %v1980 = vpop.f32.mrb[0].mxu0
  %v1981 = vadd.f32 0.0, %v1980
  %v1982 = vpop.f32.mrb[0].mxu0
  %1983 = vdwg.mxu0
  %v1984 = vadd.f32 %v1911, %v1981
  %v1985 = vsub.f32 0.0, %v1984
  %v1986 = vmul.f32 %v1985, 1.442695
  %v1987 = vpow.pop %v1986
  %v1988 = vadd.f32 %v1987, 1.0
  %v1989 = vrcp.pop %v1988
  %v1990 = vmul.f32 1.0, %v1989
  %v1991 = vtanh.pop %v1984
  %v1992 = vmul.f32 %v1990, %v1897
  %1994 = vrot.lane.b32.xlu0 %v1991, 64
  %v1995 = vpop.permute.xlu0 %1994
  %v1997 = vmul.f32 %v1990, %v1995
  %1999 = vrot.lane.b32.xlu0 %v1997, 32
  %v2000 = vpop.permute.xlu0 %1999
  %v2002 = vadd.f32 %v1992, %v2000
  %v2003 = vtanh.pop %v2002
  %2005 = vrot.lane.b32.xlu0 %v2003, 64
  %v2006 = vpop.permute.xlu0 %2005
  %v2008 = vmul.f32 %v1990, %v2006
  %2010 = vrot.lane.b32.xlu0 %v2008, 32
  %v2011 = vpop.permute.xlu0 %2010
  %s2013 = scalar_lea.vmem [#allocation3], 72
  %2014 = vst.msk [vmem:[%s2013] sm:$0xff] %vm966, %v2011
  %s2015 = scalar_lea.vmem [#allocation2], 80
  %v2016 = vld [vmem:[%s2015] sm:$0xff]
  %v2017 = vsel %vm966, %v2011, 0
  %2019 = vmatprep.subr.mxu0 0.0
  %2020 = vmatpush1.msra.mxu0 %v961
  %2021 = vmatprep.subr.mxu0 0.0
  %2022 = vmatpush1.msra.mxu0 %v962
  %2023 = vmatprep.subr.mxu0 0.0
  %2024 = vmatpush1.msra.mxu0 %v963
  %2025 = vmatprep.subr.mxu0 0.0
  %2026 = vmatpush1.msra.mxu0 %v964
  %2027 = vmatprep.subr.mxu0 0.0
  %2028 = vmatpush1.msra.mxu0 0.0
  %2029 = vmatprep.subr.mxu0 0.0
  %2030 = vmatpush1.msra.mxu0 0.0
  %2031 = vmatprep.subr.mxu0 0.0
  %2032 = vmatpush1.msra.mxu0 0.0
  %2033 = vmatprep.subr.mxu0 0.0
  %2034 = vmatpush1.msra.mxu0 0.0
  %2035 = vmatprep.subr.mxu0 0.0
  %2036 = vmatpush1.msra.mxu0 0.0
  %2037 = vmatprep.subr.mxu0 0.0
  %2038 = vmatpush1.msra.mxu0 0.0
  %2039 = vmatprep.subr.mxu0 0.0
  %2040 = vmatpush1.msra.mxu0 0.0
  %2041 = vmatprep.subr.mxu0 0.0
  %2042 = vmatpush1.msra.mxu0 0.0
  %2043 = vmatprep.subr.mxu0 0.0
  %2044 = vmatpush1.msra.mxu0 0.0
  %2045 = vmatprep.subr.mxu0 0.0
  %2046 = vmatpush1.msra.mxu0 0.0
  %2047 = vmatprep.subr.mxu0 0.0
  %2048 = vmatpush1.msra.mxu0 0.0
  %2049 = vmatprep.subr.mxu0 0.0
  %2050 = vmatpush1.msra.mxu0 0.0
  %2051 = vmatprep.subr.mxu0 0.0
  %2052 = vmatpush1.msra.mxu0 0.0
  %2053 = vmatprep.subr.mxu0 0.0
  %2054 = vmatpush1.msra.mxu0 0.0
  %2055 = vmatprep.subr.mxu0 0.0
  %2056 = vmatpush1.msra.mxu0 0.0
  %2057 = vmatprep.subr.mxu0 0.0
  %2058 = vmatpush1.msra.mxu0 0.0
  %2059 = vmatprep.subr.mxu0 0.0
  %2060 = vmatpush1.msra.mxu0 0.0
  %2061 = vmatprep.subr.mxu0 0.0
  %2062 = vmatpush1.msra.mxu0 0.0
  %2063 = vmatprep.subr.mxu0 0.0
  %2064 = vmatpush1.msra.mxu0 0.0
  %2065 = vmatprep.subr.mxu0 0.0
  %2066 = vmatpush1.msra.mxu0 0.0
  %2067 = vmatprep.subr.mxu0 0.0
  %2068 = vmatpush1.msra.mxu0 0.0
  %2069 = vmatprep.subr.mxu0 0.0
  %2070 = vmatpush1.msra.mxu0 0.0
  %2071 = vmatprep.subr.mxu0 0.0
  %2072 = vmatpush1.msra.mxu0 0.0
  %2073 = vmatprep.subr.mxu0 0.0
  %2074 = vmatpush1.msra.mxu0 0.0
  %2075 = vmatprep.subr.mxu0 0.0
  %2076 = vmatpush1.msra.mxu0 0.0
  %2077 = vmatprep.subr.mxu0 0.0
  %2078 = vmatpush1.msra.mxu0 0.0
  %2079 = vmatprep.subr.mxu0 0.0
  %2080 = vmatpush1.msra.mxu0 0.0
  %2081 = vmatprep.subr.mxu0 0.0
  %2082 = vmatpush1.msra.mxu0 0.0
  %2083 = vmatprep.mubr.f32.mxu0 0.0
  %2084 = vmatmul.mubr.f32.gmra.mrb[0].mxu0 %v2017
  %v2085 = vpop.f32.mrb[0].mxu0
  %v2086 = vadd.f32 0.0, %v2085
  %v2087 = vpop.f32.mrb[0].mxu0
  %2088 = vdwg.mxu0
  %v2089 = vadd.f32 %v2016, %v2086
  %v2090 = vsub.f32 0.0, %v2089
  %v2091 = vmul.f32 %v2090, 1.442695
  %v2092 = vpow.pop %v2091
  %v2093 = vadd.f32 %v2092, 1.0
  %v2094 = vrcp.pop %v2093
  %v2095 = vmul.f32 1.0, %v2094
  %v2096 = vtanh.pop %v2089
  %v2097 = vmul.f32 %v2095, %v2002
  %2099 = vrot.lane.b32.xlu0 %v2096, 64
  %v2100 = vpop.permute.xlu0 %2099
  %v2102 = vmul.f32 %v2095, %v2100
  %2104 = vrot.lane.b32.xlu0 %v2102, 32
  %v2105 = vpop.permute.xlu0 %2104
  %v2107 = vadd.f32 %v2097, %v2105
  %v2108 = vtanh.pop %v2107
  %2110 = vrot.lane.b32.xlu0 %v2108, 64
  %v2111 = vpop.permute.xlu0 %2110
  %v2113 = vmul.f32 %v2095, %v2111
  %2115 = vrot.lane.b32.xlu0 %v2113, 32
  %v2116 = vpop.permute.xlu0 %2115
  %s2118 = scalar_lea.vmem [#allocation3], 80
  %2119 = vst.msk [vmem:[%s2118] sm:$0xff] %vm966, %v2116
  %s2120 = scalar_lea.vmem [#allocation2], 88
  %v2121 = vld [vmem:[%s2120] sm:$0xff]
  %v2122 = vsel %vm966, %v2116, 0
  %2124 = vmatprep.subr.mxu0 0.0
  %2125 = vmatpush1.msra.mxu0 %v961
  %2126 = vmatprep.subr.mxu0 0.0
  %2127 = vmatpush1.msra.mxu0 %v962
  %2128 = vmatprep.subr.mxu0 0.0
  %2129 = vmatpush1.msra.mxu0 %v963
  %2130 = vmatprep.subr.mxu0 0.0
  %2131 = vmatpush1.msra.mxu0 %v964
  %2132 = vmatprep.subr.mxu0 0.0
  %2133 = vmatpush1.msra.mxu0 0.0
  %2134 = vmatprep.subr.mxu0 0.0
  %2135 = vmatpush1.msra.mxu0 0.0
  %2136 = vmatprep.subr.mxu0 0.0
  %2137 = vmatpush1.msra.mxu0 0.0
  %2138 = vmatprep.subr.mxu0 0.0
  %2139 = vmatpush1.msra.mxu0 0.0
  %2140 = vmatprep.subr.mxu0 0.0
  %2141 = vmatpush1.msra.mxu0 0.0
  %2142 = vmatprep.subr.mxu0 0.0
  %2143 = vmatpush1.msra.mxu0 0.0
  %2144 = vmatprep.subr.mxu0 0.0
  %2145 = vmatpush1.msra.mxu0 0.0
  %2146 = vmatprep.subr.mxu0 0.0
  %2147 = vmatpush1.msra.mxu0 0.0
  %2148 = vmatprep.subr.mxu0 0.0
  %2149 = vmatpush1.msra.mxu0 0.0
  %2150 = vmatprep.subr.mxu0 0.0
  %2151 = vmatpush1.msra.mxu0 0.0
  %2152 = vmatprep.subr.mxu0 0.0
  %2153 = vmatpush1.msra.mxu0 0.0
  %2154 = vmatprep.subr.mxu0 0.0
  %2155 = vmatpush1.msra.mxu0 0.0
  %2156 = vmatprep.subr.mxu0 0.0
  %2157 = vmatpush1.msra.mxu0 0.0
  %2158 = vmatprep.subr.mxu0 0.0
  %2159 = vmatpush1.msra.mxu0 0.0
  %2160 = vmatprep.subr.mxu0 0.0
  %2161 = vmatpush1.msra.mxu0 0.0
  %2162 = vmatprep.subr.mxu0 0.0
  %2163 = vmatpush1.msra.mxu0 0.0
  %2164 = vmatprep.subr.mxu0 0.0
  %2165 = vmatpush1.msra.mxu0 0.0
  %2166 = vmatprep.subr.mxu0 0.0
  %2167 = vmatpush1.msra.mxu0 0.0
  %2168 = vmatprep.subr.mxu0 0.0
  %2169 = vmatpush1.msra.mxu0 0.0
  %2170 = vmatprep.subr.mxu0 0.0
  %2171 = vmatpush1.msra.mxu0 0.0
  %2172 = vmatprep.subr.mxu0 0.0
  %2173 = vmatpush1.msra.mxu0 0.0
  %2174 = vmatprep.subr.mxu0 0.0
  %2175 = vmatpush1.msra.mxu0 0.0
  %2176 = vmatprep.subr.mxu0 0.0
  %2177 = vmatpush1.msra.mxu0 0.0
  %2178 = vmatprep.subr.mxu0 0.0
  %2179 = vmatpush1.msra.mxu0 0.0
  %2180 = vmatprep.subr.mxu0 0.0
  %2181 = vmatpush1.msra.mxu0 0.0
  %2182 = vmatprep.subr.mxu0 0.0
  %2183 = vmatpush1.msra.mxu0 0.0
  %2184 = vmatprep.subr.mxu0 0.0
  %2185 = vmatpush1.msra.mxu0 0.0
  %2186 = vmatprep.subr.mxu0 0.0
  %2187 = vmatpush1.msra.mxu0 0.0
  %2188 = vmatprep.mubr.f32.mxu0 0.0
  %2189 = vmatmul.mubr.f32.gmra.mrb[0].mxu0 %v2122
  %v2190 = vpop.f32.mrb[0].mxu0
  %v2191 = vadd.f32 0.0, %v2190
  %v2192 = vpop.f32.mrb[0].mxu0
  %2193 = vdwg.mxu0
  %v2194 = vadd.f32 %v2121, %v2191
  %v2195 = vsub.f32 0.0, %v2194
  %v2196 = vmul.f32 %v2195, 1.442695
  %v2197 = vpow.pop %v2196
  %v2198 = vadd.f32 %v2197, 1.0
  %v2199 = vrcp.pop %v2198
  %v2200 = vmul.f32 1.0, %v2199
  %v2201 = vtanh.pop %v2194
  %v2202 = vmul.f32 %v2200, %v2107
  %2204 = vrot.lane.b32.xlu0 %v2201, 64
  %v2205 = vpop.permute.xlu0 %2204
  %v2207 = vmul.f32 %v2200, %v2205
  %2209 = vrot.lane.b32.xlu0 %v2207, 32
  %v2210 = vpop.permute.xlu0 %2209
  %v2212 = vadd.f32 %v2202, %v2210
  %v2213 = vtanh.pop %v2212
  %2215 = vrot.lane.b32.xlu0 %v2213, 64
  %v2216 = vpop.permute.xlu0 %2215
  %v2218 = vmul.f32 %v2200, %v2216
  %2220 = vrot.lane.b32.xlu0 %v2218, 32
  %v2221 = vpop.permute.xlu0 %2220
  %s2223 = scalar_lea.vmem [#allocation3], 88
  %2224 = vst.msk [vmem:[%s2223] sm:$0xff] %vm966, %v2221
  %v2225 = vld [vmem:[#allocation3] sm:$0xff]
  %v2226 = vld [vmem:[#allocation3 + $0x8] sm:$0xff]
  %v2227 = vld [vmem:[#allocation3 + $0x10] sm:$0xff]
  %v2228 = vld [vmem:[#allocation3 + $0x18] sm:$0xff]
  %v2229 = vld [vmem:[#allocation3 + $0x20] sm:$0xff]
  %v2230 = vld [vmem:[#allocation3 + $0x28] sm:$0xff]
  %v2231 = vld [vmem:[#allocation3 + $0x30] sm:$0xff]
  %v2232 = vld [vmem:[#allocation3 + $0x38] sm:$0xff]
  %v2233 = vld [vmem:[#allocation3 + $0x40] sm:$0xff]
  %v2234 = vld [vmem:[#allocation3 + $0x48] sm:$0xff]
  %v2235 = vld [vmem:[#allocation3 + $0x50] sm:$0xff]
  %v2236 = vld [vmem:[#allocation3 + $0x58] sm:$0xff]
  %v2237 = vld [vmem:[%s6] sm:$0xff]
  %v2238 = vld [vmem:[%s6 + $0x8] sm:$0xff]
  %v2239 = vld [vmem:[%s6 + $0x10] sm:$0xff]
  %v2240 = vld [vmem:[%s6 + $0x18] sm:$0xff]
  %v2241 = vld [vmem:[%s8] sm:$0x1]
  %v2243 = vlaneseq
  %v2244 = vshrl.u32 %v2243, 7
  %v2245 = vsub.s32 0, %v2244
  %v2246 = vrot.slane %v2241, %v2245
  %v2249 = vsel %vm966, %v2225, 0
  %v2252 = vsel %vm966, %v2226, 0
  %v2255 = vsel %vm966, %v2227, 0
  %v2258 = vsel %vm966, %v2228, 0
  %v2261 = vsel %vm966, %v2229, 0
  %v2264 = vsel %vm966, %v2230, 0
  %v2267 = vsel %vm966, %v2231, 0
  %v2270 = vsel %vm966, %v2232, 0
  %v2273 = vsel %vm966, %v2233, 0
  %v2276 = vsel %vm966, %v2234, 0
  %v2279 = vsel %vm966, %v2235, 0
  %v2282 = vsel %vm966, %v2236, 0
  %2284 = vmatprep.subr.mxu0 0.0
  %2285 = vmatpush1.msra.mxu0 %v2237
  %2286 = vmatprep.subr.mxu0 0.0
  %2287 = vmatpush1.msra.mxu0 %v2238
  %2288 = vmatprep.subr.mxu0 0.0
  %2289 = vmatpush1.msra.mxu0 %v2239
  %2290 = vmatprep.subr.mxu0 0.0
  %2291 = vmatpush1.msra.mxu0 %v2240
  %2292 = vmatprep.subr.mxu0 0.0
  %2293 = vmatpush1.msra.mxu0 0.0
  %2294 = vmatprep.subr.mxu0 0.0
  %2295 = vmatpush1.msra.mxu0 0.0
  %2296 = vmatprep.subr.mxu0 0.0
  %2297 = vmatpush1.msra.mxu0 0.0
  %2298 = vmatprep.subr.mxu0 0.0
  %2299 = vmatpush1.msra.mxu0 0.0
  %2300 = vmatprep.subr.mxu0 0.0
  %2301 = vmatpush1.msra.mxu0 0.0
  %2302 = vmatprep.subr.mxu0 0.0
  %2303 = vmatpush1.msra.mxu0 0.0
  %2304 = vmatprep.subr.mxu0 0.0
  %2305 = vmatpush1.msra.mxu0 0.0
  %2306 = vmatprep.subr.mxu0 0.0
  %2307 = vmatpush1.msra.mxu0 0.0
  %2308 = vmatprep.subr.mxu0 0.0
  %2309 = vmatpush1.msra.mxu0 0.0
  %2310 = vmatprep.subr.mxu0 0.0
  %2311 = vmatpush1.msra.mxu0 0.0
  %2312 = vmatprep.subr.mxu0 0.0
  %2313 = vmatpush1.msra.mxu0 0.0
  %2314 = vmatprep.subr.mxu0 0.0
  %2315 = vmatpush1.msra.mxu0 0.0
  %2316 = vmatprep.subr.mxu0 0.0
  %2317 = vmatpush1.msra.mxu0 0.0
  %2318 = vmatprep.subr.mxu0 0.0
  %2319 = vmatpush1.msra.mxu0 0.0
  %2320 = vmatprep.subr.mxu0 0.0
  %2321 = vmatpush1.msra.mxu0 0.0
  %2322 = vmatprep.subr.mxu0 0.0
  %2323 = vmatpush1.msra.mxu0 0.0
  %2324 = vmatprep.subr.mxu0 0.0
  %2325 = vmatpush1.msra.mxu0 0.0
  %2326 = vmatprep.subr.mxu0 0.0
  %2327 = vmatpush1.msra.mxu0 0.0
  %2328 = vmatprep.subr.mxu0 0.0
  %2329 = vmatpush1.msra.mxu0 0.0
  %2330 = vmatprep.subr.mxu0 0.0
  %2331 = vmatpush1.msra.mxu0 0.0
  %2332 = vmatprep.subr.mxu0 0.0
  %2333 = vmatpush1.msra.mxu0 0.0
  %2334 = vmatprep.subr.mxu0 0.0
  %2335 = vmatpush1.msra.mxu0 0.0
  %2336 = vmatprep.subr.mxu0 0.0
  %2337 = vmatpush1.msra.mxu0 0.0
  %2338 = vmatprep.subr.mxu0 0.0
  %2339 = vmatpush1.msra.mxu0 0.0
  %2340 = vmatprep.subr.mxu0 0.0
  %2341 = vmatpush1.msra.mxu0 0.0
  %2342 = vmatprep.subr.mxu0 0.0
  %2343 = vmatpush1.msra.mxu0 0.0
  %2344 = vmatprep.subr.mxu0 0.0
  %2345 = vmatpush1.msra.mxu0 0.0
  %2346 = vmatprep.subr.mxu0 0.0
  %2347 = vmatpush1.msra.mxu0 0.0
  %2348 = vmatprep.mubr.f32.mxu0 0.0
  %2349 = vmatmul.mubr.f32.gmra.mrb[0].mxu0 %v2249
  %v2350 = vpop.f32.mrb[0].mxu0
  %v2351 = vadd.f32 %v2246, %v2350
  %v2352 = vpop.f32.mrb[0].mxu0
  %2353 = vmatprep.mubr.f32.mxu0 0.0
  %2354 = vmatmul.mubr.f32.gmra.mrb[0].mxu0 %v2252
  %v2355 = vpop.f32.mrb[0].mxu0
  %v2356 = vadd.f32 %v2246, %v2355
  %v2357 = vpop.f32.mrb[0].mxu0
  %2358 = vmatprep.mubr.f32.mxu0 0.0
  %2359 = vmatmul.mubr.f32.gmra.mrb[0].mxu0 %v2255
  %v2360 = vpop.f32.mrb[0].mxu0
  %v2361 = vadd.f32 %v2246, %v2360
  %v2362 = vpop.f32.mrb[0].mxu0
  %2363 = vmatprep.mubr.f32.mxu0 0.0
  %2364 = vmatmul.mubr.f32.gmra.mrb[0].mxu0 %v2258
  %v2365 = vpop.f32.mrb[0].mxu0
  %v2366 = vadd.f32 %v2246, %v2365
  %v2367 = vpop.f32.mrb[0].mxu0
  %2368 = vmatprep.mubr.f32.mxu0 0.0
  %2369 = vmatmul.mubr.f32.gmra.mrb[0].mxu0 %v2261
  %v2370 = vpop.f32.mrb[0].mxu0
  %v2371 = vadd.f32 %v2246, %v2370
  %v2372 = vpop.f32.mrb[0].mxu0
  %2373 = vmatprep.mubr.f32.mxu0 0.0
  %2374 = vmatmul.mubr.f32.gmra.mrb[0].mxu0 %v2264
  %v2375 = vpop.f32.mrb[0].mxu0
  %v2376 = vadd.f32 %v2246, %v2375
  %v2377 = vpop.f32.mrb[0].mxu0
  %2378 = vmatprep.mubr.f32.mxu0 0.0
  %2379 = vmatmul.mubr.f32.gmra.mrb[0].mxu0 %v2267
  %v2380 = vpop.f32.mrb[0].mxu0
  %v2381 = vadd.f32 %v2246, %v2380
  %v2382 = vpop.f32.mrb[0].mxu0
  %2383 = vmatprep.mubr.f32.mxu0 0.0
  %2384 = vmatmul.mubr.f32.gmra.mrb[0].mxu0 %v2270
  %v2385 = vpop.f32.mrb[0].mxu0
  %v2386 = vadd.f32 %v2246, %v2385
  %v2387 = vpop.f32.mrb[0].mxu0
  %2388 = vmatprep.mubr.f32.mxu0 0.0
  %2389 = vmatmul.mubr.f32.gmra.mrb[0].mxu0 %v2273
  %v2390 = vpop.f32.mrb[0].mxu0
  %v2391 = vadd.f32 %v2246, %v2390
  %v2392 = vpop.f32.mrb[0].mxu0
  %2393 = vmatprep.mubr.f32.mxu0 0.0
  %2394 = vmatmul.mubr.f32.gmra.mrb[0].mxu0 %v2276
  %v2395 = vpop.f32.mrb[0].mxu0
  %v2396 = vadd.f32 %v2246, %v2395
  %v2397 = vpop.f32.mrb[0].mxu0
  %2398 = vmatprep.mubr.f32.mxu0 0.0
  %2399 = vmatmul.mubr.f32.gmra.mrb[0].mxu0 %v2279
  %v2400 = vpop.f32.mrb[0].mxu0
  %v2401 = vadd.f32 %v2246, %v2400
  %v2402 = vpop.f32.mrb[0].mxu0
  %2403 = vmatprep.mubr.f32.mxu0 0.0
  %2404 = vmatmul.mubr.f32.gmra.mrb[0].mxu0 %v2282
  %v2405 = vpop.f32.mrb[0].mxu0
  %v2406 = vadd.f32 %v2246, %v2405
  %v2407 = vpop.f32.mrb[0].mxu0
  %2408 = vdwg.mxu0
  %2409 = vst.msk [vmem:[#allocation4] sm:$0xff] %vm393, %v2351
  %2410 = vst.msk [vmem:[#allocation4 + $0x8] sm:$0xff] %vm393, %v2356
  %2411 = vst.msk [vmem:[#allocation4 + $0x10] sm:$0xff] %vm393, %v2361
  %2412 = vst.msk [vmem:[#allocation4 + $0x18] sm:$0xff] %vm393, %v2366
  %2413 = vst.msk [vmem:[#allocation4 + $0x20] sm:$0xff] %vm393, %v2371
  %2414 = vst.msk [vmem:[#allocation4 + $0x28] sm:$0xff] %vm393, %v2376
  %2415 = vst.msk [vmem:[#allocation4 + $0x30] sm:$0xff] %vm393, %v2381
  %2416 = vst.msk [vmem:[#allocation4 + $0x38] sm:$0xff] %vm393, %v2386
  %2417 = vst.msk [vmem:[#allocation4 + $0x40] sm:$0xff] %vm393, %v2391
  %2418 = vst.msk [vmem:[#allocation4 + $0x48] sm:$0xff] %vm393, %v2396
  %2419 = vst.msk [vmem:[#allocation4 + $0x50] sm:$0xff] %vm393, %v2401
  %2420 = vst.msk [vmem:[#allocation4 + $0x58] sm:$0xff] %vm393, %v2406
  %v2421 = vld [vmem:[%s7] sm:$0xf]
  %v2422 = vld [vmem:[#allocation4] sm:$0xff]
  %v2423 = vsel %vm227, 0.0, 0
  %v2426 = vsel %vm264, %v2421, 0
  %2428 = vmatprep.subr.mxu0 0.0
  %2429 = vmatpush1.msra.mxu0 %v2426
  %2430 = vmatprep.subr.mxu0 0.0
  %2431 = vmatpush1.msra.mxu0 0.0
  %2432 = vmatprep.subr.mxu0 0.0
  %2433 = vmatpush1.msra.mxu0 0.0
  %2434 = vmatprep.subr.mxu0 0.0
  %2435 = vmatpush1.msra.mxu0 0.0
  %2436 = vmatprep.subr.mxu0 0.0
  %2437 = vmatpush1.msra.mxu0 0.0
  %2438 = vmatprep.subr.mxu0 0.0
  %2439 = vmatpush1.msra.mxu0 0.0
  %2440 = vmatprep.subr.mxu0 0.0
  %2441 = vmatpush1.msra.mxu0 0.0
  %2442 = vmatprep.subr.mxu0 0.0
  %2443 = vmatpush1.msra.mxu0 0.0
  %2444 = vmatprep.subr.mxu0 0.0
  %2445 = vmatpush1.msra.mxu0 0.0
  %2446 = vmatprep.subr.mxu0 0.0
  %2447 = vmatpush1.msra.mxu0 0.0
  %2448 = vmatprep.subr.mxu0 0.0
  %2449 = vmatpush1.msra.mxu0 0.0
  %2450 = vmatprep.subr.mxu0 0.0
  %2451 = vmatpush1.msra.mxu0 0.0
  %2452 = vmatprep.subr.mxu0 0.0
  %2453 = vmatpush1.msra.mxu0 0.0
  %2454 = vmatprep.subr.mxu0 0.0
  %2455 = vmatpush1.msra.mxu0 0.0
  %2456 = vmatprep.subr.mxu0 0.0
  %2457 = vmatpush1.msra.mxu0 0.0
  %2458 = vmatprep.subr.mxu0 0.0
  %2459 = vmatpush1.msra.mxu0 0.0
  %2460 = vmatprep.subr.mxu0 0.0
  %2461 = vmatpush1.msra.mxu0 0.0
  %2462 = vmatprep.subr.mxu0 0.0
  %2463 = vmatpush1.msra.mxu0 0.0
  %2464 = vmatprep.subr.mxu0 0.0
  %2465 = vmatpush1.msra.mxu0 0.0
  %2466 = vmatprep.subr.mxu0 0.0
  %2467 = vmatpush1.msra.mxu0 0.0
  %2468 = vmatprep.subr.mxu0 0.0
  %2469 = vmatpush1.msra.mxu0 0.0
  %2470 = vmatprep.subr.mxu0 0.0
  %2471 = vmatpush1.msra.mxu0 0.0
  %2472 = vmatprep.subr.mxu0 0.0
  %2473 = vmatpush1.msra.mxu0 0.0
  %2474 = vmatprep.subr.mxu0 0.0
  %2475 = vmatpush1.msra.mxu0 0.0
  %2476 = vmatprep.subr.mxu0 0.0
  %2477 = vmatpush1.msra.mxu0 0.0
  %2478 = vmatprep.subr.mxu0 0.0
  %2479 = vmatpush1.msra.mxu0 0.0
  %2480 = vmatprep.subr.mxu0 0.0
  %2481 = vmatpush1.msra.mxu0 0.0
  %2482 = vmatprep.subr.mxu0 0.0
  %2483 = vmatpush1.msra.mxu0 0.0
  %2484 = vmatprep.subr.mxu0 0.0
  %2485 = vmatpush1.msra.mxu0 0.0
  %2486 = vmatprep.subr.mxu0 0.0
  %2487 = vmatpush1.msra.mxu0 0.0
  %2488 = vmatprep.subr.mxu0 0.0
  %2489 = vmatpush1.msra.mxu0 0.0
  %2490 = vmatprep.subr.mxu0 0.0
  %2491 = vmatpush1.msra.mxu0 0.0
  %2492 = vmatprep.mubr.f32.mxu0 0.0
  %2493 = vmatmul.mubr.f32.gmra.mrb[0].mxu0 %v2423
  %v2494 = vpop.f32.mrb[0].mxu0
  %v2495 = vadd.f32 0.0, %v2494
  %v2496 = vpop.f32.mrb[0].mxu0
  %2497 = vdwg.mxu0
  %v2498 = vadd.f32 %v2422, %v2495
  %v2499 = vsub.f32 0.0, %v2498
  %v2500 = vmul.f32 %v2499, 1.442695
  %v2501 = vpow.pop %v2500
  %v2502 = vadd.f32 %v2501, 1.0
  %v2503 = vrcp.pop %v2502
  %v2504 = vmul.f32 1.0, %v2503
  %v2505 = vtanh.pop %v2498
  %v2506 = vmul.f32 %v2504, 0.0
  %2508 = vrot.lane.b32.xlu0 %v2505, 120
  %v2509 = vpop.permute.xlu0 %2508
  %v2511 = vmul.f32 %v2504, %v2509
  %2513 = vrot.lane.b32.xlu0 %v2511, 4
  %v2514 = vpop.permute.xlu0 %2513
  %v2516 = vadd.f32 %v2506, %v2514
  %v2517 = vtanh.pop %v2516
  %2519 = vrot.lane.b32.xlu0 %v2517, 8
  %v2520 = vpop.permute.xlu0 %2519
  %v2522 = vmul.f32 %v2504, %v2520
  %2524 = vrot.lane.b32.xlu0 %v2522, 116
  %v2525 = vpop.permute.xlu0 %2524
  %2527 = vst.msk [vmem:[%s9] sm:$0xff] %vm227, %v2525
  %s2528 = scalar_lea.vmem [#allocation4], 8
  %v2529 = vld [vmem:[%s2528] sm:$0xff]
  %v2530 = vsel %vm227, %v2525, 0
  %2532 = vmatprep.subr.mxu0 0.0
  %2533 = vmatpush1.msra.mxu0 %v2426
  %2534 = vmatprep.subr.mxu0 0.0
  %2535 = vmatpush1.msra.mxu0 0.0
  %2536 = vmatprep.subr.mxu0 0.0
  %2537 = vmatpush1.msra.mxu0 0.0
  %2538 = vmatprep.subr.mxu0 0.0
  %2539 = vmatpush1.msra.mxu0 0.0
  %2540 = vmatprep.subr.mxu0 0.0
  %2541 = vmatpush1.msra.mxu0 0.0
  %2542 = vmatprep.subr.mxu0 0.0
  %2543 = vmatpush1.msra.mxu0 0.0
  %2544 = vmatprep.subr.mxu0 0.0
  %2545 = vmatpush1.msra.mxu0 0.0
  %2546 = vmatprep.subr.mxu0 0.0
  %2547 = vmatpush1.msra.mxu0 0.0
  %2548 = vmatprep.subr.mxu0 0.0
  %2549 = vmatpush1.msra.mxu0 0.0
  %2550 = vmatprep.subr.mxu0 0.0
  %2551 = vmatpush1.msra.mxu0 0.0
  %2552 = vmatprep.subr.mxu0 0.0
  %2553 = vmatpush1.msra.mxu0 0.0
  %2554 = vmatprep.subr.mxu0 0.0
  %2555 = vmatpush1.msra.mxu0 0.0
  %2556 = vmatprep.subr.mxu0 0.0
  %2557 = vmatpush1.msra.mxu0 0.0
  %2558 = vmatprep.subr.mxu0 0.0
  %2559 = vmatpush1.msra.mxu0 0.0
  %2560 = vmatprep.subr.mxu0 0.0
  %2561 = vmatpush1.msra.mxu0 0.0
  %2562 = vmatprep.subr.mxu0 0.0
  %2563 = vmatpush1.msra.mxu0 0.0
  %2564 = vmatprep.subr.mxu0 0.0
  %2565 = vmatpush1.msra.mxu0 0.0
  %2566 = vmatprep.subr.mxu0 0.0
  %2567 = vmatpush1.msra.mxu0 0.0
  %2568 = vmatprep.subr.mxu0 0.0
  %2569 = vmatpush1.msra.mxu0 0.0
  %2570 = vmatprep.subr.mxu0 0.0
  %2571 = vmatpush1.msra.mxu0 0.0
  %2572 = vmatprep.subr.mxu0 0.0
  %2573 = vmatpush1.msra.mxu0 0.0
  %2574 = vmatprep.subr.mxu0 0.0
  %2575 = vmatpush1.msra.mxu0 0.0
  %2576 = vmatprep.subr.mxu0 0.0
  %2577 = vmatpush1.msra.mxu0 0.0
  %2578 = vmatprep.subr.mxu0 0.0
  %2579 = vmatpush1.msra.mxu0 0.0
  %2580 = vmatprep.subr.mxu0 0.0
  %2581 = vmatpush1.msra.mxu0 0.0
  %2582 = vmatprep.subr.mxu0 0.0
  %2583 = vmatpush1.msra.mxu0 0.0
  %2584 = vmatprep.subr.mxu0 0.0
  %2585 = vmatpush1.msra.mxu0 0.0
  %2586 = vmatprep.subr.mxu0 0.0
  %2587 = vmatpush1.msra.mxu0 0.0
  %2588 = vmatprep.subr.mxu0 0.0
  %2589 = vmatpush1.msra.mxu0 0.0
  %2590 = vmatprep.subr.mxu0 0.0
  %2591 = vmatpush1.msra.mxu0 0.0
  %2592 = vmatprep.subr.mxu0 0.0
  %2593 = vmatpush1.msra.mxu0 0.0
  %2594 = vmatprep.subr.mxu0 0.0
  %2595 = vmatpush1.msra.mxu0 0.0
  %2596 = vmatprep.mubr.f32.mxu0 0.0
  %2597 = vmatmul.mubr.f32.gmra.mrb[0].mxu0 %v2530
  %v2598 = vpop.f32.mrb[0].mxu0
  %v2599 = vadd.f32 0.0, %v2598
  %v2600 = vpop.f32.mrb[0].mxu0
  %2601 = vdwg.mxu0
  %v2602 = vadd.f32 %v2529, %v2599
  %v2603 = vsub.f32 0.0, %v2602
  %v2604 = vmul.f32 %v2603, 1.442695
  %v2605 = vpow.pop %v2604
  %v2606 = vadd.f32 %v2605, 1.0
  %v2607 = vrcp.pop %v2606
  %v2608 = vmul.f32 1.0, %v2607
  %v2609 = vtanh.pop %v2602
  %v2610 = vmul.f32 %v2608, %v2516
  %2612 = vrot.lane.b32.xlu0 %v2609, 120
  %v2613 = vpop.permute.xlu0 %2612
  %v2615 = vmul.f32 %v2608, %v2613
  %2617 = vrot.lane.b32.xlu0 %v2615, 4
  %v2618 = vpop.permute.xlu0 %2617
  %v2620 = vadd.f32 %v2610, %v2618
  %v2621 = vtanh.pop %v2620
  %2623 = vrot.lane.b32.xlu0 %v2621, 8
  %v2624 = vpop.permute.xlu0 %2623
  %v2626 = vmul.f32 %v2608, %v2624
  %2628 = vrot.lane.b32.xlu0 %v2626, 116
  %v2629 = vpop.permute.xlu0 %2628
  %s2631 = scalar_lea.vmem %s9, 8
  %2632 = vst.msk [vmem:[%s2631] sm:$0xff] %vm227, %v2629
  %s2633 = scalar_lea.vmem [#allocation4], 16
  %v2634 = vld [vmem:[%s2633] sm:$0xff]
  %v2635 = vsel %vm227, %v2629, 0
  %2637 = vmatprep.subr.mxu0 0.0
  %2638 = vmatpush1.msra.mxu0 %v2426
  %2639 = vmatprep.subr.mxu0 0.0
  %2640 = vmatpush1.msra.mxu0 0.0
  %2641 = vmatprep.subr.mxu0 0.0
  %2642 = vmatpush1.msra.mxu0 0.0
  %2643 = vmatprep.subr.mxu0 0.0
  %2644 = vmatpush1.msra.mxu0 0.0
  %2645 = vmatprep.subr.mxu0 0.0
  %2646 = vmatpush1.msra.mxu0 0.0
  %2647 = vmatprep.subr.mxu0 0.0
  %2648 = vmatpush1.msra.mxu0 0.0
  %2649 = vmatprep.subr.mxu0 0.0
  %2650 = vmatpush1.msra.mxu0 0.0
  %2651 = vmatprep.subr.mxu0 0.0
  %2652 = vmatpush1.msra.mxu0 0.0
  %2653 = vmatprep.subr.mxu0 0.0
  %2654 = vmatpush1.msra.mxu0 0.0
  %2655 = vmatprep.subr.mxu0 0.0
  %2656 = vmatpush1.msra.mxu0 0.0
  %2657 = vmatprep.subr.mxu0 0.0
  %2658 = vmatpush1.msra.mxu0 0.0
  %2659 = vmatprep.subr.mxu0 0.0
  %2660 = vmatpush1.msra.mxu0 0.0
  %2661 = vmatprep.subr.mxu0 0.0
  %2662 = vmatpush1.msra.mxu0 0.0
  %2663 = vmatprep.subr.mxu0 0.0
  %2664 = vmatpush1.msra.mxu0 0.0
  %2665 = vmatprep.subr.mxu0 0.0
  %2666 = vmatpush1.msra.mxu0 0.0
  %2667 = vmatprep.subr.mxu0 0.0
  %2668 = vmatpush1.msra.mxu0 0.0
  %2669 = vmatprep.subr.mxu0 0.0
  %2670 = vmatpush1.msra.mxu0 0.0
  %2671 = vmatprep.subr.mxu0 0.0
  %2672 = vmatpush1.msra.mxu0 0.0
  %2673 = vmatprep.subr.mxu0 0.0
  %2674 = vmatpush1.msra.mxu0 0.0
  %2675 = vmatprep.subr.mxu0 0.0
  %2676 = vmatpush1.msra.mxu0 0.0
  %2677 = vmatprep.subr.mxu0 0.0
  %2678 = vmatpush1.msra.mxu0 0.0
  %2679 = vmatprep.subr.mxu0 0.0
  %2680 = vmatpush1.msra.mxu0 0.0
  %2681 = vmatprep.subr.mxu0 0.0
  %2682 = vmatpush1.msra.mxu0 0.0
  %2683 = vmatprep.subr.mxu0 0.0
  %2684 = vmatpush1.msra.mxu0 0.0
  %2685 = vmatprep.subr.mxu0 0.0
  %2686 = vmatpush1.msra.mxu0 0.0
  %2687 = vmatprep.subr.mxu0 0.0
  %2688 = vmatpush1.msra.mxu0 0.0
  %2689 = vmatprep.subr.mxu0 0.0
  %2690 = vmatpush1.msra.mxu0 0.0
  %2691 = vmatprep.subr.mxu0 0.0
  %2692 = vmatpush1.msra.mxu0 0.0
  %2693 = vmatprep.subr.mxu0 0.0
  %2694 = vmatpush1.msra.mxu0 0.0
  %2695 = vmatprep.subr.mxu0 0.0
  %2696 = vmatpush1.msra.mxu0 0.0
  %2697 = vmatprep.subr.mxu0 0.0
  %2698 = vmatpush1.msra.mxu0 0.0
  %2699 = vmatprep.subr.mxu0 0.0
  %2700 = vmatpush1.msra.mxu0 0.0
  %2701 = vmatprep.mubr.f32.mxu0 0.0
  %2702 = vmatmul.mubr.f32.gmra.mrb[0].mxu0 %v2635
  %v2703 = vpop.f32.mrb[0].mxu0
  %v2704 = vadd.f32 0.0, %v2703
  %v2705 = vpop.f32.mrb[0].mxu0
  %2706 = vdwg.mxu0
  %v2707 = vadd.f32 %v2634, %v2704
  %v2708 = vsub.f32 0.0, %v2707
  %v2709 = vmul.f32 %v2708, 1.442695
  %v2710 = vpow.pop %v2709
  %v2711 = vadd.f32 %v2710, 1.0
  %v2712 = vrcp.pop %v2711
  %v2713 = vmul.f32 1.0, %v2712
  %v2714 = vtanh.pop %v2707
  %v2715 = vmul.f32 %v2713, %v2620
  %2717 = vrot.lane.b32.xlu0 %v2714, 120
  %v2718 = vpop.permute.xlu0 %2717
  %v2720 = vmul.f32 %v2713, %v2718
  %2722 = vrot.lane.b32.xlu0 %v2720, 4
  %v2723 = vpop.permute.xlu0 %2722
  %v2725 = vadd.f32 %v2715, %v2723
  %v2726 = vtanh.pop %v2725
  %2728 = vrot.lane.b32.xlu0 %v2726, 8
  %v2729 = vpop.permute.xlu0 %2728
  %v2731 = vmul.f32 %v2713, %v2729
  %2733 = vrot.lane.b32.xlu0 %v2731, 116
  %v2734 = vpop.permute.xlu0 %2733
  %s2736 = scalar_lea.vmem %s9, 16
  %2737 = vst.msk [vmem:[%s2736] sm:$0xff] %vm227, %v2734
  %s2738 = scalar_lea.vmem [#allocation4], 24
  %v2739 = vld [vmem:[%s2738] sm:$0xff]
  %v2740 = vsel %vm227, %v2734, 0
  %2742 = vmatprep.subr.mxu0 0.0
  %2743 = vmatpush1.msra.mxu0 %v2426
  %2744 = vmatprep.subr.mxu0 0.0
  %2745 = vmatpush1.msra.mxu0 0.0
  %2746 = vmatprep.subr.mxu0 0.0
  %2747 = vmatpush1.msra.mxu0 0.0
  %2748 = vmatprep.subr.mxu0 0.0
  %2749 = vmatpush1.msra.mxu0 0.0
  %2750 = vmatprep.subr.mxu0 0.0
  %2751 = vmatpush1.msra.mxu0 0.0
  %2752 = vmatprep.subr.mxu0 0.0
  %2753 = vmatpush1.msra.mxu0 0.0
  %2754 = vmatprep.subr.mxu0 0.0
  %2755 = vmatpush1.msra.mxu0 0.0
  %2756 = vmatprep.subr.mxu0 0.0
  %2757 = vmatpush1.msra.mxu0 0.0
  %2758 = vmatprep.subr.mxu0 0.0
  %2759 = vmatpush1.msra.mxu0 0.0
  %2760 = vmatprep.subr.mxu0 0.0
  %2761 = vmatpush1.msra.mxu0 0.0
  %2762 = vmatprep.subr.mxu0 0.0
  %2763 = vmatpush1.msra.mxu0 0.0
  %2764 = vmatprep.subr.mxu0 0.0
  %2765 = vmatpush1.msra.mxu0 0.0
  %2766 = vmatprep.subr.mxu0 0.0
  %2767 = vmatpush1.msra.mxu0 0.0
  %2768 = vmatprep.subr.mxu0 0.0
  %2769 = vmatpush1.msra.mxu0 0.0
  %2770 = vmatprep.subr.mxu0 0.0
  %2771 = vmatpush1.msra.mxu0 0.0
  %2772 = vmatprep.subr.mxu0 0.0
  %2773 = vmatpush1.msra.mxu0 0.0
  %2774 = vmatprep.subr.mxu0 0.0
  %2775 = vmatpush1.msra.mxu0 0.0
  %2776 = vmatprep.subr.mxu0 0.0
  %2777 = vmatpush1.msra.mxu0 0.0
  %2778 = vmatprep.subr.mxu0 0.0
  %2779 = vmatpush1.msra.mxu0 0.0
  %2780 = vmatprep.subr.mxu0 0.0
  %2781 = vmatpush1.msra.mxu0 0.0
  %2782 = vmatprep.subr.mxu0 0.0
  %2783 = vmatpush1.msra.mxu0 0.0
  %2784 = vmatprep.subr.mxu0 0.0
  %2785 = vmatpush1.msra.mxu0 0.0
  %2786 = vmatprep.subr.mxu0 0.0
  %2787 = vmatpush1.msra.mxu0 0.0
  %2788 = vmatprep.subr.mxu0 0.0
  %2789 = vmatpush1.msra.mxu0 0.0
  %2790 = vmatprep.subr.mxu0 0.0
  %2791 = vmatpush1.msra.mxu0 0.0
  %2792 = vmatprep.subr.mxu0 0.0
  %2793 = vmatpush1.msra.mxu0 0.0
  %2794 = vmatprep.subr.mxu0 0.0
  %2795 = vmatpush1.msra.mxu0 0.0
  %2796 = vmatprep.subr.mxu0 0.0
  %2797 = vmatpush1.msra.mxu0 0.0
  %2798 = vmatprep.subr.mxu0 0.0
  %2799 = vmatpush1.msra.mxu0 0.0
  %2800 = vmatprep.subr.mxu0 0.0
  %2801 = vmatpush1.msra.mxu0 0.0
  %2802 = vmatprep.subr.mxu0 0.0
  %2803 = vmatpush1.msra.mxu0 0.0
  %2804 = vmatprep.subr.mxu0 0.0
  %2805 = vmatpush1.msra.mxu0 0.0
  %2806 = vmatprep.mubr.f32.mxu0 0.0
  %2807 = vmatmul.mubr.f32.gmra.mrb[0].mxu0 %v2740
  %v2808 = vpop.f32.mrb[0].mxu0
  %v2809 = vadd.f32 0.0, %v2808
  %v2810 = vpop.f32.mrb[0].mxu0
  %2811 = vdwg.mxu0
  %v2812 = vadd.f32 %v2739, %v2809
  %v2813 = vsub.f32 0.0, %v2812
  %v2814 = vmul.f32 %v2813, 1.442695
  %v2815 = vpow.pop %v2814
  %v2816 = vadd.f32 %v2815, 1.0
  %v2817 = vrcp.pop %v2816
  %v2818 = vmul.f32 1.0, %v2817
  %v2819 = vtanh.pop %v2812
  %v2820 = vmul.f32 %v2818, %v2725
  %2822 = vrot.lane.b32.xlu0 %v2819, 120
  %v2823 = vpop.permute.xlu0 %2822
  %v2825 = vmul.f32 %v2818, %v2823
  %2827 = vrot.lane.b32.xlu0 %v2825, 4
  %v2828 = vpop.permute.xlu0 %2827
  %v2830 = vadd.f32 %v2820, %v2828
  %v2831 = vtanh.pop %v2830
  %2833 = vrot.lane.b32.xlu0 %v2831, 8
  %v2834 = vpop.permute.xlu0 %2833
  %v2836 = vmul.f32 %v2818, %v2834
  %2838 = vrot.lane.b32.xlu0 %v2836, 116
  %v2839 = vpop.permute.xlu0 %2838
  %s2841 = scalar_lea.vmem %s9, 24
  %2842 = vst.msk [vmem:[%s2841] sm:$0xff] %vm227, %v2839
  %s2843 = scalar_lea.vmem [#allocation4], 32
  %v2844 = vld [vmem:[%s2843] sm:$0xff]
  %v2845 = vsel %vm227, %v2839, 0
  %2847 = vmatprep.subr.mxu0 0.0
  %2848 = vmatpush1.msra.mxu0 %v2426
  %2849 = vmatprep.subr.mxu0 0.0
  %2850 = vmatpush1.msra.mxu0 0.0
  %2851 = vmatprep.subr.mxu0 0.0
  %2852 = vmatpush1.msra.mxu0 0.0
  %2853 = vmatprep.subr.mxu0 0.0
  %2854 = vmatpush1.msra.mxu0 0.0
  %2855 = vmatprep.subr.mxu0 0.0
  %2856 = vmatpush1.msra.mxu0 0.0
  %2857 = vmatprep.subr.mxu0 0.0
  %2858 = vmatpush1.msra.mxu0 0.0
  %2859 = vmatprep.subr.mxu0 0.0
  %2860 = vmatpush1.msra.mxu0 0.0
  %2861 = vmatprep.subr.mxu0 0.0
  %2862 = vmatpush1.msra.mxu0 0.0
  %2863 = vmatprep.subr.mxu0 0.0
  %2864 = vmatpush1.msra.mxu0 0.0
  %2865 = vmatprep.subr.mxu0 0.0
  %2866 = vmatpush1.msra.mxu0 0.0
  %2867 = vmatprep.subr.mxu0 0.0
  %2868 = vmatpush1.msra.mxu0 0.0
  %2869 = vmatprep.subr.mxu0 0.0
  %2870 = vmatpush1.msra.mxu0 0.0
  %2871 = vmatprep.subr.mxu0 0.0
  %2872 = vmatpush1.msra.mxu0 0.0
  %2873 = vmatprep.subr.mxu0 0.0
  %2874 = vmatpush1.msra.mxu0 0.0
  %2875 = vmatprep.subr.mxu0 0.0
  %2876 = vmatpush1.msra.mxu0 0.0
  %2877 = vmatprep.subr.mxu0 0.0
  %2878 = vmatpush1.msra.mxu0 0.0
  %2879 = vmatprep.subr.mxu0 0.0
  %2880 = vmatpush1.msra.mxu0 0.0
  %2881 = vmatprep.subr.mxu0 0.0
  %2882 = vmatpush1.msra.mxu0 0.0
  %2883 = vmatprep.subr.mxu0 0.0
  %2884 = vmatpush1.msra.mxu0 0.0
  %2885 = vmatprep.subr.mxu0 0.0
  %2886 = vmatpush1.msra.mxu0 0.0
  %2887 = vmatprep.subr.mxu0 0.0
  %2888 = vmatpush1.msra.mxu0 0.0
  %2889 = vmatprep.subr.mxu0 0.0
  %2890 = vmatpush1.msra.mxu0 0.0
  %2891 = vmatprep.subr.mxu0 0.0
  %2892 = vmatpush1.msra.mxu0 0.0
  %2893 = vmatprep.subr.mxu0 0.0
  %2894 = vmatpush1.msra.mxu0 0.0
  %2895 = vmatprep.subr.mxu0 0.0
  %2896 = vmatpush1.msra.mxu0 0.0
  %2897 = vmatprep.subr.mxu0 0.0
  %2898 = vmatpush1.msra.mxu0 0.0
  %2899 = vmatprep.subr.mxu0 0.0
  %2900 = vmatpush1.msra.mxu0 0.0
  %2901 = vmatprep.subr.mxu0 0.0
  %2902 = vmatpush1.msra.mxu0 0.0
  %2903 = vmatprep.subr.mxu0 0.0
  %2904 = vmatpush1.msra.mxu0 0.0
  %2905 = vmatprep.subr.mxu0 0.0
  %2906 = vmatpush1.msra.mxu0 0.0
  %2907 = vmatprep.subr.mxu0 0.0
  %2908 = vmatpush1.msra.mxu0 0.0
  %2909 = vmatprep.subr.mxu0 0.0
  %2910 = vmatpush1.msra.mxu0 0.0
  %2911 = vmatprep.mubr.f32.mxu0 0.0
  %2912 = vmatmul.mubr.f32.gmra.mrb[0].mxu0 %v2845
  %v2913 = vpop.f32.mrb[0].mxu0
  %v2914 = vadd.f32 0.0, %v2913
  %v2915 = vpop.f32.mrb[0].mxu0
  %2916 = vdwg.mxu0
  %v2917 = vadd.f32 %v2844, %v2914
  %v2918 = vsub.f32 0.0, %v2917
  %v2919 = vmul.f32 %v2918, 1.442695
  %v2920 = vpow.pop %v2919
  %v2921 = vadd.f32 %v2920, 1.0
  %v2922 = vrcp.pop %v2921
  %v2923 = vmul.f32 1.0, %v2922
  %v2924 = vtanh.pop %v2917
  %v2925 = vmul.f32 %v2923, %v2830
  %2927 = vrot.lane.b32.xlu0 %v2924, 120
  %v2928 = vpop.permute.xlu0 %2927
  %v2930 = vmul.f32 %v2923, %v2928
  %2932 = vrot.lane.b32.xlu0 %v2930, 4
  %v2933 = vpop.permute.xlu0 %2932
  %v2935 = vadd.f32 %v2925, %v2933
  %v2936 = vtanh.pop %v2935
  %2938 = vrot.lane.b32.xlu0 %v2936, 8
  %v2939 = vpop.permute.xlu0 %2938
  %v2941 = vmul.f32 %v2923, %v2939
  %2943 = vrot.lane.b32.xlu0 %v2941, 116
  %v2944 = vpop.permute.xlu0 %2943
  %s2946 = scalar_lea.vmem %s9, 32
  %2947 = vst.msk [vmem:[%s2946] sm:$0xff] %vm227, %v2944
  %s2948 = scalar_lea.vmem [#allocation4], 40
  %v2949 = vld [vmem:[%s2948] sm:$0xff]
  %v2950 = vsel %vm227, %v2944, 0
  %2952 = vmatprep.subr.mxu0 0.0
  %2953 = vmatpush1.msra.mxu0 %v2426
  %2954 = vmatprep.subr.mxu0 0.0
  %2955 = vmatpush1.msra.mxu0 0.0
  %2956 = vmatprep.subr.mxu0 0.0
  %2957 = vmatpush1.msra.mxu0 0.0
  %2958 = vmatprep.subr.mxu0 0.0
  %2959 = vmatpush1.msra.mxu0 0.0
  %2960 = vmatprep.subr.mxu0 0.0
  %2961 = vmatpush1.msra.mxu0 0.0
  %2962 = vmatprep.subr.mxu0 0.0
  %2963 = vmatpush1.msra.mxu0 0.0
  %2964 = vmatprep.subr.mxu0 0.0
  %2965 = vmatpush1.msra.mxu0 0.0
  %2966 = vmatprep.subr.mxu0 0.0
  %2967 = vmatpush1.msra.mxu0 0.0
  %2968 = vmatprep.subr.mxu0 0.0
  %2969 = vmatpush1.msra.mxu0 0.0
  %2970 = vmatprep.subr.mxu0 0.0
  %2971 = vmatpush1.msra.mxu0 0.0
  %2972 = vmatprep.subr.mxu0 0.0
  %2973 = vmatpush1.msra.mxu0 0.0
  %2974 = vmatprep.subr.mxu0 0.0
  %2975 = vmatpush1.msra.mxu0 0.0
  %2976 = vmatprep.subr.mxu0 0.0
  %2977 = vmatpush1.msra.mxu0 0.0
  %2978 = vmatprep.subr.mxu0 0.0
  %2979 = vmatpush1.msra.mxu0 0.0
  %2980 = vmatprep.subr.mxu0 0.0
  %2981 = vmatpush1.msra.mxu0 0.0
  %2982 = vmatprep.subr.mxu0 0.0
  %2983 = vmatpush1.msra.mxu0 0.0
  %2984 = vmatprep.subr.mxu0 0.0
  %2985 = vmatpush1.msra.mxu0 0.0
  %2986 = vmatprep.subr.mxu0 0.0
  %2987 = vmatpush1.msra.mxu0 0.0
  %2988 = vmatprep.subr.mxu0 0.0
  %2989 = vmatpush1.msra.mxu0 0.0
  %2990 = vmatprep.subr.mxu0 0.0
  %2991 = vmatpush1.msra.mxu0 0.0
  %2992 = vmatprep.subr.mxu0 0.0
  %2993 = vmatpush1.msra.mxu0 0.0
  %2994 = vmatprep.subr.mxu0 0.0
  %2995 = vmatpush1.msra.mxu0 0.0
  %2996 = vmatprep.subr.mxu0 0.0
  %2997 = vmatpush1.msra.mxu0 0.0
  %2998 = vmatprep.subr.mxu0 0.0
  %2999 = vmatpush1.msra.mxu0 0.0
  %3000 = vmatprep.subr.mxu0 0.0
  %3001 = vmatpush1.msra.mxu0 0.0
  %3002 = vmatprep.subr.mxu0 0.0
  %3003 = vmatpush1.msra.mxu0 0.0
  %3004 = vmatprep.subr.mxu0 0.0
  %3005 = vmatpush1.msra.mxu0 0.0
  %3006 = vmatprep.subr.mxu0 0.0
  %3007 = vmatpush1.msra.mxu0 0.0
  %3008 = vmatprep.subr.mxu0 0.0
  %3009 = vmatpush1.msra.mxu0 0.0
  %3010 = vmatprep.subr.mxu0 0.0
  %3011 = vmatpush1.msra.mxu0 0.0
  %3012 = vmatprep.subr.mxu0 0.0
  %3013 = vmatpush1.msra.mxu0 0.0
  %3014 = vmatprep.subr.mxu0 0.0
  %3015 = vmatpush1.msra.mxu0 0.0
  %3016 = vmatprep.mubr.f32.mxu0 0.0
  %3017 = vmatmul.mubr.f32.gmra.mrb[0].mxu0 %v2950
  %v3018 = vpop.f32.mrb[0].mxu0
  %v3019 = vadd.f32 0.0, %v3018
  %v3020 = vpop.f32.mrb[0].mxu0
  %3021 = vdwg.mxu0
  %v3022 = vadd.f32 %v2949, %v3019
  %v3023 = vsub.f32 0.0, %v3022
  %v3024 = vmul.f32 %v3023, 1.442695
  %v3025 = vpow.pop %v3024
  %v3026 = vadd.f32 %v3025, 1.0
  %v3027 = vrcp.pop %v3026
  %v3028 = vmul.f32 1.0, %v3027
  %v3029 = vtanh.pop %v3022
  %v3030 = vmul.f32 %v3028, %v2935
  %3032 = vrot.lane.b32.xlu0 %v3029, 120
  %v3033 = vpop.permute.xlu0 %3032
  %v3035 = vmul.f32 %v3028, %v3033
  %3037 = vrot.lane.b32.xlu0 %v3035, 4
  %v3038 = vpop.permute.xlu0 %3037
  %v3040 = vadd.f32 %v3030, %v3038
  %v3041 = vtanh.pop %v3040
  %3043 = vrot.lane.b32.xlu0 %v3041, 8
  %v3044 = vpop.permute.xlu0 %3043
  %v3046 = vmul.f32 %v3028, %v3044
  %3048 = vrot.lane.b32.xlu0 %v3046, 116
  %v3049 = vpop.permute.xlu0 %3048
  %s3051 = scalar_lea.vmem %s9, 40
  %3052 = vst.msk [vmem:[%s3051] sm:$0xff] %vm227, %v3049
  %s3053 = scalar_lea.vmem [#allocation4], 48
  %v3054 = vld [vmem:[%s3053] sm:$0xff]
  %v3055 = vsel %vm227, %v3049, 0
  %3057 = vmatprep.subr.mxu0 0.0
  %3058 = vmatpush1.msra.mxu0 %v2426
  %3059 = vmatprep.subr.mxu0 0.0
  %3060 = vmatpush1.msra.mxu0 0.0
  %3061 = vmatprep.subr.mxu0 0.0
  %3062 = vmatpush1.msra.mxu0 0.0
  %3063 = vmatprep.subr.mxu0 0.0
  %3064 = vmatpush1.msra.mxu0 0.0
  %3065 = vmatprep.subr.mxu0 0.0
  %3066 = vmatpush1.msra.mxu0 0.0
  %3067 = vmatprep.subr.mxu0 0.0
  %3068 = vmatpush1.msra.mxu0 0.0
  %3069 = vmatprep.subr.mxu0 0.0
  %3070 = vmatpush1.msra.mxu0 0.0
  %3071 = vmatprep.subr.mxu0 0.0
  %3072 = vmatpush1.msra.mxu0 0.0
  %3073 = vmatprep.subr.mxu0 0.0
  %3074 = vmatpush1.msra.mxu0 0.0
  %3075 = vmatprep.subr.mxu0 0.0
  %3076 = vmatpush1.msra.mxu0 0.0
  %3077 = vmatprep.subr.mxu0 0.0
  %3078 = vmatpush1.msra.mxu0 0.0
  %3079 = vmatprep.subr.mxu0 0.0
  %3080 = vmatpush1.msra.mxu0 0.0
  %3081 = vmatprep.subr.mxu0 0.0
  %3082 = vmatpush1.msra.mxu0 0.0
  %3083 = vmatprep.subr.mxu0 0.0
  %3084 = vmatpush1.msra.mxu0 0.0
  %3085 = vmatprep.subr.mxu0 0.0
  %3086 = vmatpush1.msra.mxu0 0.0
  %3087 = vmatprep.subr.mxu0 0.0
  %3088 = vmatpush1.msra.mxu0 0.0
  %3089 = vmatprep.subr.mxu0 0.0
  %3090 = vmatpush1.msra.mxu0 0.0
  %3091 = vmatprep.subr.mxu0 0.0
  %3092 = vmatpush1.msra.mxu0 0.0
  %3093 = vmatprep.subr.mxu0 0.0
  %3094 = vmatpush1.msra.mxu0 0.0
  %3095 = vmatprep.subr.mxu0 0.0
  %3096 = vmatpush1.msra.mxu0 0.0
  %3097 = vmatprep.subr.mxu0 0.0
  %3098 = vmatpush1.msra.mxu0 0.0
  %3099 = vmatprep.subr.mxu0 0.0
  %3100 = vmatpush1.msra.mxu0 0.0
  %3101 = vmatprep.subr.mxu0 0.0
  %3102 = vmatpush1.msra.mxu0 0.0
  %3103 = vmatprep.subr.mxu0 0.0
  %3104 = vmatpush1.msra.mxu0 0.0
  %3105 = vmatprep.subr.mxu0 0.0
  %3106 = vmatpush1.msra.mxu0 0.0
  %3107 = vmatprep.subr.mxu0 0.0
  %3108 = vmatpush1.msra.mxu0 0.0
  %3109 = vmatprep.subr.mxu0 0.0
  %3110 = vmatpush1.msra.mxu0 0.0
  %3111 = vmatprep.subr.mxu0 0.0
  %3112 = vmatpush1.msra.mxu0 0.0
  %3113 = vmatprep.subr.mxu0 0.0
  %3114 = vmatpush1.msra.mxu0 0.0
  %3115 = vmatprep.subr.mxu0 0.0
  %3116 = vmatpush1.msra.mxu0 0.0
  %3117 = vmatprep.subr.mxu0 0.0
  %3118 = vmatpush1.msra.mxu0 0.0
  %3119 = vmatprep.subr.mxu0 0.0
  %3120 = vmatpush1.msra.mxu0 0.0
  %3121 = vmatprep.mubr.f32.mxu0 0.0
  %3122 = vmatmul.mubr.f32.gmra.mrb[0].mxu0 %v3055
  %v3123 = vpop.f32.mrb[0].mxu0
  %v3124 = vadd.f32 0.0, %v3123
  %v3125 = vpop.f32.mrb[0].mxu0
  %3126 = vdwg.mxu0
  %v3127 = vadd.f32 %v3054, %v3124
  %v3128 = vsub.f32 0.0, %v3127
  %v3129 = vmul.f32 %v3128, 1.442695
  %v3130 = vpow.pop %v3129
  %v3131 = vadd.f32 %v3130, 1.0
  %v3132 = vrcp.pop %v3131
  %v3133 = vmul.f32 1.0, %v3132
  %v3134 = vtanh.pop %v3127
  %v3135 = vmul.f32 %v3133, %v3040
  %3137 = vrot.lane.b32.xlu0 %v3134, 120
  %v3138 = vpop.permute.xlu0 %3137
  %v3140 = vmul.f32 %v3133, %v3138
  %3142 = vrot.lane.b32.xlu0 %v3140, 4
  %v3143 = vpop.permute.xlu0 %3142
  %v3145 = vadd.f32 %v3135, %v3143
  %v3146 = vtanh.pop %v3145
  %3148 = vrot.lane.b32.xlu0 %v3146, 8
  %v3149 = vpop.permute.xlu0 %3148
  %v3151 = vmul.f32 %v3133, %v3149
  %3153 = vrot.lane.b32.xlu0 %v3151, 116
  %v3154 = vpop.permute.xlu0 %3153
  %s3156 = scalar_lea.vmem %s9, 48
  %3157 = vst.msk [vmem:[%s3156] sm:$0xff] %vm227, %v3154
  %s3158 = scalar_lea.vmem [#allocation4], 56
  %v3159 = vld [vmem:[%s3158] sm:$0xff]
  %v3160 = vsel %vm227, %v3154, 0
  %3162 = vmatprep.subr.mxu0 0.0
  %3163 = vmatpush1.msra.mxu0 %v2426
  %3164 = vmatprep.subr.mxu0 0.0
  %3165 = vmatpush1.msra.mxu0 0.0
  %3166 = vmatprep.subr.mxu0 0.0
  %3167 = vmatpush1.msra.mxu0 0.0
  %3168 = vmatprep.subr.mxu0 0.0
  %3169 = vmatpush1.msra.mxu0 0.0
  %3170 = vmatprep.subr.mxu0 0.0
  %3171 = vmatpush1.msra.mxu0 0.0
  %3172 = vmatprep.subr.mxu0 0.0
  %3173 = vmatpush1.msra.mxu0 0.0
  %3174 = vmatprep.subr.mxu0 0.0
  %3175 = vmatpush1.msra.mxu0 0.0
  %3176 = vmatprep.subr.mxu0 0.0
  %3177 = vmatpush1.msra.mxu0 0.0
  %3178 = vmatprep.subr.mxu0 0.0
  %3179 = vmatpush1.msra.mxu0 0.0
  %3180 = vmatprep.subr.mxu0 0.0
  %3181 = vmatpush1.msra.mxu0 0.0
  %3182 = vmatprep.subr.mxu0 0.0
  %3183 = vmatpush1.msra.mxu0 0.0
  %3184 = vmatprep.subr.mxu0 0.0
  %3185 = vmatpush1.msra.mxu0 0.0
  %3186 = vmatprep.subr.mxu0 0.0
  %3187 = vmatpush1.msra.mxu0 0.0
  %3188 = vmatprep.subr.mxu0 0.0
  %3189 = vmatpush1.msra.mxu0 0.0
  %3190 = vmatprep.subr.mxu0 0.0
  %3191 = vmatpush1.msra.mxu0 0.0
  %3192 = vmatprep.subr.mxu0 0.0
  %3193 = vmatpush1.msra.mxu0 0.0
  %3194 = vmatprep.subr.mxu0 0.0
  %3195 = vmatpush1.msra.mxu0 0.0
  %3196 = vmatprep.subr.mxu0 0.0
  %3197 = vmatpush1.msra.mxu0 0.0
  %3198 = vmatprep.subr.mxu0 0.0
  %3199 = vmatpush1.msra.mxu0 0.0
  %3200 = vmatprep.subr.mxu0 0.0
  %3201 = vmatpush1.msra.mxu0 0.0
  %3202 = vmatprep.subr.mxu0 0.0
  %3203 = vmatpush1.msra.mxu0 0.0
  %3204 = vmatprep.subr.mxu0 0.0
  %3205 = vmatpush1.msra.mxu0 0.0
  %3206 = vmatprep.subr.mxu0 0.0
  %3207 = vmatpush1.msra.mxu0 0.0
  %3208 = vmatprep.subr.mxu0 0.0
  %3209 = vmatpush1.msra.mxu0 0.0
  %3210 = vmatprep.subr.mxu0 0.0
  %3211 = vmatpush1.msra.mxu0 0.0
  %3212 = vmatprep.subr.mxu0 0.0
  %3213 = vmatpush1.msra.mxu0 0.0
  %3214 = vmatprep.subr.mxu0 0.0
  %3215 = vmatpush1.msra.mxu0 0.0
  %3216 = vmatprep.subr.mxu0 0.0
  %3217 = vmatpush1.msra.mxu0 0.0
  %3218 = vmatprep.subr.mxu0 0.0
  %3219 = vmatpush1.msra.mxu0 0.0
  %3220 = vmatprep.subr.mxu0 0.0
  %3221 = vmatpush1.msra.mxu0 0.0
  %3222 = vmatprep.subr.mxu0 0.0
  %3223 = vmatpush1.msra.mxu0 0.0
  %3224 = vmatprep.subr.mxu0 0.0
  %3225 = vmatpush1.msra.mxu0 0.0
  %3226 = vmatprep.mubr.f32.mxu0 0.0
  %3227 = vmatmul.mubr.f32.gmra.mrb[0].mxu0 %v3160
  %v3228 = vpop.f32.mrb[0].mxu0
  %v3229 = vadd.f32 0.0, %v3228
  %v3230 = vpop.f32.mrb[0].mxu0
  %3231 = vdwg.mxu0
  %v3232 = vadd.f32 %v3159, %v3229
  %v3233 = vsub.f32 0.0, %v3232
  %v3234 = vmul.f32 %v3233, 1.442695
  %v3235 = vpow.pop %v3234
  %v3236 = vadd.f32 %v3235, 1.0
  %v3237 = vrcp.pop %v3236
  %v3238 = vmul.f32 1.0, %v3237
  %v3239 = vtanh.pop %v3232
  %v3240 = vmul.f32 %v3238, %v3145
  %3242 = vrot.lane.b32.xlu0 %v3239, 120
  %v3243 = vpop.permute.xlu0 %3242
  %v3245 = vmul.f32 %v3238, %v3243
  %3247 = vrot.lane.b32.xlu0 %v3245, 4
  %v3248 = vpop.permute.xlu0 %3247
  %v3250 = vadd.f32 %v3240, %v3248
  %v3251 = vtanh.pop %v3250
  %3253 = vrot.lane.b32.xlu0 %v3251, 8
  %v3254 = vpop.permute.xlu0 %3253
  %v3256 = vmul.f32 %v3238, %v3254
  %3258 = vrot.lane.b32.xlu0 %v3256, 116
  %v3259 = vpop.permute.xlu0 %3258
  %s3261 = scalar_lea.vmem %s9, 56
  %3262 = vst.msk [vmem:[%s3261] sm:$0xff] %vm227, %v3259
  %s3263 = scalar_lea.vmem [#allocation4], 64
  %v3264 = vld [vmem:[%s3263] sm:$0xff]
  %v3265 = vsel %vm227, %v3259, 0
  %3267 = vmatprep.subr.mxu0 0.0
  %3268 = vmatpush1.msra.mxu0 %v2426
  %3269 = vmatprep.subr.mxu0 0.0
  %3270 = vmatpush1.msra.mxu0 0.0
  %3271 = vmatprep.subr.mxu0 0.0
  %3272 = vmatpush1.msra.mxu0 0.0
  %3273 = vmatprep.subr.mxu0 0.0
  %3274 = vmatpush1.msra.mxu0 0.0
  %3275 = vmatprep.subr.mxu0 0.0
  %3276 = vmatpush1.msra.mxu0 0.0
  %3277 = vmatprep.subr.mxu0 0.0
  %3278 = vmatpush1.msra.mxu0 0.0
  %3279 = vmatprep.subr.mxu0 0.0
  %3280 = vmatpush1.msra.mxu0 0.0
  %3281 = vmatprep.subr.mxu0 0.0
  %3282 = vmatpush1.msra.mxu0 0.0
  %3283 = vmatprep.subr.mxu0 0.0
  %3284 = vmatpush1.msra.mxu0 0.0
  %3285 = vmatprep.subr.mxu0 0.0
  %3286 = vmatpush1.msra.mxu0 0.0
  %3287 = vmatprep.subr.mxu0 0.0
  %3288 = vmatpush1.msra.mxu0 0.0
  %3289 = vmatprep.subr.mxu0 0.0
  %3290 = vmatpush1.msra.mxu0 0.0
  %3291 = vmatprep.subr.mxu0 0.0
  %3292 = vmatpush1.msra.mxu0 0.0
  %3293 = vmatprep.subr.mxu0 0.0
  %3294 = vmatpush1.msra.mxu0 0.0
  %3295 = vmatprep.subr.mxu0 0.0
  %3296 = vmatpush1.msra.mxu0 0.0
  %3297 = vmatprep.subr.mxu0 0.0
  %3298 = vmatpush1.msra.mxu0 0.0
  %3299 = vmatprep.subr.mxu0 0.0
  %3300 = vmatpush1.msra.mxu0 0.0
  %3301 = vmatprep.subr.mxu0 0.0
  %3302 = vmatpush1.msra.mxu0 0.0
  %3303 = vmatprep.subr.mxu0 0.0
  %3304 = vmatpush1.msra.mxu0 0.0
  %3305 = vmatprep.subr.mxu0 0.0
  %3306 = vmatpush1.msra.mxu0 0.0
  %3307 = vmatprep.subr.mxu0 0.0
  %3308 = vmatpush1.msra.mxu0 0.0
  %3309 = vmatprep.subr.mxu0 0.0
  %3310 = vmatpush1.msra.mxu0 0.0
  %3311 = vmatprep.subr.mxu0 0.0
  %3312 = vmatpush1.msra.mxu0 0.0
  %3313 = vmatprep.subr.mxu0 0.0
  %3314 = vmatpush1.msra.mxu0 0.0
  %3315 = vmatprep.subr.mxu0 0.0
  %3316 = vmatpush1.msra.mxu0 0.0
  %3317 = vmatprep.subr.mxu0 0.0
  %3318 = vmatpush1.msra.mxu0 0.0
  %3319 = vmatprep.subr.mxu0 0.0
  %3320 = vmatpush1.msra.mxu0 0.0
  %3321 = vmatprep.subr.mxu0 0.0
  %3322 = vmatpush1.msra.mxu0 0.0
  %3323 = vmatprep.subr.mxu0 0.0
  %3324 = vmatpush1.msra.mxu0 0.0
  %3325 = vmatprep.subr.mxu0 0.0
  %3326 = vmatpush1.msra.mxu0 0.0
  %3327 = vmatprep.subr.mxu0 0.0
  %3328 = vmatpush1.msra.mxu0 0.0
  %3329 = vmatprep.subr.mxu0 0.0
  %3330 = vmatpush1.msra.mxu0 0.0
  %3331 = vmatprep.mubr.f32.mxu0 0.0
  %3332 = vmatmul.mubr.f32.gmra.mrb[0].mxu0 %v3265
  %v3333 = vpop.f32.mrb[0].mxu0
  %v3334 = vadd.f32 0.0, %v3333
  %v3335 = vpop.f32.mrb[0].mxu0
  %3336 = vdwg.mxu0
  %v3337 = vadd.f32 %v3264, %v3334
  %v3338 = vsub.f32 0.0, %v3337
  %v3339 = vmul.f32 %v3338, 1.442695
  %v3340 = vpow.pop %v3339
  %v3341 = vadd.f32 %v3340, 1.0
  %v3342 = vrcp.pop %v3341
  %v3343 = vmul.f32 1.0, %v3342
  %v3344 = vtanh.pop %v3337
  %v3345 = vmul.f32 %v3343, %v3250
  %3347 = vrot.lane.b32.xlu0 %v3344, 120
  %v3348 = vpop.permute.xlu0 %3347
  %v3350 = vmul.f32 %v3343, %v3348
  %3352 = vrot.lane.b32.xlu0 %v3350, 4
  %v3353 = vpop.permute.xlu0 %3352
  %v3355 = vadd.f32 %v3345, %v3353
  %v3356 = vtanh.pop %v3355
  %3358 = vrot.lane.b32.xlu0 %v3356, 8
  %v3359 = vpop.permute.xlu0 %3358
  %v3361 = vmul.f32 %v3343, %v3359
  %3363 = vrot.lane.b32.xlu0 %v3361, 116
  %v3364 = vpop.permute.xlu0 %3363
  %s3366 = scalar_lea.vmem %s9, 64
  %3367 = vst.msk [vmem:[%s3366] sm:$0xff] %vm227, %v3364
  %s3368 = scalar_lea.vmem [#allocation4], 72
  %v3369 = vld [vmem:[%s3368] sm:$0xff]
  %v3370 = vsel %vm227, %v3364, 0
  %3372 = vmatprep.subr.mxu0 0.0
  %3373 = vmatpush1.msra.mxu0 %v2426
  %3374 = vmatprep.subr.mxu0 0.0
  %3375 = vmatpush1.msra.mxu0 0.0
  %3376 = vmatprep.subr.mxu0 0.0
  %3377 = vmatpush1.msra.mxu0 0.0
  %3378 = vmatprep.subr.mxu0 0.0
  %3379 = vmatpush1.msra.mxu0 0.0
  %3380 = vmatprep.subr.mxu0 0.0
  %3381 = vmatpush1.msra.mxu0 0.0
  %3382 = vmatprep.subr.mxu0 0.0
  %3383 = vmatpush1.msra.mxu0 0.0
  %3384 = vmatprep.subr.mxu0 0.0
  %3385 = vmatpush1.msra.mxu0 0.0
  %3386 = vmatprep.subr.mxu0 0.0
  %3387 = vmatpush1.msra.mxu0 0.0
  %3388 = vmatprep.subr.mxu0 0.0
  %3389 = vmatpush1.msra.mxu0 0.0
  %3390 = vmatprep.subr.mxu0 0.0
  %3391 = vmatpush1.msra.mxu0 0.0
  %3392 = vmatprep.subr.mxu0 0.0
  %3393 = vmatpush1.msra.mxu0 0.0
  %3394 = vmatprep.subr.mxu0 0.0
  %3395 = vmatpush1.msra.mxu0 0.0
  %3396 = vmatprep.subr.mxu0 0.0
  %3397 = vmatpush1.msra.mxu0 0.0
  %3398 = vmatprep.subr.mxu0 0.0
  %3399 = vmatpush1.msra.mxu0 0.0
  %3400 = vmatprep.subr.mxu0 0.0
  %3401 = vmatpush1.msra.mxu0 0.0
  %3402 = vmatprep.subr.mxu0 0.0
  %3403 = vmatpush1.msra.mxu0 0.0
  %3404 = vmatprep.subr.mxu0 0.0
  %3405 = vmatpush1.msra.mxu0 0.0
  %3406 = vmatprep.subr.mxu0 0.0
  %3407 = vmatpush1.msra.mxu0 0.0
  %3408 = vmatprep.subr.mxu0 0.0
  %3409 = vmatpush1.msra.mxu0 0.0
  %3410 = vmatprep.subr.mxu0 0.0
  %3411 = vmatpush1.msra.mxu0 0.0
  %3412 = vmatprep.subr.mxu0 0.0
  %3413 = vmatpush1.msra.mxu0 0.0
  %3414 = vmatprep.subr.mxu0 0.0
  %3415 = vmatpush1.msra.mxu0 0.0
  %3416 = vmatprep.subr.mxu0 0.0
  %3417 = vmatpush1.msra.mxu0 0.0
  %3418 = vmatprep.subr.mxu0 0.0
  %3419 = vmatpush1.msra.mxu0 0.0
  %3420 = vmatprep.subr.mxu0 0.0
  %3421 = vmatpush1.msra.mxu0 0.0
  %3422 = vmatprep.subr.mxu0 0.0
  %3423 = vmatpush1.msra.mxu0 0.0
  %3424 = vmatprep.subr.mxu0 0.0
  %3425 = vmatpush1.msra.mxu0 0.0
  %3426 = vmatprep.subr.mxu0 0.0
  %3427 = vmatpush1.msra.mxu0 0.0
  %3428 = vmatprep.subr.mxu0 0.0
  %3429 = vmatpush1.msra.mxu0 0.0
  %3430 = vmatprep.subr.mxu0 0.0
  %3431 = vmatpush1.msra.mxu0 0.0
  %3432 = vmatprep.subr.mxu0 0.0
  %3433 = vmatpush1.msra.mxu0 0.0
  %3434 = vmatprep.subr.mxu0 0.0
  %3435 = vmatpush1.msra.mxu0 0.0
  %3436 = vmatprep.mubr.f32.mxu0 0.0
  %3437 = vmatmul.mubr.f32.gmra.mrb[0].mxu0 %v3370
  %v3438 = vpop.f32.mrb[0].mxu0
  %v3439 = vadd.f32 0.0, %v3438
  %v3440 = vpop.f32.mrb[0].mxu0
  %3441 = vdwg.mxu0
  %v3442 = vadd.f32 %v3369, %v3439
  %v3443 = vsub.f32 0.0, %v3442
  %v3444 = vmul.f32 %v3443, 1.442695
  %v3445 = vpow.pop %v3444
  %v3446 = vadd.f32 %v3445, 1.0
  %v3447 = vrcp.pop %v3446
  %v3448 = vmul.f32 1.0, %v3447
  %v3449 = vtanh.pop %v3442
  %v3450 = vmul.f32 %v3448, %v3355
  %3452 = vrot.lane.b32.xlu0 %v3449, 120
  %v3453 = vpop.permute.xlu0 %3452
  %v3455 = vmul.f32 %v3448, %v3453
  %3457 = vrot.lane.b32.xlu0 %v3455, 4
  %v3458 = vpop.permute.xlu0 %3457
  %v3460 = vadd.f32 %v3450, %v3458
  %v3461 = vtanh.pop %v3460
  %3463 = vrot.lane.b32.xlu0 %v3461, 8
  %v3464 = vpop.permute.xlu0 %3463
  %v3466 = vmul.f32 %v3448, %v3464
  %3468 = vrot.lane.b32.xlu0 %v3466, 116
  %v3469 = vpop.permute.xlu0 %3468
  %s3471 = scalar_lea.vmem %s9, 72
  %3472 = vst.msk [vmem:[%s3471] sm:$0xff] %vm227, %v3469
  %s3473 = scalar_lea.vmem [#allocation4], 80
  %v3474 = vld [vmem:[%s3473] sm:$0xff]
  %v3475 = vsel %vm227, %v3469, 0
  %3477 = vmatprep.subr.mxu0 0.0
  %3478 = vmatpush1.msra.mxu0 %v2426
  %3479 = vmatprep.subr.mxu0 0.0
  %3480 = vmatpush1.msra.mxu0 0.0
  %3481 = vmatprep.subr.mxu0 0.0
  %3482 = vmatpush1.msra.mxu0 0.0
  %3483 = vmatprep.subr.mxu0 0.0
  %3484 = vmatpush1.msra.mxu0 0.0
  %3485 = vmatprep.subr.mxu0 0.0
  %3486 = vmatpush1.msra.mxu0 0.0
  %3487 = vmatprep.subr.mxu0 0.0
  %3488 = vmatpush1.msra.mxu0 0.0
  %3489 = vmatprep.subr.mxu0 0.0
  %3490 = vmatpush1.msra.mxu0 0.0
  %3491 = vmatprep.subr.mxu0 0.0
  %3492 = vmatpush1.msra.mxu0 0.0
  %3493 = vmatprep.subr.mxu0 0.0
  %3494 = vmatpush1.msra.mxu0 0.0
  %3495 = vmatprep.subr.mxu0 0.0
  %3496 = vmatpush1.msra.mxu0 0.0
  %3497 = vmatprep.subr.mxu0 0.0
  %3498 = vmatpush1.msra.mxu0 0.0
  %3499 = vmatprep.subr.mxu0 0.0
  %3500 = vmatpush1.msra.mxu0 0.0
  %3501 = vmatprep.subr.mxu0 0.0
  %3502 = vmatpush1.msra.mxu0 0.0
  %3503 = vmatprep.subr.mxu0 0.0
  %3504 = vmatpush1.msra.mxu0 0.0
  %3505 = vmatprep.subr.mxu0 0.0
  %3506 = vmatpush1.msra.mxu0 0.0
  %3507 = vmatprep.subr.mxu0 0.0
  %3508 = vmatpush1.msra.mxu0 0.0
  %3509 = vmatprep.subr.mxu0 0.0
  %3510 = vmatpush1.msra.mxu0 0.0
  %3511 = vmatprep.subr.mxu0 0.0
  %3512 = vmatpush1.msra.mxu0 0.0
  %3513 = vmatprep.subr.mxu0 0.0
  %3514 = vmatpush1.msra.mxu0 0.0
  %3515 = vmatprep.subr.mxu0 0.0
  %3516 = vmatpush1.msra.mxu0 0.0
  %3517 = vmatprep.subr.mxu0 0.0
  %3518 = vmatpush1.msra.mxu0 0.0
  %3519 = vmatprep.subr.mxu0 0.0
  %3520 = vmatpush1.msra.mxu0 0.0
  %3521 = vmatprep.subr.mxu0 0.0
  %3522 = vmatpush1.msra.mxu0 0.0
  %3523 = vmatprep.subr.mxu0 0.0
  %3524 = vmatpush1.msra.mxu0 0.0
  %3525 = vmatprep.subr.mxu0 0.0
  %3526 = vmatpush1.msra.mxu0 0.0
  %3527 = vmatprep.subr.mxu0 0.0
  %3528 = vmatpush1.msra.mxu0 0.0
  %3529 = vmatprep.subr.mxu0 0.0
  %3530 = vmatpush1.msra.mxu0 0.0
  %3531 = vmatprep.subr.mxu0 0.0
  %3532 = vmatpush1.msra.mxu0 0.0
  %3533 = vmatprep.subr.mxu0 0.0
  %3534 = vmatpush1.msra.mxu0 0.0
  %3535 = vmatprep.subr.mxu0 0.0
  %3536 = vmatpush1.msra.mxu0 0.0
  %3537 = vmatprep.subr.mxu0 0.0
  %3538 = vmatpush1.msra.mxu0 0.0
  %3539 = vmatprep.subr.mxu0 0.0
  %3540 = vmatpush1.msra.mxu0 0.0
  %3541 = vmatprep.mubr.f32.mxu0 0.0
  %3542 = vmatmul.mubr.f32.gmra.mrb[0].mxu0 %v3475
  %v3543 = vpop.f32.mrb[0].mxu0
  %v3544 = vadd.f32 0.0, %v3543
  %v3545 = vpop.f32.mrb[0].mxu0
  %3546 = vdwg.mxu0
  %v3547 = vadd.f32 %v3474, %v3544
  %v3548 = vsub.f32 0.0, %v3547
  %v3549 = vmul.f32 %v3548, 1.442695
  %v3550 = vpow.pop %v3549
  %v3551 = vadd.f32 %v3550, 1.0
  %v3552 = vrcp.pop %v3551
  %v3553 = vmul.f32 1.0, %v3552
  %v3554 = vtanh.pop %v3547
  %v3555 = vmul.f32 %v3553, %v3460
  %3557 = vrot.lane.b32.xlu0 %v3554, 120
  %v3558 = vpop.permute.xlu0 %3557
  %v3560 = vmul.f32 %v3553, %v3558
  %3562 = vrot.lane.b32.xlu0 %v3560, 4
  %v3563 = vpop.permute.xlu0 %3562
  %v3565 = vadd.f32 %v3555, %v3563
  %v3566 = vtanh.pop %v3565
  %3568 = vrot.lane.b32.xlu0 %v3566, 8
  %v3569 = vpop.permute.xlu0 %3568
  %v3571 = vmul.f32 %v3553, %v3569
  %3573 = vrot.lane.b32.xlu0 %v3571, 116
  %v3574 = vpop.permute.xlu0 %3573
  %s3576 = scalar_lea.vmem %s9, 80
  %3577 = vst.msk [vmem:[%s3576] sm:$0xff] %vm227, %v3574
  %s3578 = scalar_lea.vmem [#allocation4], 88
  %v3579 = vld [vmem:[%s3578] sm:$0xff]
  %v3580 = vsel %vm227, %v3574, 0
  %3582 = vmatprep.subr.mxu0 0.0
  %3583 = vmatpush1.msra.mxu0 %v2426
  %3584 = vmatprep.subr.mxu0 0.0
  %3585 = vmatpush1.msra.mxu0 0.0
  %3586 = vmatprep.subr.mxu0 0.0
  %3587 = vmatpush1.msra.mxu0 0.0
  %3588 = vmatprep.subr.mxu0 0.0
  %3589 = vmatpush1.msra.mxu0 0.0
  %3590 = vmatprep.subr.mxu0 0.0
  %3591 = vmatpush1.msra.mxu0 0.0
  %3592 = vmatprep.subr.mxu0 0.0
  %3593 = vmatpush1.msra.mxu0 0.0
  %3594 = vmatprep.subr.mxu0 0.0
  %3595 = vmatpush1.msra.mxu0 0.0
  %3596 = vmatprep.subr.mxu0 0.0
  %3597 = vmatpush1.msra.mxu0 0.0
  %3598 = vmatprep.subr.mxu0 0.0
  %3599 = vmatpush1.msra.mxu0 0.0
  %3600 = vmatprep.subr.mxu0 0.0
  %3601 = vmatpush1.msra.mxu0 0.0
  %3602 = vmatprep.subr.mxu0 0.0
  %3603 = vmatpush1.msra.mxu0 0.0
  %3604 = vmatprep.subr.mxu0 0.0
  %3605 = vmatpush1.msra.mxu0 0.0
  %3606 = vmatprep.subr.mxu0 0.0
  %3607 = vmatpush1.msra.mxu0 0.0
  %3608 = vmatprep.subr.mxu0 0.0
  %3609 = vmatpush1.msra.mxu0 0.0
  %3610 = vmatprep.subr.mxu0 0.0
  %3611 = vmatpush1.msra.mxu0 0.0
  %3612 = vmatprep.subr.mxu0 0.0
  %3613 = vmatpush1.msra.mxu0 0.0
  %3614 = vmatprep.subr.mxu0 0.0
  %3615 = vmatpush1.msra.mxu0 0.0
  %3616 = vmatprep.subr.mxu0 0.0
  %3617 = vmatpush1.msra.mxu0 0.0
  %3618 = vmatprep.subr.mxu0 0.0
  %3619 = vmatpush1.msra.mxu0 0.0
  %3620 = vmatprep.subr.mxu0 0.0
  %3621 = vmatpush1.msra.mxu0 0.0
  %3622 = vmatprep.subr.mxu0 0.0
  %3623 = vmatpush1.msra.mxu0 0.0
  %3624 = vmatprep.subr.mxu0 0.0
  %3625 = vmatpush1.msra.mxu0 0.0
  %3626 = vmatprep.subr.mxu0 0.0
  %3627 = vmatpush1.msra.mxu0 0.0
  %3628 = vmatprep.subr.mxu0 0.0
  %3629 = vmatpush1.msra.mxu0 0.0
  %3630 = vmatprep.subr.mxu0 0.0
  %3631 = vmatpush1.msra.mxu0 0.0
  %3632 = vmatprep.subr.mxu0 0.0
  %3633 = vmatpush1.msra.mxu0 0.0
  %3634 = vmatprep.subr.mxu0 0.0
  %3635 = vmatpush1.msra.mxu0 0.0
  %3636 = vmatprep.subr.mxu0 0.0
  %3637 = vmatpush1.msra.mxu0 0.0
  %3638 = vmatprep.subr.mxu0 0.0
  %3639 = vmatpush1.msra.mxu0 0.0
  %3640 = vmatprep.subr.mxu0 0.0
  %3641 = vmatpush1.msra.mxu0 0.0
  %3642 = vmatprep.subr.mxu0 0.0
  %3643 = vmatpush1.msra.mxu0 0.0
  %3644 = vmatprep.subr.mxu0 0.0
  %3645 = vmatpush1.msra.mxu0 0.0
  %3646 = vmatprep.mubr.f32.mxu0 0.0
  %3647 = vmatmul.mubr.f32.gmra.mrb[0].mxu0 %v3580
  %v3648 = vpop.f32.mrb[0].mxu0
  %v3649 = vadd.f32 0.0, %v3648
  %v3650 = vpop.f32.mrb[0].mxu0
  %3651 = vdwg.mxu0
  %v3652 = vadd.f32 %v3579, %v3649
  %v3653 = vsub.f32 0.0, %v3652
  %v3654 = vmul.f32 %v3653, 1.442695
  %v3655 = vpow.pop %v3654
  %v3656 = vadd.f32 %v3655, 1.0
  %v3657 = vrcp.pop %v3656
  %v3658 = vmul.f32 1.0, %v3657
  %v3659 = vtanh.pop %v3652
  %v3660 = vmul.f32 %v3658, %v3565
  %3662 = vrot.lane.b32.xlu0 %v3659, 120
  %v3663 = vpop.permute.xlu0 %3662
  %v3665 = vmul.f32 %v3658, %v3663
  %3667 = vrot.lane.b32.xlu0 %v3665, 4
  %v3668 = vpop.permute.xlu0 %3667
  %v3670 = vadd.f32 %v3660, %v3668
  %v3671 = vtanh.pop %v3670
  %3673 = vrot.lane.b32.xlu0 %v3671, 8
  %v3674 = vpop.permute.xlu0 %3673
  %v3676 = vmul.f32 %v3658, %v3674
  %3678 = vrot.lane.b32.xlu0 %v3676, 116
  %v3679 = vpop.permute.xlu0 %3678
  %s3681 = scalar_lea.vmem %s9, 88
  %3682 = vst.msk [vmem:[%s3681] sm:$0xff] %vm227, %v3679
  // Predicated region
  $region38: #{mann_forward.1} parent=0 // pred_check
    _
  $region39: #{mann_forward.1} parent=0 // pred_check_branch
    %3684 = sbr.rel (0) target = $region41
  $region40: #{mann_forward.1} parent=0 // pred_region
    _
  $region41: #{mann_forward.1} parent=0 // pred_fallthru
    _
  // Predicated region
  $region42: #{mann_forward.1} parent=0 // pred_check
    _
  $region43: #{mann_forward.1} parent=0 // pred_check_branch
    %3686 = sbr.rel (0) target = $region45
  $region44: #{mann_forward.1} parent=0 // pred_region
    _
  $region45: #{mann_forward.1} parent=0 // pred_fallthru
    _

</llo_original>
